<compile_context>
chip_gen: v6e
topology: v6e:2x2x1
jax: 0.10.0
libtpu: 0.0.40
codegen_flags: <defaults>
</compile_context>

<pallas_src>
import functools

import jax
import jax.numpy as jnp
from jax.experimental import pallas as pl
from jax.experimental.pallas import tpu as pltpu


# ---------------------------------------------------------------------------
# Fused forward kernel
# ---------------------------------------------------------------------------
def _dqn_fused_kernel(xs_ref, w1_ref, b1_ref, w2_ref, b2_ref, w3_ref, b3_ref,
                      f1_ref, bf1_ref, f2_ref, bf2_ref,
                      out_ref, h1_ref, h2_ref, *, dims):
    n, oh1, ow1, oh2, ow2, oh3, ow3 = dims
    f32, bf16 = jnp.float32, jnp.bfloat16

    # ---- conv1: 8x8 stride 4 + ReLU --------------------------------------
    # Input was space-to-depth'd by 4x4 in the wrapper, so the 4 kernel-tap
    # groups (p, a) are contiguous windows and the whole layer is one MXU GEMM
    # of shape (N*OH1*OW1, 64*C) x (64*C, 32).
    pieces1 = [xs_ref[:, pl.ds(p, oh1), pl.ds(a, ow1), :]
               for p in range(2) for a in range(2)]
    lhs1 = jnp.concatenate(pieces1, axis=-1)              # (N, OH1, OW1, 64*C)
    lhs1 = lhs1.reshape(n * oh1 * ow1, lhs1.shape[-1])    # free: OW1 == 8 sublanes
    acc1 = jnp.dot(lhs1.astype(bf16), w1_ref[...], preferred_element_type=f32)
    h1 = jnp.maximum(acc1 + b1_ref[...], 0.0)             # (N*OH1*OW1, 32) f32
    h1_ref[...] = h1.reshape(n, oh1, ow1, 32)             # NHWC scratch

    # ---- conv2: 4x4 stride 2 + ReLU --------------------------------------
    # im2col rows are gathered straight from the VMEM scratch with pl.ds
    # (stride 2 only on the W/sublane axis), lane-concatenated to K = 512,
    # then one (OW2, 512) x (512, 64) GEMM per (sample, output row).
    w2 = w2_ref[...]
    b2 = b2_ref[...]
    for r in range(oh2):
        row_pieces = [h1_ref[:, pl.ds(2 * r + i, 1), pl.ds(j, ow2, 2), :]
                      for i in range(4) for j in range(4)]
        lhs2 = jnp.concatenate(row_pieces, axis=-1)       # (N, 1, OW2, 512)
        for s in range(n):
            y = jnp.dot(lhs2[s, 0].astype(bf16), w2, preferred_element_type=f32)
            h2_ref[s, r, :, :] = jnp.maximum(y + b2, 0.0)  # (OW2, 64)

    # ---- conv3: 3x3 stride 1 + ReLU, then flatten + fc1 + ReLU + fc2 ------
    pieces3 = [h2_ref[:, pl.ds(i, oh3), pl.ds(j, ow3), :]
               for i in range(3) for j in range(3)]
    im3 = jnp.concatenate(pieces3, axis=-1)               # (N, OH3, OW3, 576)
    w3 = w3_ref[...]
    b3 = b3_ref[...]
    bf1 = bf1_ref[...]
    f2 = f2_ref[...]
    bf2 = bf2_ref[...]

    for s in range(n):
        accf = jnp.zeros((1, bf1.shape[-1]), dtype=f32)   # fc1 accumulator
        for r in range(oh3):
            y3 = jnp.dot(im3[s, r].astype(bf16), w3, preferred_element_type=f32)
            y3 = jnp.maximum(y3 + b3, 0.0)                # (OW3, 64) conv3 NHWC row
            # fc1: PyTorch's NCHW flatten order is pre-folded into f1_ref, so we
            # just accumulate one (1,64)x(64,512) GEMM per spatial site.
            for c in range(ow3):
                accf = accf + jnp.dot(y3[c:c + 1, :].astype(bf16),
                                      f1_ref[r * ow3 + c],
                                      preferred_element_type=f32)
        hf1 = jnp.maximum(accf + bf1, 0.0)                # (1, 512)
        logits = jnp.dot(hf1.astype(bf16), f2, preferred_element_type=f32) + bf2
        out_ref[pl.ds(s, 1), :] = logits                  # (1, n_actions)


def _full_spec(shape):
    zeros = (0,) * len(shape)
    return pl.BlockSpec(shape, lambda i: zeros)


# ---------------------------------------------------------------------------
# One-time weight re-layout (PyTorch layouts -> kernel layouts).  Runs eagerly
# once, outside the jitted per-call path.
# ---------------------------------------------------------------------------
def prepare_params(params, input_dims):
    c, h, w = input_dims
    oh1, ow1 = (h - 8) // 4 + 1, (w - 8) // 4 + 1
    oh2, ow2 = (oh1 - 4) // 2 + 1, (ow1 - 4) // 2 + 1
    oh3, ow3 = oh2 - 2, ow2 - 2
    bf16, f32 = jnp.bfloat16, jnp.float32

    # conv1 (OC, C, 8, 8) -> (p, a, q, b, c, OC) -> (64*C, 32); K order matches
    # the kernel's space-to-depth im2col (kh = 4p+q, kw = 4a+b).
    w1r = (params["conv1_w"].reshape(32, c, 2, 4, 2, 4)
           .transpose(2, 4, 3, 5, 1, 0)
           .reshape(2 * 2 * 4 * 4 * c, 32)).astype(bf16)
    # conv2 / conv3: (OC, C, KH, KW) -> (KH, KW, C, OC) -> 2-D, matching the
    # in-kernel lane-concat order (kh, kw, c).
    w2r = (params["conv2_w"].transpose(2, 3, 1, 0).reshape(4 * 4 * 32, 64)).astype(bf16)
    w3r = (params["conv3_w"].transpose(2, 3, 1, 0).reshape(3 * 3 * 64, 64)).astype(bf16)
    # fc1: PyTorch flattens NCHW as (c, h, w); regroup rows per spatial site so
    # the NHWC conv3 output can be consumed without any in-kernel transpose.
    f1r = (params["fc1_w"].T                              # (fc_in, 512)
           .reshape(64, oh3, ow3, 512)
           .transpose(1, 2, 0, 3)
           .reshape(oh3 * ow3, 64, 512)).astype(bf16)
    f2r = params["fc2_w"].T.astype(bf16)                  # (512, n_actions)

    return {
        "w1r": w1r, "b1": params["conv1_b"].reshape(1, -1).astype(f32),
        "w2r": w2r, "b2": params["conv2_b"].reshape(1, -1).astype(f32),
        "w3r": w3r, "b3": params["conv3_b"].reshape(1, -1).astype(f32),
        "f1r": f1r, "bf1": params["fc1_b"].reshape(1, -1).astype(f32),
        "f2r": f2r, "bf2": params["fc2_b"].reshape(1, -1).astype(f32),
    }


# ---------------------------------------------------------------------------
# Fused forward: one pallas_call for the whole network.
# ---------------------------------------------------------------------------
def dqn_forward(x, kp):
    n, c, h, w = x.shape
    oh1, ow1 = (h - 8) // 4 + 1, (w - 8) // 4 + 1
    oh2, ow2 = (oh1 - 4) // 2 + 1, (ow1 - 4) // 2 + 1
    oh3, ow3 = oh2 - 2, ow2 - 2
    # TODO(synk): generic spatial sizes need a sublane-repack path; the module's
    # (4, 36, 36) configuration satisfies these constraints.
    assert h % 4 == 0 and w % 4 == 0 and ow1 % 8 == 0 and oh3 >= 1 and ow3 >= 1
    n_actions = kp["f2r"].shape[1]

    # The only per-call XLA glue: NCHW -> NHWC + 4x4 space-to-depth of the
    # (tiny) input, so conv1 becomes a single contiguous-window GEMM in-kernel.
    xs = (x.reshape(n, c, h // 4, 4, w // 4, 4)
          .transpose(0, 2, 4, 3, 5, 1)
          .reshape(n, h // 4, w // 4, 16 * c)).astype(jnp.float32)

    operands = (xs, kp["w1r"], kp["b1"], kp["w2r"], kp["b2"], kp["w3r"], kp["b3"],
                kp["f1r"], kp["bf1"], kp["f2r"], kp["bf2"])

    kernel = functools.partial(
        _dqn_fused_kernel, dims=(n, oh1, ow1, oh2, ow2, oh3, ow3))

    return pl.pallas_call(
        kernel,
        out_shape=jax.ShapeDtypeStruct((n, n_actions), jnp.float32),
        grid=(1,),
        in_specs=[_full_spec(a.shape) for a in operands],
        out_specs=pl.BlockSpec((n, n_actions), lambda i: (0, 0)),
        scratch_shapes=[
            pltpu.VMEM((n, oh1, ow1, 32), jnp.float32),   # conv1 output (NHWC)
            pltpu.VMEM((n, oh2, ow2, 64), jnp.float32),   # conv2 output (NHWC)
        ],
        compiler_params=pltpu.CompilerParams(
            dimension_semantics=("arbitrary",)),
    )(*operands)


# ---------------------------------------------------------------------------
# Deterministic parameter init (PyTorch layouts; shapes from the module).
# TODO(synk): real weights come from 'FLAPPY-BIRD-DDQN.pt'; we init synthetically.
# ---------------------------------------------------------------------------
def init_params(key, in_ch, n_actions, fc_in):
    ks = jax.random.split(key, 10)
    s = 0.05
    return {
        "conv1_w": s * jax.random.normal(ks[0], (32, in_ch, 8, 8), jnp.float32),
        "conv1_b": s * jax.random.normal(ks[1], (32,), jnp.float32),
        "conv2_w": s * jax.random.normal(ks[2], (64, 32, 4, 4), jnp.float32),
        "conv2_b": s * jax.random.normal(ks[3], (64,), jnp.float32),
        "conv3_w": s * jax.random.normal(ks[4], (64, 64, 3, 3), jnp.float32),
        "conv3_b": s * jax.random.normal(ks[5], (64,), jnp.float32),
        "fc1_w": s * jax.random.normal(ks[6], (512, fc_in), jnp.float32),
        "fc1_b": s * jax.random.normal(ks[7], (512,), jnp.float32),
        "fc2_w": s * jax.random.normal(ks[8], (n_actions, 512), jnp.float32),
        "fc2_b": s * jax.random.normal(ks[9], (n_actions,), jnp.float32),
    }


# ---------------------------------------------------------------------------
# Pure-JAX f32 reference (PyTorch semantics) for numerical validation.
# ---------------------------------------------------------------------------
def reference_forward(x, params):
    def conv(x, w, b, stride):
        y = jax.lax.conv_general_dilated(
            x, w, window_strides=stride, padding="VALID",
            dimension_numbers=("NCHW", "OIHW", "NCHW"),
            precision=jax.lax.Precision.HIGHEST,
        )
        return jax.nn.relu(y + b[None, :, None, None])

    x = conv(x, params["conv1_w"], params["conv1_b"], (4, 4))
    x = conv(x, params["conv2_w"], params["conv2_b"], (2, 2))
    x = conv(x, params["conv3_w"], params["conv3_b"], (1, 1))
    x = x.reshape(x.shape[0], -1)                       # nn.Flatten (NCHW order)
    x = jax.nn.relu(x @ params["fc1_w"].T + params["fc1_b"])
    x = x @ params["fc2_w"].T + params["fc2_b"]
    return x


if __name__ == "__main__":
    # Small shapes consistent with the module: input_dims=(4, 36, 36), n_actions=2
    batch, in_ch, hh, ww = 2, 4, 36, 36
    n_actions = 2

    # conv output dims: (36-8)//4+1 = 8 ; (8-4)//2+1 = 3 ; 3-3+1 = 1
    h1 = (hh - 8) // 4 + 1
    h2 = (h1 - 4) // 2 + 1
    h3 = h2 - 3 + 1
    fc_in = 64 * h3 * h3  # = 64

    key = jax.random.PRNGKey(0)
    kx, kp = jax.random.split(key)
    x = jax.random.normal(kx, (batch, in_ch, hh, ww), jnp.float32)
    params = init_params(kp, in_ch, n_actions, fc_in)

    kparams = prepare_params(params, (in_ch, hh, ww))   # one-time weight re-layout
    fwd = jax.jit(dqn_forward)
    out = jax.block_until_ready(fwd(x, kparams))
    assert out.shape == (batch, n_actions), out.shape

    # bf16 MXU inputs with f32 accumulation -> compare against the f32 reference
    # with a tolerance that comfortably covers the bf16 rounding (~3e-3 here).
    ref = reference_forward(x, params)
    assert jnp.allclose(out, ref, rtol=2e-2, atol=2e-2), (out, ref)

    print("KERNEL_OK")
</pallas_src>

<mosaic_0001>
module attributes {stable_mosaic.version = 11 : i64} {
  func.func @_dqn_fused_kernel(%arg0: i32, %arg1: memref<2x9x9x64xf32, #tpu.memory_space<vmem>>, %arg2: memref<256x32xbf16, #tpu.memory_space<vmem>>, %arg3: memref<1x32xf32, #tpu.memory_space<vmem>>, %arg4: memref<512x64xbf16, #tpu.memory_space<vmem>>, %arg5: memref<1x64xf32, #tpu.memory_space<vmem>>, %arg6: memref<576x64xbf16, #tpu.memory_space<vmem>>, %arg7: memref<1x64xf32, #tpu.memory_space<vmem>>, %arg8: memref<1x64x512xbf16, #tpu.memory_space<vmem>>, %arg9: memref<1x512xf32, #tpu.memory_space<vmem>>, %arg10: memref<512x2xbf16, #tpu.memory_space<vmem>>, %arg11: memref<1x2xf32, #tpu.memory_space<vmem>>, %arg12: memref<2x2xf32, #tpu.memory_space<vmem>>, %arg13: memref<2x8x8x32xf32, #tpu.memory_space<vmem>>, %arg14: memref<2x3x3x64xf32, #tpu.memory_space<vmem>>) attributes {dimension_semantics = [#tpu.dimension_semantics<arbitrary>], iteration_bounds = array<i64: 1>, scalar_prefetch = 0 : i64, scratch_operands = 2 : i64, tpu.core_type = #tpu.core_type<tc>, window_params = [{pipeline_mode = #tpu.pipeline_mode<synchronous>, transform_indices = @transform_0, window_bounds = array<i64: 2, 9, 9, 64>}, {pipeline_mode = #tpu.pipeline_mode<synchronous>, transform_indices = @transform_1, window_bounds = array<i64: 256, 32>}, {pipeline_mode = #tpu.pipeline_mode<synchronous>, transform_indices = @transform_2, window_bounds = array<i64: 1, 32>}, {pipeline_mode = #tpu.pipeline_mode<synchronous>, transform_indices = @transform_3, window_bounds = array<i64: 512, 64>}, {pipeline_mode = #tpu.pipeline_mode<synchronous>, transform_indices = @transform_4, window_bounds = array<i64: 1, 64>}, {pipeline_mode = #tpu.pipeline_mode<synchronous>, transform_indices = @transform_5, window_bounds = array<i64: 576, 64>}, {pipeline_mode = #tpu.pipeline_mode<synchronous>, transform_indices = @transform_6, window_bounds = array<i64: 1, 64>}, {pipeline_mode = #tpu.pipeline_mode<synchronous>, transform_indices = @transform_7, window_bounds = array<i64: 1, 64, 512>}, {pipeline_mode = #tpu.pipeline_mode<synchronous>, transform_indices = @transform_8, window_bounds = array<i64: 1, 512>}, {pipeline_mode = #tpu.pipeline_mode<synchronous>, transform_indices = @transform_9, window_bounds = array<i64: 512, 2>}, {pipeline_mode = #tpu.pipeline_mode<synchronous>, transform_indices = @transform_10, window_bounds = array<i64: 1, 2>}, {pipeline_mode = #tpu.pipeline_mode<synchronous>, transform_indices = @transform_11, window_bounds = array<i64: 2, 2>}]} {
    %c0 = arith.constant 0 : index
    %c0_0 = arith.constant 0 : index
    %c0_1 = arith.constant 0 : index
    %c0_2 = arith.constant 0 : index
    %0 = vector.load %arg1[%c0, %c0_0, %c0_1, %c0_2] : memref<2x9x9x64xf32, #tpu.memory_space<vmem>>, vector<2x8x8x64xf32>
    %c0_3 = arith.constant 0 : index
    %c0_4 = arith.constant 0 : index
    %c1 = arith.constant 1 : index
    %c0_5 = arith.constant 0 : index
    %1 = vector.load %arg1[%c0_3, %c0_4, %c1, %c0_5] : memref<2x9x9x64xf32, #tpu.memory_space<vmem>>, vector<2x8x8x64xf32>
    %c0_6 = arith.constant 0 : index
    %c1_7 = arith.constant 1 : index
    %c0_8 = arith.constant 0 : index
    %c0_9 = arith.constant 0 : index
    %2 = vector.load %arg1[%c0_6, %c1_7, %c0_8, %c0_9] : memref<2x9x9x64xf32, #tpu.memory_space<vmem>>, vector<2x8x8x64xf32>
    %c0_10 = arith.constant 0 : index
    %c1_11 = arith.constant 1 : index
    %c1_12 = arith.constant 1 : index
    %c0_13 = arith.constant 0 : index
    %3 = vector.load %arg1[%c0_10, %c1_11, %c1_12, %c0_13] : memref<2x9x9x64xf32, #tpu.memory_space<vmem>>, vector<2x8x8x64xf32>
    %4 = tpu.concatenate %0, %1, %2, %3 in 3 : vector<2x8x8x64xf32>, vector<2x8x8x64xf32>, vector<2x8x8x64xf32>, vector<2x8x8x64xf32> -> vector<2x8x8x256xf32>
    %5 = vector.shape_cast %4 : vector<2x8x8x256xf32> to vector<128x256xf32>
    %6 = arith.truncf %5 : vector<128x256xf32> to vector<128x256xbf16>
    %c0_14 = arith.constant 0 : index
    %c0_15 = arith.constant 0 : index
    %7 = vector.load %arg2[%c0_14, %c0_15] : memref<256x32xbf16, #tpu.memory_space<vmem>>, vector<256x32xbf16>
    %cst = arith.constant dense<0.000000e+00> : vector<128x32xf32>
    %8 = tpu.matmul %6, %7, %cst {dimension_numbers = #tpu.dot_dimension_numbers<[1], [0], [0], [1], [0, 0, 1, 1], [], []>} : vector<128x256xbf16>, vector<256x32xbf16>, vector<128x32xf32> -> vector<128x32xf32>
    %c0_16 = arith.constant 0 : index
    %c0_17 = arith.constant 0 : index
    %9 = vector.load %arg3[%c0_16, %c0_17] : memref<1x32xf32, #tpu.memory_space<vmem>>, vector<1x32xf32>
    %10 = vector.broadcast %9 : vector<1x32xf32> to vector<128x32xf32>
    %11 = arith.addf %8, %10 : vector<128x32xf32>
    %cst_18 = arith.constant 0.000000e+00 : f32
    %12 = vector.broadcast %cst_18 : f32 to vector<128x32xf32>
    %13 = arith.maximumf %11, %12 : vector<128x32xf32>
    %14 = vector.shape_cast %13 : vector<128x32xf32> to vector<2x8x8x32xf32>
    %c0_19 = arith.constant 0 : index
    %c0_20 = arith.constant 0 : index
    %c0_21 = arith.constant 0 : index
    %c0_22 = arith.constant 0 : index
    %15 = vector.load %arg13[%c0_19, %c0_20, %c0_21, %c0_22] : memref<2x8x8x32xf32, #tpu.memory_space<vmem>>, vector<2x8x8x32xf32>
    tpu.vector_store %arg13[%c0_19, %c0_20, %c0_21, %c0_22], %14 {strides = array<i32>} : memref<2x8x8x32xf32, #tpu.memory_space<vmem>>, vector<2x8x8x32xf32>,
    %c0_23 = arith.constant 0 : index
    %c0_24 = arith.constant 0 : index
    %16 = vector.load %arg4[%c0_23, %c0_24] : memref<512x64xbf16, #tpu.memory_space<vmem>>, vector<512x64xbf16>
    %c0_25 = arith.constant 0 : index
    %c0_26 = arith.constant 0 : index
    %17 = vector.load %arg5[%c0_25, %c0_26] : memref<1x64xf32, #tpu.memory_space<vmem>>, vector<1x64xf32>
    %c0_27 = arith.constant 0 : index
    %c0_28 = arith.constant 0 : index
    %c0_29 = arith.constant 0 : index
    %c0_30 = arith.constant 0 : index
    %18 = tpu.strided_load %arg13[%c0_27, %c0_28, %c0_29, %c0_30] {strides = array<i32: 1, 1, 2, 1>} : memref<2x8x8x32xf32, #tpu.memory_space<vmem>>, vector<2x1x3x32xf32>
    %c0_31 = arith.constant 0 : index
    %c0_32 = arith.constant 0 : index
    %c1_33 = arith.constant 1 : index
    %c0_34 = arith.constant 0 : index
    %19 = tpu.strided_load %arg13[%c0_31, %c0_32, %c1_33, %c0_34] {strides = array<i32: 1, 1, 2, 1>} : memref<2x8x8x32xf32, #tpu.memory_space<vmem>>, vector<2x1x3x32xf32>
    %c0_35 = arith.constant 0 : index
    %c0_36 = arith.constant 0 : index
    %c2 = arith.constant 2 : index
    %c0_37 = arith.constant 0 : index
    %20 = tpu.strided_load %arg13[%c0_35, %c0_36, %c2, %c0_37] {strides = array<i32: 1, 1, 2, 1>} : memref<2x8x8x32xf32, #tpu.memory_space<vmem>>, vector<2x1x3x32xf32>
    %c0_38 = arith.constant 0 : index
    %c0_39 = arith.constant 0 : index
    %c3 = arith.constant 3 : index
    %c0_40 = arith.constant 0 : index
    %21 = tpu.strided_load %arg13[%c0_38, %c0_39, %c3, %c0_40] {strides = array<i32: 1, 1, 2, 1>} : memref<2x8x8x32xf32, #tpu.memory_space<vmem>>, vector<2x1x3x32xf32>
    %c0_41 = arith.constant 0 : index
    %c1_42 = arith.constant 1 : index
    %c0_43 = arith.constant 0 : index
    %c0_44 = arith.constant 0 : index
    %22 = tpu.strided_load %arg13[%c0_41, %c1_42, %c0_43, %c0_44] {strides = array<i32: 1, 1, 2, 1>} : memref<2x8x8x32xf32, #tpu.memory_space<vmem>>, vector<2x1x3x32xf32>
    %c0_45 = arith.constant 0 : index
    %c1_46 = arith.constant 1 : index
    %c1_47 = arith.constant 1 : index
    %c0_48 = arith.constant 0 : index
    %23 = tpu.strided_load %arg13[%c0_45, %c1_46, %c1_47, %c0_48] {strides = array<i32: 1, 1, 2, 1>} : memref<2x8x8x32xf32, #tpu.memory_space<vmem>>, vector<2x1x3x32xf32>
    %c0_49 = arith.constant 0 : index
    %c1_50 = arith.constant 1 : index
    %c2_51 = arith.constant 2 : index
    %c0_52 = arith.constant 0 : index
    %24 = tpu.strided_load %arg13[%c0_49, %c1_50, %c2_51, %c0_52] {strides = array<i32: 1, 1, 2, 1>} : memref<2x8x8x32xf32, #tpu.memory_space<vmem>>, vector<2x1x3x32xf32>
    %c0_53 = arith.constant 0 : index
    %c1_54 = arith.constant 1 : index
    %c3_55 = arith.constant 3 : index
    %c0_56 = arith.constant 0 : index
    %25 = tpu.strided_load %arg13[%c0_53, %c1_54, %c3_55, %c0_56] {strides = array<i32: 1, 1, 2, 1>} : memref<2x8x8x32xf32, #tpu.memory_space<vmem>>, vector<2x1x3x32xf32>
    %c0_57 = arith.constant 0 : index
    %c2_58 = arith.constant 2 : index
    %c0_59 = arith.constant 0 : index
    %c0_60 = arith.constant 0 : index
    %26 = tpu.strided_load %arg13[%c0_57, %c2_58, %c0_59, %c0_60] {strides = array<i32: 1, 1, 2, 1>} : memref<2x8x8x32xf32, #tpu.memory_space<vmem>>, vector<2x1x3x32xf32>
    %c0_61 = arith.constant 0 : index
    %c2_62 = arith.constant 2 : index
    %c1_63 = arith.constant 1 : index
    %c0_64 = arith.constant 0 : index
    %27 = tpu.strided_load %arg13[%c0_61, %c2_62, %c1_63, %c0_64] {strides = array<i32: 1, 1, 2, 1>} : memref<2x8x8x32xf32, #tpu.memory_space<vmem>>, vector<2x1x3x32xf32>
    %c0_65 = arith.constant 0 : index
    %c2_66 = arith.constant 2 : index
    %c2_67 = arith.constant 2 : index
    %c0_68 = arith.constant 0 : index
    %28 = tpu.strided_load %arg13[%c0_65, %c2_66, %c2_67, %c0_68] {strides = array<i32: 1, 1, 2, 1>} : memref<2x8x8x32xf32, #tpu.memory_space<vmem>>, vector<2x1x3x32xf32>
    %c0_69 = arith.constant 0 : index
    %c2_70 = arith.constant 2 : index
    %c3_71 = arith.constant 3 : index
    %c0_72 = arith.constant 0 : index
    %29 = tpu.strided_load %arg13[%c0_69, %c2_70, %c3_71, %c0_72] {strides = array<i32: 1, 1, 2, 1>} : memref<2x8x8x32xf32, #tpu.memory_space<vmem>>, vector<2x1x3x32xf32>
    %c0_73 = arith.constant 0 : index
    %c3_74 = arith.constant 3 : index
    %c0_75 = arith.constant 0 : index
    %c0_76 = arith.constant 0 : index
    %30 = tpu.strided_load %arg13[%c0_73, %c3_74, %c0_75, %c0_76] {strides = array<i32: 1, 1, 2, 1>} : memref<2x8x8x32xf32, #tpu.memory_space<vmem>>, vector<2x1x3x32xf32>
    %c0_77 = arith.constant 0 : index
    %c3_78 = arith.constant 3 : index
    %c1_79 = arith.constant 1 : index
    %c0_80 = arith.constant 0 : index
    %31 = tpu.strided_load %arg13[%c0_77, %c3_78, %c1_79, %c0_80] {strides = array<i32: 1, 1, 2, 1>} : memref<2x8x8x32xf32, #tpu.memory_space<vmem>>, vector<2x1x3x32xf32>
    %c0_81 = arith.constant 0 : index
    %c3_82 = arith.constant 3 : index
    %c2_83 = arith.constant 2 : index
    %c0_84 = arith.constant 0 : index
    %32 = tpu.strided_load %arg13[%c0_81, %c3_82, %c2_83, %c0_84] {strides = array<i32: 1, 1, 2, 1>} : memref<2x8x8x32xf32, #tpu.memory_space<vmem>>, vector<2x1x3x32xf32>
    %c0_85 = arith.constant 0 : index
    %c3_86 = arith.constant 3 : index
    %c3_87 = arith.constant 3 : index
    %c0_88 = arith.constant 0 : index
    %33 = tpu.strided_load %arg13[%c0_85, %c3_86, %c3_87, %c0_88] {strides = array<i32: 1, 1, 2, 1>} : memref<2x8x8x32xf32, #tpu.memory_space<vmem>>, vector<2x1x3x32xf32>
    %34 = tpu.concatenate %18, %19, %20, %21, %22, %23, %24, %25, %26, %27, %28, %29, %30, %31, %32, %33 in 3 : vector<2x1x3x32xf32>, vector<2x1x3x32xf32>, vector<2x1x3x32xf32>, vector<2x1x3x32xf32>, vector<2x1x3x32xf32>, vector<2x1x3x32xf32>, vector<2x1x3x32xf32>, vector<2x1x3x32xf32>, vector<2x1x3x32xf32>, vector<2x1x3x32xf32>, vector<2x1x3x32xf32>, vector<2x1x3x32xf32>, vector<2x1x3x32xf32>, vector<2x1x3x32xf32>, vector<2x1x3x32xf32>, vector<2x1x3x32xf32> -> vector<2x1x3x512xf32>
    %35 = vector.extract_strided_slice %34 {offsets = [0, 0, 0, 0], sizes = [1, 1, 3, 512], strides = [1, 1, 1, 1]} : vector<2x1x3x512xf32> to vector<1x1x3x512xf32>
    %36 = vector.shape_cast %35 : vector<1x1x3x512xf32> to vector<3x512xf32>
    %37 = arith.truncf %36 : vector<3x512xf32> to vector<3x512xbf16>
    %cst_89 = arith.constant dense<0.000000e+00> : vector<3x64xf32>
    %38 = tpu.matmul %37, %16, %cst_89 {dimension_numbers = #tpu.dot_dimension_numbers<[1], [0], [0], [1], [0, 0, 1, 1], [], []>} : vector<3x512xbf16>, vector<512x64xbf16>, vector<3x64xf32> -> vector<3x64xf32>
    %39 = vector.broadcast %17 : vector<1x64xf32> to vector<3x64xf32>
    %40 = arith.addf %38, %39 : vector<3x64xf32>
    %cst_90 = arith.constant 0.000000e+00 : f32
    %41 = vector.broadcast %cst_90 : f32 to vector<3x64xf32>
    %42 = arith.maximumf %40, %41 : vector<3x64xf32>
    %c0_91 = arith.constant 0 : index
    %c0_92 = arith.constant 0 : index
    %c0_93 = arith.constant 0 : index
    %c0_94 = arith.constant 0 : index
    %43 = vector.load %arg14[%c0_91, %c0_92, %c0_93, %c0_94] : memref<2x3x3x64xf32, #tpu.memory_space<vmem>>, vector<1x1x3x64xf32>
    %44 = vector.shape_cast %43 : vector<1x1x3x64xf32> to vector<3x64xf32>
    %45 = vector.shape_cast %42 : vector<3x64xf32> to vector<1x1x3x64xf32>
    tpu.vector_store %arg14[%c0_91, %c0_92, %c0_93, %c0_94], %45 {strides = array<i32>} : memref<2x3x3x64xf32, #tpu.memory_space<vmem>>, vector<1x1x3x64xf32>,
    %46 = vector.extract_strided_slice %34 {offsets = [1, 0, 0, 0], sizes = [1, 1, 3, 512], strides = [1, 1, 1, 1]} : vector<2x1x3x512xf32> to vector<1x1x3x512xf32>
    %47 = vector.shape_cast %46 : vector<1x1x3x512xf32> to vector<3x512xf32>
    %48 = arith.truncf %47 : vector<3x512xf32> to vector<3x512xbf16>
    %cst_95 = arith.constant dense<0.000000e+00> : vector<3x64xf32>
    %49 = tpu.matmul %48, %16, %cst_95 {dimension_numbers = #tpu.dot_dimension_numbers<[1], [0], [0], [1], [0, 0, 1, 1], [], []>} : vector<3x512xbf16>, vector<512x64xbf16>, vector<3x64xf32> -> vector<3x64xf32>
    %50 = vector.broadcast %17 : vector<1x64xf32> to vector<3x64xf32>
    %51 = arith.addf %49, %50 : vector<3x64xf32>
    %cst_96 = arith.constant 0.000000e+00 : f32
    %52 = vector.broadcast %cst_96 : f32 to vector<3x64xf32>
    %53 = arith.maximumf %51, %52 : vector<3x64xf32>
    %c1_97 = arith.constant 1 : index
    %c0_98 = arith.constant 0 : index
    %c0_99 = arith.constant 0 : index
    %c0_100 = arith.constant 0 : index
    %54 = vector.load %arg14[%c1_97, %c0_98, %c0_99, %c0_100] : memref<2x3x3x64xf32, #tpu.memory_space<vmem>>, vector<1x1x3x64xf32>
    %55 = vector.shape_cast %54 : vector<1x1x3x64xf32> to vector<3x64xf32>
    %56 = vector.shape_cast %53 : vector<3x64xf32> to vector<1x1x3x64xf32>
    tpu.vector_store %arg14[%c1_97, %c0_98, %c0_99, %c0_100], %56 {strides = array<i32>} : memref<2x3x3x64xf32, #tpu.memory_space<vmem>>, vector<1x1x3x64xf32>,
    %c0_101 = arith.constant 0 : index
    %c2_102 = arith.constant 2 : index
    %c0_103 = arith.constant 0 : index
    %c0_104 = arith.constant 0 : index
    %57 = tpu.strided_load %arg13[%c0_101, %c2_102, %c0_103, %c0_104] {strides = array<i32: 1, 1, 2, 1>} : memref<2x8x8x32xf32, #tpu.memory_space<vmem>>, vector<2x1x3x32xf32>
    %c0_105 = arith.constant 0 : index
    %c2_106 = arith.constant 2 : index
    %c1_107 = arith.constant 1 : index
    %c0_108 = arith.constant 0 : index
    %58 = tpu.strided_load %arg13[%c0_105, %c2_106, %c1_107, %c0_108] {strides = array<i32: 1, 1, 2, 1>} : memref<2x8x8x32xf32, #tpu.memory_space<vmem>>, vector<2x1x3x32xf32>
    %c0_109 = arith.constant 0 : index
    %c2_110 = arith.constant 2 : index
    %c2_111 = arith.constant 2 : index
    %c0_112 = arith.constant 0 : index
    %59 = tpu.strided_load %arg13[%c0_109, %c2_110, %c2_111, %c0_112] {strides = array<i32: 1, 1, 2, 1>} : memref<2x8x8x32xf32, #tpu.memory_space<vmem>>, vector<2x1x3x32xf32>
    %c0_113 = arith.constant 0 : index
    %c2_114 = arith.constant 2 : index
    %c3_115 = arith.constant 3 : index
    %c0_116 = arith.constant 0 : index
    %60 = tpu.strided_load %arg13[%c0_113, %c2_114, %c3_115, %c0_116] {strides = array<i32: 1, 1, 2, 1>} : memref<2x8x8x32xf32, #tpu.memory_space<vmem>>, vector<2x1x3x32xf32>
    %c0_117 = arith.constant 0 : index
    %c3_118 = arith.constant 3 : index
    %c0_119 = arith.constant 0 : index
    %c0_120 = arith.constant 0 : index
    %61 = tpu.strided_load %arg13[%c0_117, %c3_118, %c0_119, %c0_120] {strides = array<i32: 1, 1, 2, 1>} : memref<2x8x8x32xf32, #tpu.memory_space<vmem>>, vector<2x1x3x32xf32>
    %c0_121 = arith.constant 0 : index
    %c3_122 = arith.constant 3 : index
    %c1_123 = arith.constant 1 : index
    %c0_124 = arith.constant 0 : index
    %62 = tpu.strided_load %arg13[%c0_121, %c3_122, %c1_123, %c0_124] {strides = array<i32: 1, 1, 2, 1>} : memref<2x8x8x32xf32, #tpu.memory_space<vmem>>, vector<2x1x3x32xf32>
    %c0_125 = arith.constant 0 : index
    %c3_126 = arith.constant 3 : index
    %c2_127 = arith.constant 2 : index
    %c0_128 = arith.constant 0 : index
    %63 = tpu.strided_load %arg13[%c0_125, %c3_126, %c2_127, %c0_128] {strides = array<i32: 1, 1, 2, 1>} : memref<2x8x8x32xf32, #tpu.memory_space<vmem>>, vector<2x1x3x32xf32>
    %c0_129 = arith.constant 0 : index
    %c3_130 = arith.constant 3 : index
    %c3_131 = arith.constant 3 : index
    %c0_132 = arith.constant 0 : index
    %64 = tpu.strided_load %arg13[%c0_129, %c3_130, %c3_131, %c0_132] {strides = array<i32: 1, 1, 2, 1>} : memref<2x8x8x32xf32, #tpu.memory_space<vmem>>, vector<2x1x3x32xf32>
    %c0_133 = arith.constant 0 : index
    %c4 = arith.constant 4 : index
    %c0_134 = arith.constant 0 : index
    %c0_135 = arith.constant 0 : index
    %65 = tpu.strided_load %arg13[%c0_133, %c4, %c0_134, %c0_135] {strides = array<i32: 1, 1, 2, 1>} : memref<2x8x8x32xf32, #tpu.memory_space<vmem>>, vector<2x1x3x32xf32>
    %c0_136 = arith.constant 0 : index
    %c4_137 = arith.constant 4 : index
    %c1_138 = arith.constant 1 : index
    %c0_139 = arith.constant 0 : index
    %66 = tpu.strided_load %arg13[%c0_136, %c4_137, %c1_138, %c0_139] {strides = array<i32: 1, 1, 2, 1>} : memref<2x8x8x32xf32, #tpu.memory_space<vmem>>, vector<2x1x3x32xf32>
    %c0_140 = arith.constant 0 : index
    %c4_141 = arith.constant 4 : index
    %c2_142 = arith.constant 2 : index
    %c0_143 = arith.constant 0 : index
    %67 = tpu.strided_load %arg13[%c0_140, %c4_141, %c2_142, %c0_143] {strides = array<i32: 1, 1, 2, 1>} : memref<2x8x8x32xf32, #tpu.memory_space<vmem>>, vector<2x1x3x32xf32>
    %c0_144 = arith.constant 0 : index
    %c4_145 = arith.constant 4 : index
    %c3_146 = arith.constant 3 : index
    %c0_147 = arith.constant 0 : index
    %68 = tpu.strided_load %arg13[%c0_144, %c4_145, %c3_146, %c0_147] {strides = array<i32: 1, 1, 2, 1>} : memref<2x8x8x32xf32, #tpu.memory_space<vmem>>, vector<2x1x3x32xf32>
    %c0_148 = arith.constant 0 : index
    %c5 = arith.constant 5 : index
    %c0_149 = arith.constant 0 : index
    %c0_150 = arith.constant 0 : index
    %69 = tpu.strided_load %arg13[%c0_148, %c5, %c0_149, %c0_150] {strides = array<i32: 1, 1, 2, 1>} : memref<2x8x8x32xf32, #tpu.memory_space<vmem>>, vector<2x1x3x32xf32>
    %c0_151 = arith.constant 0 : index
    %c5_152 = arith.constant 5 : index
    %c1_153 = arith.constant 1 : index
    %c0_154 = arith.constant 0 : index
    %70 = tpu.strided_load %arg13[%c0_151, %c5_152, %c1_153, %c0_154] {strides = array<i32: 1, 1, 2, 1>} : memref<2x8x8x32xf32, #tpu.memory_space<vmem>>, vector<2x1x3x32xf32>
    %c0_155 = arith.constant 0 : index
    %c5_156 = arith.constant 5 : index
    %c2_157 = arith.constant 2 : index
    %c0_158 = arith.constant 0 : index
    %71 = tpu.strided_load %arg13[%c0_155, %c5_156, %c2_157, %c0_158] {strides = array<i32: 1, 1, 2, 1>} : memref<2x8x8x32xf32, #tpu.memory_space<vmem>>, vector<2x1x3x32xf32>
    %c0_159 = arith.constant 0 : index
    %c5_160 = arith.constant 5 : index
    %c3_161 = arith.constant 3 : index
    %c0_162 = arith.constant 0 : index
    %72 = tpu.strided_load %arg13[%c0_159, %c5_160, %c3_161, %c0_162] {strides = array<i32: 1, 1, 2, 1>} : memref<2x8x8x32xf32, #tpu.memory_space<vmem>>, vector<2x1x3x32xf32>
    %73 = tpu.concatenate %57, %58, %59, %60, %61, %62, %63, %64, %65, %66, %67, %68, %69, %70, %71, %72 in 3 : vector<2x1x3x32xf32>, vector<2x1x3x32xf32>, vector<2x1x3x32xf32>, vector<2x1x3x32xf32>, vector<2x1x3x32xf32>, vector<2x1x3x32xf32>, vector<2x1x3x32xf32>, vector<2x1x3x32xf32>, vector<2x1x3x32xf32>, vector<2x1x3x32xf32>, vector<2x1x3x32xf32>, vector<2x1x3x32xf32>, vector<2x1x3x32xf32>, vector<2x1x3x32xf32>, vector<2x1x3x32xf32>, vector<2x1x3x32xf32> -> vector<2x1x3x512xf32>
    %74 = vector.extract_strided_slice %73 {offsets = [0, 0, 0, 0], sizes = [1, 1, 3, 512], strides = [1, 1, 1, 1]} : vector<2x1x3x512xf32> to vector<1x1x3x512xf32>
    %75 = vector.shape_cast %74 : vector<1x1x3x512xf32> to vector<3x512xf32>
    %76 = arith.truncf %75 : vector<3x512xf32> to vector<3x512xbf16>
    %cst_163 = arith.constant dense<0.000000e+00> : vector<3x64xf32>
    %77 = tpu.matmul %76, %16, %cst_163 {dimension_numbers = #tpu.dot_dimension_numbers<[1], [0], [0], [1], [0, 0, 1, 1], [], []>} : vector<3x512xbf16>, vector<512x64xbf16>, vector<3x64xf32> -> vector<3x64xf32>
    %78 = vector.broadcast %17 : vector<1x64xf32> to vector<3x64xf32>
    %79 = arith.addf %77, %78 : vector<3x64xf32>
    %cst_164 = arith.constant 0.000000e+00 : f32
    %80 = vector.broadcast %cst_164 : f32 to vector<3x64xf32>
    %81 = arith.maximumf %79, %80 : vector<3x64xf32>
    %c0_165 = arith.constant 0 : index
    %c1_166 = arith.constant 1 : index
    %c0_167 = arith.constant 0 : index
    %c0_168 = arith.constant 0 : index
    %82 = vector.load %arg14[%c0_165, %c1_166, %c0_167, %c0_168] : memref<2x3x3x64xf32, #tpu.memory_space<vmem>>, vector<1x1x3x64xf32>
    %83 = vector.shape_cast %82 : vector<1x1x3x64xf32> to vector<3x64xf32>
    %84 = vector.shape_cast %81 : vector<3x64xf32> to vector<1x1x3x64xf32>
    tpu.vector_store %arg14[%c0_165, %c1_166, %c0_167, %c0_168], %84 {strides = array<i32>} : memref<2x3x3x64xf32, #tpu.memory_space<vmem>>, vector<1x1x3x64xf32>,
    %85 = vector.extract_strided_slice %73 {offsets = [1, 0, 0, 0], sizes = [1, 1, 3, 512], strides = [1, 1, 1, 1]} : vector<2x1x3x512xf32> to vector<1x1x3x512xf32>
    %86 = vector.shape_cast %85 : vector<1x1x3x512xf32> to vector<3x512xf32>
    %87 = arith.truncf %86 : vector<3x512xf32> to vector<3x512xbf16>
    %cst_169 = arith.constant dense<0.000000e+00> : vector<3x64xf32>
    %88 = tpu.matmul %87, %16, %cst_169 {dimension_numbers = #tpu.dot_dimension_numbers<[1], [0], [0], [1], [0, 0, 1, 1], [], []>} : vector<3x512xbf16>, vector<512x64xbf16>, vector<3x64xf32> -> vector<3x64xf32>
    %89 = vector.broadcast %17 : vector<1x64xf32> to vector<3x64xf32>
    %90 = arith.addf %88, %89 : vector<3x64xf32>
    %cst_170 = arith.constant 0.000000e+00 : f32
    %91 = vector.broadcast %cst_170 : f32 to vector<3x64xf32>
    %92 = arith.maximumf %90, %91 : vector<3x64xf32>
    %c1_171 = arith.constant 1 : index
    %c1_172 = arith.constant 1 : index
    %c0_173 = arith.constant 0 : index
    %c0_174 = arith.constant 0 : index
    %93 = vector.load %arg14[%c1_171, %c1_172, %c0_173, %c0_174] : memref<2x3x3x64xf32, #tpu.memory_space<vmem>>, vector<1x1x3x64xf32>
    %94 = vector.shape_cast %93 : vector<1x1x3x64xf32> to vector<3x64xf32>
    %95 = vector.shape_cast %92 : vector<3x64xf32> to vector<1x1x3x64xf32>
    tpu.vector_store %arg14[%c1_171, %c1_172, %c0_173, %c0_174], %95 {strides = array<i32>} : memref<2x3x3x64xf32, #tpu.memory_space<vmem>>, vector<1x1x3x64xf32>,
    %c0_175 = arith.constant 0 : index
    %c4_176 = arith.constant 4 : index
    %c0_177 = arith.constant 0 : index
    %c0_178 = arith.constant 0 : index
    %96 = tpu.strided_load %arg13[%c0_175, %c4_176, %c0_177, %c0_178] {strides = array<i32: 1, 1, 2, 1>} : memref<2x8x8x32xf32, #tpu.memory_space<vmem>>, vector<2x1x3x32xf32>
    %c0_179 = arith.constant 0 : index
    %c4_180 = arith.constant 4 : index
    %c1_181 = arith.constant 1 : index
    %c0_182 = arith.constant 0 : index
    %97 = tpu.strided_load %arg13[%c0_179, %c4_180, %c1_181, %c0_182] {strides = array<i32: 1, 1, 2, 1>} : memref<2x8x8x32xf32, #tpu.memory_space<vmem>>, vector<2x1x3x32xf32>
    %c0_183 = arith.constant 0 : index
    %c4_184 = arith.constant 4 : index
    %c2_185 = arith.constant 2 : index
    %c0_186 = arith.constant 0 : index
    %98 = tpu.strided_load %arg13[%c0_183, %c4_184, %c2_185, %c0_186] {strides = array<i32: 1, 1, 2, 1>} : memref<2x8x8x32xf32, #tpu.memory_space<vmem>>, vector<2x1x3x32xf32>
    %c0_187 = arith.constant 0 : index
    %c4_188 = arith.constant 4 : index
    %c3_189 = arith.constant 3 : index
    %c0_190 = arith.constant 0 : index
    %99 = tpu.strided_load %arg13[%c0_187, %c4_188, %c3_189, %c0_190] {strides = array<i32: 1, 1, 2, 1>} : memref<2x8x8x32xf32, #tpu.memory_space<vmem>>, vector<2x1x3x32xf32>
    %c0_191 = arith.constant 0 : index
    %c5_192 = arith.constant 5 : index
    %c0_193 = arith.constant 0 : index
    %c0_194 = arith.constant 0 : index
    %100 = tpu.strided_load %arg13[%c0_191, %c5_192, %c0_193, %c0_194] {strides = array<i32: 1, 1, 2, 1>} : memref<2x8x8x32xf32, #tpu.memory_space<vmem>>, vector<2x1x3x32xf32>
    %c0_195 = arith.constant 0 : index
    %c5_196 = arith.constant 5 : index
    %c1_197 = arith.constant 1 : index
    %c0_198 = arith.constant 0 : index
    %101 = tpu.strided_load %arg13[%c0_195, %c5_196, %c1_197, %c0_198] {strides = array<i32: 1, 1, 2, 1>} : memref<2x8x8x32xf32, #tpu.memory_space<vmem>>, vector<2x1x3x32xf32>
    %c0_199 = arith.constant 0 : index
    %c5_200 = arith.constant 5 : index
    %c2_201 = arith.constant 2 : index
    %c0_202 = arith.constant 0 : index
    %102 = tpu.strided_load %arg13[%c0_199, %c5_200, %c2_201, %c0_202] {strides = array<i32: 1, 1, 2, 1>} : memref<2x8x8x32xf32, #tpu.memory_space<vmem>>, vector<2x1x3x32xf32>
    %c0_203 = arith.constant 0 : index
    %c5_204 = arith.constant 5 : index
    %c3_205 = arith.constant 3 : index
    %c0_206 = arith.constant 0 : index
    %103 = tpu.strided_load %arg13[%c0_203, %c5_204, %c3_205, %c0_206] {strides = array<i32: 1, 1, 2, 1>} : memref<2x8x8x32xf32, #tpu.memory_space<vmem>>, vector<2x1x3x32xf32>
    %c0_207 = arith.constant 0 : index
    %c6 = arith.constant 6 : index
    %c0_208 = arith.constant 0 : index
    %c0_209 = arith.constant 0 : index
    %104 = tpu.strided_load %arg13[%c0_207, %c6, %c0_208, %c0_209] {strides = array<i32: 1, 1, 2, 1>} : memref<2x8x8x32xf32, #tpu.memory_space<vmem>>, vector<2x1x3x32xf32>
    %c0_210 = arith.constant 0 : index
    %c6_211 = arith.constant 6 : index
    %c1_212 = arith.constant 1 : index
    %c0_213 = arith.constant 0 : index
    %105 = tpu.strided_load %arg13[%c0_210, %c6_211, %c1_212, %c0_213] {strides = array<i32: 1, 1, 2, 1>} : memref<2x8x8x32xf32, #tpu.memory_space<vmem>>, vector<2x1x3x32xf32>
    %c0_214 = arith.constant 0 : index
    %c6_215 = arith.constant 6 : index
    %c2_216 = arith.constant 2 : index
    %c0_217 = arith.constant 0 : index
    %106 = tpu.strided_load %arg13[%c0_214, %c6_215, %c2_216, %c0_217] {strides = array<i32: 1, 1, 2, 1>} : memref<2x8x8x32xf32, #tpu.memory_space<vmem>>, vector<2x1x3x32xf32>
    %c0_218 = arith.constant 0 : index
    %c6_219 = arith.constant 6 : index
    %c3_220 = arith.constant 3 : index
    %c0_221 = arith.constant 0 : index
    %107 = tpu.strided_load %arg13[%c0_218, %c6_219, %c3_220, %c0_221] {strides = array<i32: 1, 1, 2, 1>} : memref<2x8x8x32xf32, #tpu.memory_space<vmem>>, vector<2x1x3x32xf32>
    %c0_222 = arith.constant 0 : index
    %c7 = arith.constant 7 : index
    %c0_223 = arith.constant 0 : index
    %c0_224 = arith.constant 0 : index
    %108 = tpu.strided_load %arg13[%c0_222, %c7, %c0_223, %c0_224] {strides = array<i32: 1, 1, 2, 1>} : memref<2x8x8x32xf32, #tpu.memory_space<vmem>>, vector<2x1x3x32xf32>
    %c0_225 = arith.constant 0 : index
    %c7_226 = arith.constant 7 : index
    %c1_227 = arith.constant 1 : index
    %c0_228 = arith.constant 0 : index
    %109 = tpu.strided_load %arg13[%c0_225, %c7_226, %c1_227, %c0_228] {strides = array<i32: 1, 1, 2, 1>} : memref<2x8x8x32xf32, #tpu.memory_space<vmem>>, vector<2x1x3x32xf32>
    %c0_229 = arith.constant 0 : index
    %c7_230 = arith.constant 7 : index
    %c2_231 = arith.constant 2 : index
    %c0_232 = arith.constant 0 : index
    %110 = tpu.strided_load %arg13[%c0_229, %c7_230, %c2_231, %c0_232] {strides = array<i32: 1, 1, 2, 1>} : memref<2x8x8x32xf32, #tpu.memory_space<vmem>>, vector<2x1x3x32xf32>
    %c0_233 = arith.constant 0 : index
    %c7_234 = arith.constant 7 : index
    %c3_235 = arith.constant 3 : index
    %c0_236 = arith.constant 0 : index
    %111 = tpu.strided_load %arg13[%c0_233, %c7_234, %c3_235, %c0_236] {strides = array<i32: 1, 1, 2, 1>} : memref<2x8x8x32xf32, #tpu.memory_space<vmem>>, vector<2x1x3x32xf32>
    %112 = tpu.concatenate %96, %97, %98, %99, %100, %101, %102, %103, %104, %105, %106, %107, %108, %109, %110, %111 in 3 : vector<2x1x3x32xf32>, vector<2x1x3x32xf32>, vector<2x1x3x32xf32>, vector<2x1x3x32xf32>, vector<2x1x3x32xf32>, vector<2x1x3x32xf32>, vector<2x1x3x32xf32>, vector<2x1x3x32xf32>, vector<2x1x3x32xf32>, vector<2x1x3x32xf32>, vector<2x1x3x32xf32>, vector<2x1x3x32xf32>, vector<2x1x3x32xf32>, vector<2x1x3x32xf32>, vector<2x1x3x32xf32>, vector<2x1x3x32xf32> -> vector<2x1x3x512xf32>
    %113 = vector.extract_strided_slice %112 {offsets = [0, 0, 0, 0], sizes = [1, 1, 3, 512], strides = [1, 1, 1, 1]} : vector<2x1x3x512xf32> to vector<1x1x3x512xf32>
    %114 = vector.shape_cast %113 : vector<1x1x3x512xf32> to vector<3x512xf32>
    %115 = arith.truncf %114 : vector<3x512xf32> to vector<3x512xbf16>
    %cst_237 = arith.constant dense<0.000000e+00> : vector<3x64xf32>
    %116 = tpu.matmul %115, %16, %cst_237 {dimension_numbers = #tpu.dot_dimension_numbers<[1], [0], [0], [1], [0, 0, 1, 1], [], []>} : vector<3x512xbf16>, vector<512x64xbf16>, vector<3x64xf32> -> vector<3x64xf32>
    %117 = vector.broadcast %17 : vector<1x64xf32> to vector<3x64xf32>
    %118 = arith.addf %116, %117 : vector<3x64xf32>
    %cst_238 = arith.constant 0.000000e+00 : f32
    %119 = vector.broadcast %cst_238 : f32 to vector<3x64xf32>
    %120 = arith.maximumf %118, %119 : vector<3x64xf32>
    %c0_239 = arith.constant 0 : index
    %c2_240 = arith.constant 2 : index
    %c0_241 = arith.constant 0 : index
    %c0_242 = arith.constant 0 : index
    %121 = vector.load %arg14[%c0_239, %c2_240, %c0_241, %c0_242] : memref<2x3x3x64xf32, #tpu.memory_space<vmem>>, vector<1x1x3x64xf32>
    %122 = vector.shape_cast %121 : vector<1x1x3x64xf32> to vector<3x64xf32>
    %123 = vector.shape_cast %120 : vector<3x64xf32> to vector<1x1x3x64xf32>
    tpu.vector_store %arg14[%c0_239, %c2_240, %c0_241, %c0_242], %123 {strides = array<i32>} : memref<2x3x3x64xf32, #tpu.memory_space<vmem>>, vector<1x1x3x64xf32>,
    %124 = vector.extract_strided_slice %112 {offsets = [1, 0, 0, 0], sizes = [1, 1, 3, 512], strides = [1, 1, 1, 1]} : vector<2x1x3x512xf32> to vector<1x1x3x512xf32>
    %125 = vector.shape_cast %124 : vector<1x1x3x512xf32> to vector<3x512xf32>
    %126 = arith.truncf %125 : vector<3x512xf32> to vector<3x512xbf16>
    %cst_243 = arith.constant dense<0.000000e+00> : vector<3x64xf32>
    %127 = tpu.matmul %126, %16, %cst_243 {dimension_numbers = #tpu.dot_dimension_numbers<[1], [0], [0], [1], [0, 0, 1, 1], [], []>} : vector<3x512xbf16>, vector<512x64xbf16>, vector<3x64xf32> -> vector<3x64xf32>
    %128 = vector.broadcast %17 : vector<1x64xf32> to vector<3x64xf32>
    %129 = arith.addf %127, %128 : vector<3x64xf32>
    %cst_244 = arith.constant 0.000000e+00 : f32
    %130 = vector.broadcast %cst_244 : f32 to vector<3x64xf32>
    %131 = arith.maximumf %129, %130 : vector<3x64xf32>
    %c1_245 = arith.constant 1 : index
    %c2_246 = arith.constant 2 : index
    %c0_247 = arith.constant 0 : index
    %c0_248 = arith.constant 0 : index
    %132 = vector.load %arg14[%c1_245, %c2_246, %c0_247, %c0_248] : memref<2x3x3x64xf32, #tpu.memory_space<vmem>>, vector<1x1x3x64xf32>
    %133 = vector.shape_cast %132 : vector<1x1x3x64xf32> to vector<3x64xf32>
    %134 = vector.shape_cast %131 : vector<3x64xf32> to vector<1x1x3x64xf32>
    tpu.vector_store %arg14[%c1_245, %c2_246, %c0_247, %c0_248], %134 {strides = array<i32>} : memref<2x3x3x64xf32, #tpu.memory_space<vmem>>, vector<1x1x3x64xf32>,
    %c0_249 = arith.constant 0 : index
    %c0_250 = arith.constant 0 : index
    %c0_251 = arith.constant 0 : index
    %c0_252 = arith.constant 0 : index
    %135 = vector.load %arg14[%c0_249, %c0_250, %c0_251, %c0_252] : memref<2x3x3x64xf32, #tpu.memory_space<vmem>>, vector<2x1x1x64xf32>
    %c0_253 = arith.constant 0 : index
    %c0_254 = arith.constant 0 : index
    %c1_255 = arith.constant 1 : index
    %c0_256 = arith.constant 0 : index
    %136 = vector.load %arg14[%c0_253, %c0_254, %c1_255, %c0_256] : memref<2x3x3x64xf32, #tpu.memory_space<vmem>>, vector<2x1x1x64xf32>
    %c0_257 = arith.constant 0 : index
    %c0_258 = arith.constant 0 : index
    %c2_259 = arith.constant 2 : index
    %c0_260 = arith.constant 0 : index
    %137 = vector.load %arg14[%c0_257, %c0_258, %c2_259, %c0_260] : memref<2x3x3x64xf32, #tpu.memory_space<vmem>>, vector<2x1x1x64xf32>
    %c0_261 = arith.constant 0 : index
    %c1_262 = arith.constant 1 : index
    %c0_263 = arith.constant 0 : index
    %c0_264 = arith.constant 0 : index
    %138 = vector.load %arg14[%c0_261, %c1_262, %c0_263, %c0_264] : memref<2x3x3x64xf32, #tpu.memory_space<vmem>>, vector<2x1x1x64xf32>
    %c0_265 = arith.constant 0 : index
    %c1_266 = arith.constant 1 : index
    %c1_267 = arith.constant 1 : index
    %c0_268 = arith.constant 0 : index
    %139 = vector.load %arg14[%c0_265, %c1_266, %c1_267, %c0_268] : memref<2x3x3x64xf32, #tpu.memory_space<vmem>>, vector<2x1x1x64xf32>
    %c0_269 = arith.constant 0 : index
    %c1_270 = arith.constant 1 : index
    %c2_271 = arith.constant 2 : index
    %c0_272 = arith.constant 0 : index
    %140 = vector.load %arg14[%c0_269, %c1_270, %c2_271, %c0_272] : memref<2x3x3x64xf32, #tpu.memory_space<vmem>>, vector<2x1x1x64xf32>
    %c0_273 = arith.constant 0 : index
    %c2_274 = arith.constant 2 : index
    %c0_275 = arith.constant 0 : index
    %c0_276 = arith.constant 0 : index
    %141 = vector.load %arg14[%c0_273, %c2_274, %c0_275, %c0_276] : memref<2x3x3x64xf32, #tpu.memory_space<vmem>>, vector<2x1x1x64xf32>
    %c0_277 = arith.constant 0 : index
    %c2_278 = arith.constant 2 : index
    %c1_279 = arith.constant 1 : index
    %c0_280 = arith.constant 0 : index
    %142 = vector.load %arg14[%c0_277, %c2_278, %c1_279, %c0_280] : memref<2x3x3x64xf32, #tpu.memory_space<vmem>>, vector<2x1x1x64xf32>
    %c0_281 = arith.constant 0 : index
    %c2_282 = arith.constant 2 : index
    %c2_283 = arith.constant 2 : index
    %c0_284 = arith.constant 0 : index
    %143 = vector.load %arg14[%c0_281, %c2_282, %c2_283, %c0_284] : memref<2x3x3x64xf32, #tpu.memory_space<vmem>>, vector<2x1x1x64xf32>
    %144 = tpu.concatenate %135, %136, %137, %138, %139, %140, %141, %142, %143 in 3 : vector<2x1x1x64xf32>, vector<2x1x1x64xf32>, vector<2x1x1x64xf32>, vector<2x1x1x64xf32>, vector<2x1x1x64xf32>, vector<2x1x1x64xf32>, vector<2x1x1x64xf32>, vector<2x1x1x64xf32>, vector<2x1x1x64xf32> -> vector<2x1x1x576xf32>
    %c0_285 = arith.constant 0 : index
    %c0_286 = arith.constant 0 : index
    %145 = vector.load %arg6[%c0_285, %c0_286] : memref<576x64xbf16, #tpu.memory_space<vmem>>, vector<576x64xbf16>
    %c0_287 = arith.constant 0 : index
    %c0_288 = arith.constant 0 : index
    %146 = vector.load %arg7[%c0_287, %c0_288] : memref<1x64xf32, #tpu.memory_space<vmem>>, vector<1x64xf32>
    %c0_289 = arith.constant 0 : index
    %c0_290 = arith.constant 0 : index
    %147 = vector.load %arg9[%c0_289, %c0_290] : memref<1x512xf32, #tpu.memory_space<vmem>>, vector<1x512xf32>
    %c0_291 = arith.constant 0 : index
    %c0_292 = arith.constant 0 : index
    %148 = vector.load %arg10[%c0_291, %c0_292] : memref<512x2xbf16, #tpu.memory_space<vmem>>, vector<512x2xbf16>
    %c0_293 = arith.constant 0 : index
    %c0_294 = arith.constant 0 : index
    %149 = vector.load %arg11[%c0_293, %c0_294] : memref<1x2xf32, #tpu.memory_space<vmem>>, vector<1x2xf32>
    %cst_295 = arith.constant 0.000000e+00 : f32
    %150 = vector.broadcast %cst_295 : f32 to vector<1x512xf32>
    %151 = vector.extract_strided_slice %144 {offsets = [0, 0, 0, 0], sizes = [1, 1, 1, 576], strides = [1, 1, 1, 1]} : vector<2x1x1x576xf32> to vector<1x1x1x576xf32>
    %152 = vector.shape_cast %151 : vector<1x1x1x576xf32> to vector<1x576xf32>
    %153 = arith.truncf %152 : vector<1x576xf32> to vector<1x576xbf16>
    %cst_296 = arith.constant dense<0.000000e+00> : vector<1x64xf32>
    %154 = tpu.matmul %153, %145, %cst_296 {dimension_numbers = #tpu.dot_dimension_numbers<[1], [0], [0], [1], [0, 0, 1, 1], [], []>} : vector<1x576xbf16>, vector<576x64xbf16>, vector<1x64xf32> -> vector<1x64xf32>
    %155 = arith.addf %154, %146 : vector<1x64xf32>
    %cst_297 = arith.constant 0.000000e+00 : f32
    %156 = vector.broadcast %cst_297 : f32 to vector<1x64xf32>
    %157 = arith.maximumf %155, %156 : vector<1x64xf32>
    %158 = arith.truncf %157 : vector<1x64xf32> to vector<1x64xbf16>
    %c0_298 = arith.constant 0 : index
    %c0_299 = arith.constant 0 : index
    %c0_300 = arith.constant 0 : index
    %159 = vector.load %arg8[%c0_298, %c0_299, %c0_300] : memref<1x64x512xbf16, #tpu.memory_space<vmem>>, vector<1x64x512xbf16>
    %160 = vector.shape_cast %159 : vector<1x64x512xbf16> to vector<64x512xbf16>
    %cst_301 = arith.constant dense<0.000000e+00> : vector<1x512xf32>
    %161 = tpu.matmul %158, %160, %cst_301 {dimension_numbers = #tpu.dot_dimension_numbers<[1], [0], [0], [1], [0, 0, 1, 1], [], []>} : vector<1x64xbf16>, vector<64x512xbf16>, vector<1x512xf32> -> vector<1x512xf32>
    %162 = arith.addf %150, %161 : vector<1x512xf32>
    %163 = arith.addf %162, %147 : vector<1x512xf32>
    %cst_302 = arith.constant 0.000000e+00 : f32
    %164 = vector.broadcast %cst_302 : f32 to vector<1x512xf32>
    %165 = arith.maximumf %163, %164 : vector<1x512xf32>
    %166 = arith.truncf %165 : vector<1x512xf32> to vector<1x512xbf16>
    %cst_303 = arith.constant dense<0.000000e+00> : vector<1x2xf32>
    %167 = tpu.matmul %166, %148, %cst_303 {dimension_numbers = #tpu.dot_dimension_numbers<[1], [0], [0], [1], [0, 0, 1, 1], [], []>} : vector<1x512xbf16>, vector<512x2xbf16>, vector<1x2xf32> -> vector<1x2xf32>
    %168 = arith.addf %167, %149 : vector<1x2xf32>
    %c0_304 = arith.constant 0 : index
    %c0_305 = arith.constant 0 : index
    %169 = vector.load %arg12[%c0_304, %c0_305] : memref<2x2xf32, #tpu.memory_space<vmem>>, vector<1x2xf32>
    tpu.vector_store %arg12[%c0_304, %c0_305], %168 {strides = array<i32>} : memref<2x2xf32, #tpu.memory_space<vmem>>, vector<1x2xf32>,
    %cst_306 = arith.constant 0.000000e+00 : f32
    %170 = vector.broadcast %cst_306 : f32 to vector<1x512xf32>
    %171 = vector.extract_strided_slice %144 {offsets = [1, 0, 0, 0], sizes = [1, 1, 1, 576], strides = [1, 1, 1, 1]} : vector<2x1x1x576xf32> to vector<1x1x1x576xf32>
    %172 = vector.shape_cast %171 : vector<1x1x1x576xf32> to vector<1x576xf32>
    %173 = arith.truncf %172 : vector<1x576xf32> to vector<1x576xbf16>
    %cst_307 = arith.constant dense<0.000000e+00> : vector<1x64xf32>
    %174 = tpu.matmul %173, %145, %cst_307 {dimension_numbers = #tpu.dot_dimension_numbers<[1], [0], [0], [1], [0, 0, 1, 1], [], []>} : vector<1x576xbf16>, vector<576x64xbf16>, vector<1x64xf32> -> vector<1x64xf32>
    %175 = arith.addf %174, %146 : vector<1x64xf32>
    %cst_308 = arith.constant 0.000000e+00 : f32
    %176 = vector.broadcast %cst_308 : f32 to vector<1x64xf32>
    %177 = arith.maximumf %175, %176 : vector<1x64xf32>
    %178 = arith.truncf %177 : vector<1x64xf32> to vector<1x64xbf16>
    %c0_309 = arith.constant 0 : index
    %c0_310 = arith.constant 0 : index
    %c0_311 = arith.constant 0 : index
    %179 = vector.load %arg8[%c0_309, %c0_310, %c0_311] : memref<1x64x512xbf16, #tpu.memory_space<vmem>>, vector<1x64x512xbf16>
    %180 = vector.shape_cast %179 : vector<1x64x512xbf16> to vector<64x512xbf16>
    %cst_312 = arith.constant dense<0.000000e+00> : vector<1x512xf32>
    %181 = tpu.matmul %178, %180, %cst_312 {dimension_numbers = #tpu.dot_dimension_numbers<[1], [0], [0], [1], [0, 0, 1, 1], [], []>} : vector<1x64xbf16>, vector<64x512xbf16>, vector<1x512xf32> -> vector<1x512xf32>
    %182 = arith.addf %170, %181 : vector<1x512xf32>
    %183 = arith.addf %182, %147 : vector<1x512xf32>
    %cst_313 = arith.constant 0.000000e+00 : f32
    %184 = vector.broadcast %cst_313 : f32 to vector<1x512xf32>
    %185 = arith.maximumf %183, %184 : vector<1x512xf32>
    %186 = arith.truncf %185 : vector<1x512xf32> to vector<1x512xbf16>
    %cst_314 = arith.constant dense<0.000000e+00> : vector<1x2xf32>
    %187 = tpu.matmul %186, %148, %cst_314 {dimension_numbers = #tpu.dot_dimension_numbers<[1], [0], [0], [1], [0, 0, 1, 1], [], []>} : vector<1x512xbf16>, vector<512x2xbf16>, vector<1x2xf32> -> vector<1x2xf32>
    %188 = arith.addf %187, %149 : vector<1x2xf32>
    %c1_315 = arith.constant 1 : index
    %c0_316 = arith.constant 0 : index
    %189 = vector.load %arg12[%c1_315, %c0_316] : memref<2x2xf32, #tpu.memory_space<vmem>>, vector<1x2xf32>
    tpu.vector_store %arg12[%c1_315, %c0_316], %188 {strides = array<i32>} : memref<2x2xf32, #tpu.memory_space<vmem>>, vector<1x2xf32>,
    return
  }
  func.func @transform_0(%arg0: i32) -> (i32, i32, i32, i32) {
    %c0_i32 = arith.constant 0 : i32
    %c0_i32_0 = arith.constant 0 : i32
    %c0_i32_1 = arith.constant 0 : i32
    %c0_i32_2 = arith.constant 0 : i32
    %c0_i32_3 = arith.constant 0 : i32
    return %c0_i32, %c0_i32_0, %c0_i32_1, %c0_i32_2 : i32, i32, i32, i32
  }
  func.func @transform_1(%arg0: i32) -> (i32, i32) {
    %c0_i32 = arith.constant 0 : i32
    %c0_i32_0 = arith.constant 0 : i32
    %c0_i32_1 = arith.constant 0 : i32
    return %c0_i32, %c0_i32_0 : i32, i32
  }
  func.func @transform_2(%arg0: i32) -> (i32, i32) {
    %c0_i32 = arith.constant 0 : i32
    %c0_i32_0 = arith.constant 0 : i32
    %c0_i32_1 = arith.constant 0 : i32
    return %c0_i32, %c0_i32_0 : i32, i32
  }
  func.func @transform_3(%arg0: i32) -> (i32, i32) {
    %c0_i32 = arith.constant 0 : i32
    %c0_i32_0 = arith.constant 0 : i32
    %c0_i32_1 = arith.constant 0 : i32
    return %c0_i32, %c0_i32_0 : i32, i32
  }
  func.func @transform_4(%arg0: i32) -> (i32, i32) {
    %c0_i32 = arith.constant 0 : i32
    %c0_i32_0 = arith.constant 0 : i32
    %c0_i32_1 = arith.constant 0 : i32
    return %c0_i32, %c0_i32_0 : i32, i32
  }
  func.func @transform_5(%arg0: i32) -> (i32, i32) {
    %c0_i32 = arith.constant 0 : i32
    %c0_i32_0 = arith.constant 0 : i32
    %c0_i32_1 = arith.constant 0 : i32
    return %c0_i32, %c0_i32_0 : i32, i32
  }
  func.func @transform_6(%arg0: i32) -> (i32, i32) {
    %c0_i32 = arith.constant 0 : i32
    %c0_i32_0 = arith.constant 0 : i32
    %c0_i32_1 = arith.constant 0 : i32
    return %c0_i32, %c0_i32_0 : i32, i32
  }
  func.func @transform_7(%arg0: i32) -> (i32, i32, i32) {
    %c0_i32 = arith.constant 0 : i32
    %c0_i32_0 = arith.constant 0 : i32
    %c0_i32_1 = arith.constant 0 : i32
    %c0_i32_2 = arith.constant 0 : i32
    return %c0_i32, %c0_i32_0, %c0_i32_1 : i32, i32, i32
  }
  func.func @transform_8(%arg0: i32) -> (i32, i32) {
    %c0_i32 = arith.constant 0 : i32
    %c0_i32_0 = arith.constant 0 : i32
    %c0_i32_1 = arith.constant 0 : i32
    return %c0_i32, %c0_i32_0 : i32, i32
  }
  func.func @transform_9(%arg0: i32) -> (i32, i32) {
    %c0_i32 = arith.constant 0 : i32
    %c0_i32_0 = arith.constant 0 : i32
    %c0_i32_1 = arith.constant 0 : i32
    return %c0_i32, %c0_i32_0 : i32, i32
  }
  func.func @transform_10(%arg0: i32) -> (i32, i32) {
    %c0_i32 = arith.constant 0 : i32
    %c0_i32_0 = arith.constant 0 : i32
    %c0_i32_1 = arith.constant 0 : i32
    return %c0_i32, %c0_i32_0 : i32, i32
  }
  func.func @transform_11(%arg0: i32) -> (i32, i32) {
    %c0_i32 = arith.constant 0 : i32
    %c0_i32_0 = arith.constant 0 : i32
    %c0_i32_1 = arith.constant 0 : i32
    return %c0_i32, %c0_i32_0 : i32, i32
  }
}

</mosaic_0001>

<llo_original>
// kernel: dqn_forward.1
$region0: #{dqn_forward.1}
  #allocation0 [shape = 'u32[]', space=smem, size = 0x4, offset = 0x4, fixed_abs, tag = 'smem constant byte address 0x4 - core index']
  #allocation1 [shape = 'u32[144,128]{1,0:T(1,128)}', space=vmem, size = 0x12000, scoped, tag = 'internal scratch']
  #allocation2 [shape = 'f32[2,8,8,32]{3,2,1,0:T(8,128)}', space=vmem, size = 0x10000, scoped, tag = 'scratch operand']
  #allocation3 [shape = 'f32[2,3,3,64]{3,2,1,0:T(4,128)}', space=vmem, size = 0x3000, scoped, tag = 'scratch operand']
  %s0 = inlined_call_operand.vmem [shape: f32[2,9,9,64], index: 0, kind: input, shape index: {}]
  %s1 = inlined_call_operand.vmem [shape: bf16[256,32], index: 1, kind: input, shape index: {}]
  %s2 = inlined_call_operand.vmem [shape: f32[1,32], index: 2, kind: input, shape index: {}]
  %s3 = inlined_call_operand.vmem [shape: bf16[512,64], index: 3, kind: input, shape index: {}]
  %s4 = inlined_call_operand.vmem [shape: f32[1,64], index: 4, kind: input, shape index: {}]
  %s5 = inlined_call_operand.vmem [shape: bf16[576,64], index: 5, kind: input, shape index: {}]
  %s6 = inlined_call_operand.vmem [shape: f32[1,64], index: 6, kind: input, shape index: {}]
  %s7 = inlined_call_operand.vmem [shape: bf16[1,64,512], index: 7, kind: input, shape index: {}]
  %s8 = inlined_call_operand.vmem [shape: f32[1,512], index: 8, kind: input, shape index: {}]
  %s9 = inlined_call_operand.vmem [shape: bf16[512,2], index: 9, kind: input, shape index: {}]
  %s10 = inlined_call_operand.vmem [shape: f32[1,2], index: 10, kind: input, shape index: {}]
  %s11 = inlined_call_operand.hbm [shape: f32[2,2], index: 11, kind: output, shape index: {}]
  %s12 = sld [smem:[#allocation0]]
  $region54: #{dqn_forward.1} parent=0
    _
  %s14 = ssub.s32 1, %s12
  %s15 = scalar_select 0, %s14, %s12
  $region1: #{dqn_forward.1} parent=0
    #allocation4 [shape = 'u8[1024]{0}', space=vmem, size = 0x400, scoped, tag = 'output window, operand 0, single buffered']
    #allocation5 [shape = 's32[1]{0}', space=sflag, size = 0x4, scoped, tag = 'scoped memory for dqn_forward.1']
    %16 = vsyncpa [#allocation5], 0
    // Predicated region
    $region2: #{dqn_forward.1} parent=1 // pred_check
      _
    $region3: #{dqn_forward.1} parent=1 // pred_check_branch
      %18 = sbr.rel (0) target = $region5
    $region4: #{dqn_forward.1} parent=1 // pred_region
      _
    $region5: #{dqn_forward.1} parent=1 // pred_fallthru
      _
    // Predicated region
    $region6: #{dqn_forward.1} parent=1 // pred_check
      _
    $region7: #{dqn_forward.1} parent=1 // pred_check_branch
      %20 = sbr.rel (0) target = $region9
    $region8: #{dqn_forward.1} parent=1 // pred_region
      _
    $region9: #{dqn_forward.1} parent=1 // pred_fallthru
      _
    // Predicated region
    $region10: #{dqn_forward.1} parent=1 // pred_check
      _
    $region11: #{dqn_forward.1} parent=1 // pred_check_branch
      %22 = sbr.rel (0) target = $region13
    $region12: #{dqn_forward.1} parent=1 // pred_region
      _
    $region13: #{dqn_forward.1} parent=1 // pred_fallthru
      _
    // Predicated region
    $region14: #{dqn_forward.1} parent=1 // pred_check
      _
    $region15: #{dqn_forward.1} parent=1 // pred_check_branch
      %24 = sbr.rel (0) target = $region17
    $region16: #{dqn_forward.1} parent=1 // pred_region
      _
    $region17: #{dqn_forward.1} parent=1 // pred_fallthru
      _
    // Predicated region
    $region18: #{dqn_forward.1} parent=1 // pred_check
      _
    $region19: #{dqn_forward.1} parent=1 // pred_check_branch
      %26 = sbr.rel (0) target = $region21
    $region20: #{dqn_forward.1} parent=1 // pred_region
      _
    $region21: #{dqn_forward.1} parent=1 // pred_fallthru
      _
    // Predicated region
    $region22: #{dqn_forward.1} parent=1 // pred_check
      _
    $region23: #{dqn_forward.1} parent=1 // pred_check_branch
      %28 = sbr.rel (0) target = $region25
    $region24: #{dqn_forward.1} parent=1 // pred_region
      _
    $region25: #{dqn_forward.1} parent=1 // pred_fallthru
      _
    // Predicated region
    $region26: #{dqn_forward.1} parent=1 // pred_check
      _
    $region27: #{dqn_forward.1} parent=1 // pred_check_branch
      %30 = sbr.rel (0) target = $region29
    $region28: #{dqn_forward.1} parent=1 // pred_region
      _
    $region29: #{dqn_forward.1} parent=1 // pred_fallthru
      _
    // Predicated region
    $region30: #{dqn_forward.1} parent=1 // pred_check
      _
    $region31: #{dqn_forward.1} parent=1 // pred_check_branch
      %32 = sbr.rel (0) target = $region33
    $region32: #{dqn_forward.1} parent=1 // pred_region
      _
    $region33: #{dqn_forward.1} parent=1 // pred_fallthru
      _
    // Predicated region
    $region34: #{dqn_forward.1} parent=1 // pred_check
      _
    $region35: #{dqn_forward.1} parent=1 // pred_check_branch
      %34 = sbr.rel (0) target = $region37
    $region36: #{dqn_forward.1} parent=1 // pred_region
      _
    $region37: #{dqn_forward.1} parent=1 // pred_fallthru
      _
    // Predicated region
    $region38: #{dqn_forward.1} parent=1 // pred_check
      _
    $region39: #{dqn_forward.1} parent=1 // pred_check_branch
      %36 = sbr.rel (0) target = $region41
    $region40: #{dqn_forward.1} parent=1 // pred_region
      _
    $region41: #{dqn_forward.1} parent=1 // pred_fallthru
      _
    // Predicated region
    $region42: #{dqn_forward.1} parent=1 // pred_check
      _
    $region43: #{dqn_forward.1} parent=1 // pred_check_branch
      %38 = sbr.rel (0) target = $region45
    $region44: #{dqn_forward.1} parent=1 // pred_region
      _
    $region45: #{dqn_forward.1} parent=1 // pred_fallthru
      _
    %v40 = vld [vmem:[%s0] sm:$0xff]
    %v41 = vld [vmem:[%s0 + $0x10] sm:$0xff]
    %v42 = vld [vmem:[%s0 + $0x20] sm:$0xff]
    %v43 = vld [vmem:[%s0 + $0x30] sm:$0xff]
    %v44 = vld [vmem:[%s0 + $0x40] sm:$0xff]
    %v45 = vld [vmem:[%s0 + $0x50] sm:$0xff]
    %v46 = vld [vmem:[%s0 + $0x60] sm:$0xff]
    %v47 = vld [vmem:[%s0 + $0x70] sm:$0xff]
    %v48 = vld [vmem:[%s0 + $0x90] sm:$0xff]
    %v49 = vld [vmem:[%s0 + $0xa0] sm:$0xff]
    %v50 = vld [vmem:[%s0 + $0xb0] sm:$0xff]
    %v51 = vld [vmem:[%s0 + $0xc0] sm:$0xff]
    %v52 = vld [vmem:[%s0 + $0xd0] sm:$0xff]
    %v53 = vld [vmem:[%s0 + $0xe0] sm:$0xff]
    %v54 = vld [vmem:[%s0 + $0xf0] sm:$0xff]
    %v55 = vld [vmem:[%s0 + $0x100] sm:$0xff]
    %v56 = vld [vmem:[%s0 + $0x1] sm:$0xff]
    %v57 = vld [vmem:[%s0 + $0x11] sm:$0xff]
    %v58 = vld [vmem:[%s0 + $0x21] sm:$0xff]
    %v59 = vld [vmem:[%s0 + $0x31] sm:$0xff]
    %v60 = vld [vmem:[%s0 + $0x41] sm:$0xff]
    %v61 = vld [vmem:[%s0 + $0x51] sm:$0xff]
    %v62 = vld [vmem:[%s0 + $0x61] sm:$0xff]
    %v63 = vld [vmem:[%s0 + $0x71] sm:$0xff]
    %v64 = vld [vmem:[%s0 + $0x91] sm:$0xff]
    %v65 = vld [vmem:[%s0 + $0xa1] sm:$0xff]
    %v66 = vld [vmem:[%s0 + $0xb1] sm:$0xff]
    %v67 = vld [vmem:[%s0 + $0xc1] sm:$0xff]
    %v68 = vld [vmem:[%s0 + $0xd1] sm:$0xff]
    %v69 = vld [vmem:[%s0 + $0xe1] sm:$0xff]
    %v70 = vld [vmem:[%s0 + $0xf1] sm:$0xff]
    %v71 = vld [vmem:[%s0 + $0x101] sm:$0xff]
    %s72 = scalar_lea.vmem %s0, 16
    %v73 = vld [vmem:[%s72] sm:$0xff]
    %v74 = vld [vmem:[%s72 + $0x10] sm:$0xff]
    %v75 = vld [vmem:[%s72 + $0x20] sm:$0xff]
    %v76 = vld [vmem:[%s72 + $0x30] sm:$0xff]
    %v77 = vld [vmem:[%s72 + $0x40] sm:$0xff]
    %v78 = vld [vmem:[%s72 + $0x50] sm:$0xff]
    %v79 = vld [vmem:[%s72 + $0x60] sm:$0xff]
    %v80 = vld [vmem:[%s72 + $0x70] sm:$0xff]
    %v81 = vld [vmem:[%s72 + $0x90] sm:$0xff]
    %v82 = vld [vmem:[%s72 + $0xa0] sm:$0xff]
    %v83 = vld [vmem:[%s72 + $0xb0] sm:$0xff]
    %v84 = vld [vmem:[%s72 + $0xc0] sm:$0xff]
    %v85 = vld [vmem:[%s72 + $0xd0] sm:$0xff]
    %v86 = vld [vmem:[%s72 + $0xe0] sm:$0xff]
    %v87 = vld [vmem:[%s72 + $0xf0] sm:$0xff]
    %v88 = vld [vmem:[%s72 + $0x100] sm:$0xff]
    %v89 = vld [vmem:[%s72 + $0x1] sm:$0xff]
    %v90 = vld [vmem:[%s72 + $0x11] sm:$0xff]
    %v91 = vld [vmem:[%s72 + $0x21] sm:$0xff]
    %v92 = vld [vmem:[%s72 + $0x31] sm:$0xff]
    %v93 = vld [vmem:[%s72 + $0x41] sm:$0xff]
    %v94 = vld [vmem:[%s72 + $0x51] sm:$0xff]
    %v95 = vld [vmem:[%s72 + $0x61] sm:$0xff]
    %v96 = vld [vmem:[%s72 + $0x71] sm:$0xff]
    %v97 = vld [vmem:[%s72 + $0x91] sm:$0xff]
    %v98 = vld [vmem:[%s72 + $0xa1] sm:$0xff]
    %v99 = vld [vmem:[%s72 + $0xb1] sm:$0xff]
    %v100 = vld [vmem:[%s72 + $0xc1] sm:$0xff]
    %v101 = vld [vmem:[%s72 + $0xd1] sm:$0xff]
    %v102 = vld [vmem:[%s72 + $0xe1] sm:$0xff]
    %v103 = vld [vmem:[%s72 + $0xf1] sm:$0xff]
    %v104 = vld [vmem:[%s72 + $0x101] sm:$0xff]
    %121 = vrot.lane.b32.xlu0 %v56, 64
    %v122 = vpop.permute.xlu0 %121
    %123 = vrot.lane.b32.xlu0 %v57, 64
    %v124 = vpop.permute.xlu0 %123
    %125 = vrot.lane.b32.xlu0 %v58, 64
    %v126 = vpop.permute.xlu0 %125
    %127 = vrot.lane.b32.xlu0 %v59, 64
    %v128 = vpop.permute.xlu0 %127
    %129 = vrot.lane.b32.xlu0 %v60, 64
    %v130 = vpop.permute.xlu0 %129
    %131 = vrot.lane.b32.xlu0 %v61, 64
    %v132 = vpop.permute.xlu0 %131
    %133 = vrot.lane.b32.xlu0 %v62, 64
    %v134 = vpop.permute.xlu0 %133
    %135 = vrot.lane.b32.xlu0 %v63, 64
    %v136 = vpop.permute.xlu0 %135
    %137 = vrot.lane.b32.xlu0 %v64, 64
    %v138 = vpop.permute.xlu0 %137
    %139 = vrot.lane.b32.xlu0 %v65, 64
    %v140 = vpop.permute.xlu0 %139
    %141 = vrot.lane.b32.xlu0 %v66, 64
    %v142 = vpop.permute.xlu0 %141
    %143 = vrot.lane.b32.xlu0 %v67, 64
    %v144 = vpop.permute.xlu0 %143
    %145 = vrot.lane.b32.xlu0 %v68, 64
    %v146 = vpop.permute.xlu0 %145
    %147 = vrot.lane.b32.xlu0 %v69, 64
    %v148 = vpop.permute.xlu0 %147
    %149 = vrot.lane.b32.xlu0 %v70, 64
    %v150 = vpop.permute.xlu0 %149
    %151 = vrot.lane.b32.xlu0 %v71, 64
    %v152 = vpop.permute.xlu0 %151
    %185 = vrot.lane.b32.xlu0 %v89, 64
    %v186 = vpop.permute.xlu0 %185
    %187 = vrot.lane.b32.xlu0 %v90, 64
    %v188 = vpop.permute.xlu0 %187
    %189 = vrot.lane.b32.xlu0 %v91, 64
    %v190 = vpop.permute.xlu0 %189
    %191 = vrot.lane.b32.xlu0 %v92, 64
    %v192 = vpop.permute.xlu0 %191
    %193 = vrot.lane.b32.xlu0 %v93, 64
    %v194 = vpop.permute.xlu0 %193
    %195 = vrot.lane.b32.xlu0 %v94, 64
    %v196 = vpop.permute.xlu0 %195
    %197 = vrot.lane.b32.xlu0 %v95, 64
    %v198 = vpop.permute.xlu0 %197
    %199 = vrot.lane.b32.xlu0 %v96, 64
    %v200 = vpop.permute.xlu0 %199
    %201 = vrot.lane.b32.xlu0 %v97, 64
    %v202 = vpop.permute.xlu0 %201
    %203 = vrot.lane.b32.xlu0 %v98, 64
    %v204 = vpop.permute.xlu0 %203
    %205 = vrot.lane.b32.xlu0 %v99, 64
    %v206 = vpop.permute.xlu0 %205
    %207 = vrot.lane.b32.xlu0 %v100, 64
    %v208 = vpop.permute.xlu0 %207
    %209 = vrot.lane.b32.xlu0 %v101, 64
    %v210 = vpop.permute.xlu0 %209
    %211 = vrot.lane.b32.xlu0 %v102, 64
    %v212 = vpop.permute.xlu0 %211
    %213 = vrot.lane.b32.xlu0 %v103, 64
    %v214 = vpop.permute.xlu0 %213
    %215 = vrot.lane.b32.xlu0 %v104, 64
    %v216 = vpop.permute.xlu0 %215
    %vm233 = vcmask 523264
    %v234 = vsel %vm233, %v40, %v122
    %v235 = vsel %vm233, %v41, %v124
    %v236 = vsel %vm233, %v42, %v126
    %v237 = vsel %vm233, %v43, %v128
    %v238 = vsel %vm233, %v44, %v130
    %v239 = vsel %vm233, %v45, %v132
    %v240 = vsel %vm233, %v46, %v134
    %v241 = vsel %vm233, %v47, %v136
    %v242 = vsel %vm233, %v48, %v138
    %v243 = vsel %vm233, %v49, %v140
    %v244 = vsel %vm233, %v50, %v142
    %v245 = vsel %vm233, %v51, %v144
    %v246 = vsel %vm233, %v52, %v146
    %v247 = vsel %vm233, %v53, %v148
    %v248 = vsel %vm233, %v54, %v150
    %v249 = vsel %vm233, %v55, %v152
    %v250 = vsel %vm233, %v73, %v186
    %v251 = vsel %vm233, %v74, %v188
    %v252 = vsel %vm233, %v75, %v190
    %v253 = vsel %vm233, %v76, %v192
    %v254 = vsel %vm233, %v77, %v194
    %v255 = vsel %vm233, %v78, %v196
    %v256 = vsel %vm233, %v79, %v198
    %v257 = vsel %vm233, %v80, %v200
    %v258 = vsel %vm233, %v81, %v202
    %v259 = vsel %vm233, %v82, %v204
    %v260 = vsel %vm233, %v83, %v206
    %v261 = vsel %vm233, %v84, %v208
    %v262 = vsel %vm233, %v85, %v210
    %v263 = vsel %vm233, %v86, %v212
    %v264 = vsel %vm233, %v87, %v214
    %v265 = vsel %vm233, %v88, %v216
    %v266 = vpack.c.bf16 %v235, %v234
    %v267 = vpack.c.bf16 %v251, %v250
    %v268 = vpack.c.bf16 %v237, %v236
    %v269 = vpack.c.bf16 %v253, %v252
    %v270 = vpack.c.bf16 %v239, %v238
    %v271 = vpack.c.bf16 %v255, %v254
    %v272 = vpack.c.bf16 %v241, %v240
    %v273 = vpack.c.bf16 %v257, %v256
    %v274 = vpack.c.bf16 %v243, %v242
    %v275 = vpack.c.bf16 %v259, %v258
    %v276 = vpack.c.bf16 %v245, %v244
    %v277 = vpack.c.bf16 %v261, %v260
    %v278 = vpack.c.bf16 %v247, %v246
    %v279 = vpack.c.bf16 %v263, %v262
    %v280 = vpack.c.bf16 %v249, %v248
    %v281 = vpack.c.bf16 %v265, %v264
    %v282 = vld [vmem:[%s1] sm:$0xf]
    %v283 = vld [vmem:[%s1 + $0x4] sm:$0xf]
    %v284 = vld [vmem:[%s1 + $0x8] sm:$0xf]
    %v285 = vld [vmem:[%s1 + $0xc] sm:$0xf]
    %v286 = vld [vmem:[%s1 + $0x10] sm:$0xf]
    %v287 = vld [vmem:[%s1 + $0x14] sm:$0xf]
    %v288 = vld [vmem:[%s1 + $0x18] sm:$0xf]
    %v289 = vld [vmem:[%s1 + $0x1c] sm:$0xf]
    %v290 = vld [vmem:[%s1 + $0x20] sm:$0xf]
    %v291 = vld [vmem:[%s1 + $0x24] sm:$0xf]
    %v292 = vld [vmem:[%s1 + $0x28] sm:$0xf]
    %v293 = vld [vmem:[%s1 + $0x2c] sm:$0xf]
    %v294 = vld [vmem:[%s1 + $0x30] sm:$0xf]
    %v295 = vld [vmem:[%s1 + $0x34] sm:$0xf]
    %v296 = vld [vmem:[%s1 + $0x38] sm:$0xf]
    %v297 = vld [vmem:[%s1 + $0x3c] sm:$0xf]
    %v298 = vld [vmem:[%s1 + $0x40] sm:$0xf]
    %v299 = vld [vmem:[%s1 + $0x44] sm:$0xf]
    %v300 = vld [vmem:[%s1 + $0x48] sm:$0xf]
    %v301 = vld [vmem:[%s1 + $0x4c] sm:$0xf]
    %v302 = vld [vmem:[%s1 + $0x50] sm:$0xf]
    %v303 = vld [vmem:[%s1 + $0x54] sm:$0xf]
    %v304 = vld [vmem:[%s1 + $0x58] sm:$0xf]
    %v305 = vld [vmem:[%s1 + $0x5c] sm:$0xf]
    %v306 = vld [vmem:[%s1 + $0x60] sm:$0xf]
    %v307 = vld [vmem:[%s1 + $0x64] sm:$0xf]
    %v308 = vld [vmem:[%s1 + $0x68] sm:$0xf]
    %v309 = vld [vmem:[%s1 + $0x6c] sm:$0xf]
    %v310 = vld [vmem:[%s1 + $0x70] sm:$0xf]
    %v311 = vld [vmem:[%s1 + $0x74] sm:$0xf]
    %v312 = vld [vmem:[%s1 + $0x78] sm:$0xf]
    %v313 = vld [vmem:[%s1 + $0x7c] sm:$0xf]
    %v314 = vld [vmem:[%s2] sm:$0x1]
    %v316 = vlaneseq
    %v317 = vshrl.u32 %v316, 7
    %v318 = vsub.s32 0, %v317
    %v319 = vrot.slane %v314, %v318
    %v353 = vunpack.c.l.b16 %v282
    %v354 = vunpack.c.l.b16 %v283
    %v355 = vunpack.c.l.b16 %v284
    %v356 = vunpack.c.l.b16 %v285
    %v357 = vunpack.c.l.b16 %v286
    %v358 = vunpack.c.l.b16 %v287
    %v359 = vunpack.c.l.b16 %v288
    %v360 = vunpack.c.l.b16 %v289
    %v361 = vunpack.c.l.b16 %v290
    %v362 = vunpack.c.l.b16 %v291
    %v363 = vunpack.c.l.b16 %v292
    %v364 = vunpack.c.l.b16 %v293
    %v365 = vunpack.c.l.b16 %v294
    %v366 = vunpack.c.l.b16 %v295
    %v367 = vunpack.c.l.b16 %v296
    %v368 = vunpack.c.l.b16 %v297
    %v369 = vunpack.c.l.b16 %v298
    %v370 = vunpack.c.l.b16 %v299
    %v371 = vunpack.c.l.b16 %v300
    %v372 = vunpack.c.l.b16 %v301
    %v373 = vunpack.c.l.b16 %v302
    %v374 = vunpack.c.l.b16 %v303
    %v375 = vunpack.c.l.b16 %v304
    %v376 = vunpack.c.l.b16 %v305
    %v377 = vunpack.c.l.b16 %v306
    %v378 = vunpack.c.l.b16 %v307
    %v379 = vunpack.c.l.b16 %v308
    %v380 = vunpack.c.l.b16 %v309
    %v381 = vunpack.c.l.b16 %v310
    %v382 = vunpack.c.l.b16 %v311
    %v383 = vunpack.c.l.b16 %v312
    %v384 = vunpack.c.l.b16 %v313
    %v385 = vpack.c.b16 %v354, %v353
    %v386 = vpack.c.b16 %v356, %v355
    %v387 = vpack.c.b16 %v358, %v357
    %v388 = vpack.c.b16 %v360, %v359
    %v389 = vpack.c.b16 %v362, %v361
    %v390 = vpack.c.b16 %v364, %v363
    %v391 = vpack.c.b16 %v366, %v365
    %v392 = vpack.c.b16 %v368, %v367
    %v393 = vpack.c.b16 %v370, %v369
    %v394 = vpack.c.b16 %v372, %v371
    %v395 = vpack.c.b16 %v374, %v373
    %v396 = vpack.c.b16 %v376, %v375
    %v397 = vpack.c.b16 %v378, %v377
    %v398 = vpack.c.b16 %v380, %v379
    %v399 = vpack.c.b16 %v382, %v381
    %v400 = vpack.c.b16 %v384, %v383
    %417 = vmatprep.subr.bf16.mxu0 0
    %418 = vmatpush1.bf16.msra.mxu0 %v392
    %419 = vmatprep.subr.bf16.mxu0 0
    %420 = vmatpush1.bf16.msra.mxu0 %v391
    %421 = vmatprep.subr.bf16.mxu0 0
    %422 = vmatpush1.bf16.msra.mxu0 %v390
    %423 = vmatprep.subr.bf16.mxu0 0
    %424 = vmatpush1.bf16.msra.mxu0 %v389
    %425 = vmatprep.subr.bf16.mxu0 0
    %426 = vmatpush1.bf16.msra.mxu0 %v388
    %427 = vmatprep.subr.bf16.mxu0 0
    %428 = vmatpush1.bf16.msra.mxu0 %v387
    %429 = vmatprep.subr.bf16.mxu0 0
    %430 = vmatpush1.bf16.msra.mxu0 %v386
    %431 = vmatprep.subr.bf16.mxu0 0
    %432 = vmatpush1.bf16.msra.mxu0 %v385
    %433 = vmatprep.subr.bf16.mxu0 0
    %434 = vmatpush2.bf16.msra.mxu0 %v400
    %435 = vmatprep.subr.bf16.mxu0 0
    %436 = vmatpush2.bf16.msra.mxu0 %v399
    %437 = vmatprep.subr.bf16.mxu0 0
    %438 = vmatpush2.bf16.msra.mxu0 %v398
    %439 = vmatprep.subr.bf16.mxu0 0
    %440 = vmatpush2.bf16.msra.mxu0 %v397
    %441 = vmatprep.subr.bf16.mxu0 0
    %442 = vmatpush2.bf16.msra.mxu0 %v396
    %443 = vmatprep.subr.bf16.mxu0 0
    %444 = vmatpush2.bf16.msra.mxu0 %v395
    %445 = vmatprep.subr.bf16.mxu0 0
    %446 = vmatpush2.bf16.msra.mxu0 %v394
    %447 = vmatprep.subr.bf16.mxu0 0
    %448 = vmatpush2.bf16.msra.mxu0 %v393
    %449 = vmatprep.mubr.bf16.mxu0 %v267
    %450 = vmatmul.mubr.bf16.gmra.mxu0 %v266
    %v451 = vpop.f32.mrf.mxu0
    %v452 = vadd.f32 %v319, %v451
    %v453 = vpop.f32.mrf.mxu0
    %v454 = vpop.f32.mrf.mxu0
    %v455 = vadd.f32 %v319, %v454
    %v456 = vpop.f32.mrf.mxu0
    %457 = vmatprep.mubr.bf16.mxu0 %v269
    %458 = vmatmul.mubr.bf16.gmra.mxu0 %v268
    %v459 = vpop.f32.mrf.mxu0
    %v460 = vadd.f32 %v319, %v459
    %v461 = vpop.f32.mrf.mxu0
    %v462 = vpop.f32.mrf.mxu0
    %v463 = vadd.f32 %v319, %v462
    %v464 = vpop.f32.mrf.mxu0
    %465 = vmatprep.mubr.bf16.mxu0 %v271
    %466 = vmatmul.mubr.bf16.gmra.mxu0 %v270
    %v467 = vpop.f32.mrf.mxu0
    %v468 = vadd.f32 %v319, %v467
    %v469 = vpop.f32.mrf.mxu0
    %v470 = vpop.f32.mrf.mxu0
    %v471 = vadd.f32 %v319, %v470
    %v472 = vpop.f32.mrf.mxu0
    %473 = vmatprep.mubr.bf16.mxu0 %v273
    %474 = vmatmul.mubr.bf16.gmra.mxu0 %v272
    %v475 = vpop.f32.mrf.mxu0
    %v476 = vadd.f32 %v319, %v475
    %v477 = vpop.f32.mrf.mxu0
    %v478 = vpop.f32.mrf.mxu0
    %v479 = vadd.f32 %v319, %v478
    %v480 = vpop.f32.mrf.mxu0
    %481 = vmatprep.mubr.bf16.mxu0 %v275
    %482 = vmatmul.mubr.bf16.gmra.mxu0 %v274
    %v483 = vpop.f32.mrf.mxu0
    %v484 = vadd.f32 %v319, %v483
    %v485 = vpop.f32.mrf.mxu0
    %v486 = vpop.f32.mrf.mxu0
    %v487 = vadd.f32 %v319, %v486
    %v488 = vpop.f32.mrf.mxu0
    %489 = vmatprep.mubr.bf16.mxu0 %v277
    %490 = vmatmul.mubr.bf16.gmra.mxu0 %v276
    %v491 = vpop.f32.mrf.mxu0
    %v492 = vadd.f32 %v319, %v491
    %v493 = vpop.f32.mrf.mxu0
    %v494 = vpop.f32.mrf.mxu0
    %v495 = vadd.f32 %v319, %v494
    %v496 = vpop.f32.mrf.mxu0
    %497 = vmatprep.mubr.bf16.mxu0 %v279
    %498 = vmatmul.mubr.bf16.gmra.mxu0 %v278
    %v499 = vpop.f32.mrf.mxu0
    %v500 = vadd.f32 %v319, %v499
    %v501 = vpop.f32.mrf.mxu0
    %v502 = vpop.f32.mrf.mxu0
    %v503 = vadd.f32 %v319, %v502
    %v504 = vpop.f32.mrf.mxu0
    %505 = vmatprep.mubr.bf16.mxu0 %v281
    %506 = vmatmul.mubr.bf16.gmra.mxu0 %v280
    %v507 = vpop.f32.mrf.mxu0
    %v508 = vadd.f32 %v319, %v507
    %v509 = vpop.f32.mrf.mxu0
    %v510 = vpop.f32.mrf.mxu0
    %v511 = vadd.f32 %v319, %v510
    %v512 = vpop.f32.mrf.mxu0
    %513 = vdwg.mxu0
    %v514 = vmax.f32 %v452, 0.0
    %v515 = vmax.f32 %v455, 0.0
    %v516 = vmax.f32 %v460, 0.0
    %v517 = vmax.f32 %v463, 0.0
    %v518 = vmax.f32 %v468, 0.0
    %v519 = vmax.f32 %v471, 0.0
    %v520 = vmax.f32 %v476, 0.0
    %v521 = vmax.f32 %v479, 0.0
    %v522 = vmax.f32 %v484, 0.0
    %v523 = vmax.f32 %v487, 0.0
    %v524 = vmax.f32 %v492, 0.0
    %v525 = vmax.f32 %v495, 0.0
    %v526 = vmax.f32 %v500, 0.0
    %v527 = vmax.f32 %v503, 0.0
    %v528 = vmax.f32 %v508, 0.0
    %v529 = vmax.f32 %v511, 0.0
    %vm530 = vcmask 261120
    %531 = vst.msk [vmem:[#allocation2] sm:$0xff] %vm530, %v514
    %532 = vst.msk [vmem:[#allocation2 + $0x8] sm:$0xff] %vm530, %v515
    %533 = vst.msk [vmem:[#allocation2 + $0x10] sm:$0xff] %vm530, %v516
    %534 = vst.msk [vmem:[#allocation2 + $0x18] sm:$0xff] %vm530, %v517
    %535 = vst.msk [vmem:[#allocation2 + $0x20] sm:$0xff] %vm530, %v518
    %536 = vst.msk [vmem:[#allocation2 + $0x28] sm:$0xff] %vm530, %v519
    %537 = vst.msk [vmem:[#allocation2 + $0x30] sm:$0xff] %vm530, %v520
    %538 = vst.msk [vmem:[#allocation2 + $0x38] sm:$0xff] %vm530, %v521
    %539 = vst.msk [vmem:[#allocation2 + $0x40] sm:$0xff] %vm530, %v522
    %540 = vst.msk [vmem:[#allocation2 + $0x48] sm:$0xff] %vm530, %v523
    %541 = vst.msk [vmem:[#allocation2 + $0x50] sm:$0xff] %vm530, %v524
    %542 = vst.msk [vmem:[#allocation2 + $0x58] sm:$0xff] %vm530, %v525
    %543 = vst.msk [vmem:[#allocation2 + $0x60] sm:$0xff] %vm530, %v526
    %544 = vst.msk [vmem:[#allocation2 + $0x68] sm:$0xff] %vm530, %v527
    %545 = vst.msk [vmem:[#allocation2 + $0x70] sm:$0xff] %vm530, %v528
    %546 = vst.msk [vmem:[#allocation2 + $0x78] sm:$0xff] %vm530, %v529
    %v547 = vld [vmem:[%s3] sm:$0xf]
    %v548 = vld [vmem:[%s3 + $0x4] sm:$0xf]
    %v549 = vld [vmem:[%s3 + $0x8] sm:$0xf]
    %v550 = vld [vmem:[%s3 + $0xc] sm:$0xf]
    %v551 = vld [vmem:[%s3 + $0x10] sm:$0xf]
    %v552 = vld [vmem:[%s3 + $0x14] sm:$0xf]
    %v553 = vld [vmem:[%s3 + $0x18] sm:$0xf]
    %v554 = vld [vmem:[%s3 + $0x1c] sm:$0xf]
    %v555 = vld [vmem:[%s3 + $0x20] sm:$0xf]
    %v556 = vld [vmem:[%s3 + $0x24] sm:$0xf]
    %v557 = vld [vmem:[%s3 + $0x28] sm:$0xf]
    %v558 = vld [vmem:[%s3 + $0x2c] sm:$0xf]
    %v559 = vld [vmem:[%s3 + $0x30] sm:$0xf]
    %v560 = vld [vmem:[%s3 + $0x34] sm:$0xf]
    %v561 = vld [vmem:[%s3 + $0x38] sm:$0xf]
    %v562 = vld [vmem:[%s3 + $0x3c] sm:$0xf]
    %v563 = vld [vmem:[%s3 + $0x40] sm:$0xf]
    %v564 = vld [vmem:[%s3 + $0x44] sm:$0xf]
    %v565 = vld [vmem:[%s3 + $0x48] sm:$0xf]
    %v566 = vld [vmem:[%s3 + $0x4c] sm:$0xf]
    %v567 = vld [vmem:[%s3 + $0x50] sm:$0xf]
    %v568 = vld [vmem:[%s3 + $0x54] sm:$0xf]
    %v569 = vld [vmem:[%s3 + $0x58] sm:$0xf]
    %v570 = vld [vmem:[%s3 + $0x5c] sm:$0xf]
    %v571 = vld [vmem:[%s3 + $0x60] sm:$0xf]
    %v572 = vld [vmem:[%s3 + $0x64] sm:$0xf]
    %v573 = vld [vmem:[%s3 + $0x68] sm:$0xf]
    %v574 = vld [vmem:[%s3 + $0x6c] sm:$0xf]
    %v575 = vld [vmem:[%s3 + $0x70] sm:$0xf]
    %v576 = vld [vmem:[%s3 + $0x74] sm:$0xf]
    %v577 = vld [vmem:[%s3 + $0x78] sm:$0xf]
    %v578 = vld [vmem:[%s3 + $0x7c] sm:$0xf]
    %v579 = vld [vmem:[%s3 + $0x80] sm:$0xf]
    %v580 = vld [vmem:[%s3 + $0x84] sm:$0xf]
    %v581 = vld [vmem:[%s3 + $0x88] sm:$0xf]
    %v582 = vld [vmem:[%s3 + $0x8c] sm:$0xf]
    %v583 = vld [vmem:[%s3 + $0x90] sm:$0xf]
    %v584 = vld [vmem:[%s3 + $0x94] sm:$0xf]
    %v585 = vld [vmem:[%s3 + $0x98] sm:$0xf]
    %v586 = vld [vmem:[%s3 + $0x9c] sm:$0xf]
    %v587 = vld [vmem:[%s3 + $0xa0] sm:$0xf]
    %v588 = vld [vmem:[%s3 + $0xa4] sm:$0xf]
    %v589 = vld [vmem:[%s3 + $0xa8] sm:$0xf]
    %v590 = vld [vmem:[%s3 + $0xac] sm:$0xf]
    %v591 = vld [vmem:[%s3 + $0xb0] sm:$0xf]
    %v592 = vld [vmem:[%s3 + $0xb4] sm:$0xf]
    %v593 = vld [vmem:[%s3 + $0xb8] sm:$0xf]
    %v594 = vld [vmem:[%s3 + $0xbc] sm:$0xf]
    %v595 = vld [vmem:[%s3 + $0xc0] sm:$0xf]
    %v596 = vld [vmem:[%s3 + $0xc4] sm:$0xf]
    %v597 = vld [vmem:[%s3 + $0xc8] sm:$0xf]
    %v598 = vld [vmem:[%s3 + $0xcc] sm:$0xf]
    %v599 = vld [vmem:[%s3 + $0xd0] sm:$0xf]
    %v600 = vld [vmem:[%s3 + $0xd4] sm:$0xf]
    %v601 = vld [vmem:[%s3 + $0xd8] sm:$0xf]
    %v602 = vld [vmem:[%s3 + $0xdc] sm:$0xf]
    %v603 = vld [vmem:[%s3 + $0xe0] sm:$0xf]
    %v604 = vld [vmem:[%s3 + $0xe4] sm:$0xf]
    %v605 = vld [vmem:[%s3 + $0xe8] sm:$0xf]
    %v606 = vld [vmem:[%s3 + $0xec] sm:$0xf]
    %v607 = vld [vmem:[%s3 + $0xf0] sm:$0xf]
    %v608 = vld [vmem:[%s3 + $0xf4] sm:$0xf]
    %v609 = vld [vmem:[%s3 + $0xf8] sm:$0xf]
    %v610 = vld [vmem:[%s3 + $0xfc] sm:$0xf]
    %v611 = vld [vmem:[%s4] sm:$0x1]
    %v612 = vld [vmem:[#allocation2] ss:$2 sm:$0x7]
    %s613 = scalar_lea.vmem [#allocation2], 64
    %v614 = vld [vmem:[%s613] ss:$2 sm:$0x7]
    %s615 = scalar_lea.vmem [#allocation2], 1
    %v616 = vld [vmem:[%s615] ss:$2 sm:$0x7]
    %s617 = scalar_lea.vmem [#allocation2], 65
    %v618 = vld [vmem:[%s617] ss:$2 sm:$0x7]
    %s619 = scalar_lea.vmem [#allocation2], 2
    %v620 = vld [vmem:[%s619] ss:$2 sm:$0x7]
    %s621 = scalar_lea.vmem [#allocation2], 66
    %v622 = vld [vmem:[%s621] ss:$2 sm:$0x7]
    %s623 = scalar_lea.vmem [#allocation2], 3
    %v624 = vld [vmem:[%s623] ss:$2 sm:$0x7]
    %s625 = scalar_lea.vmem [#allocation2], 67
    %v626 = vld [vmem:[%s625] ss:$2 sm:$0x7]
    %s627 = scalar_lea.vmem [#allocation2], 8
    %v628 = vld [vmem:[%s627] ss:$2 sm:$0x7]
    %s629 = scalar_lea.vmem %s627, 64 [#allocation2]
    %v630 = vld [vmem:[%s629] ss:$2 sm:$0x7]
    %s631 = scalar_lea.vmem %s627, 1 [#allocation2]
    %v632 = vld [vmem:[%s631] ss:$2 sm:$0x7]
    %s633 = scalar_lea.vmem %s627, 65 [#allocation2]
    %v634 = vld [vmem:[%s633] ss:$2 sm:$0x7]
    %s635 = scalar_lea.vmem %s627, 2 [#allocation2]
    %v636 = vld [vmem:[%s635] ss:$2 sm:$0x7]
    %s637 = scalar_lea.vmem %s627, 66 [#allocation2]
    %v638 = vld [vmem:[%s637] ss:$2 sm:$0x7]
    %s639 = scalar_lea.vmem %s627, 3 [#allocation2]
    %v640 = vld [vmem:[%s639] ss:$2 sm:$0x7]
    %s641 = scalar_lea.vmem %s627, 67 [#allocation2]
    %v642 = vld [vmem:[%s641] ss:$2 sm:$0x7]
    %s643 = scalar_lea.vmem [#allocation2], 16
    %v644 = vld [vmem:[%s643] ss:$2 sm:$0x7]
    %s645 = scalar_lea.vmem %s643, 64 [#allocation2]
    %v646 = vld [vmem:[%s645] ss:$2 sm:$0x7]
    %s647 = scalar_lea.vmem %s643, 1 [#allocation2]
    %v648 = vld [vmem:[%s647] ss:$2 sm:$0x7]
    %s649 = scalar_lea.vmem %s643, 65 [#allocation2]
    %v650 = vld [vmem:[%s649] ss:$2 sm:$0x7]
    %s651 = scalar_lea.vmem %s643, 2 [#allocation2]
    %v652 = vld [vmem:[%s651] ss:$2 sm:$0x7]
    %s653 = scalar_lea.vmem %s643, 66 [#allocation2]
    %v654 = vld [vmem:[%s653] ss:$2 sm:$0x7]
    %s655 = scalar_lea.vmem %s643, 3 [#allocation2]
    %v656 = vld [vmem:[%s655] ss:$2 sm:$0x7]
    %s657 = scalar_lea.vmem %s643, 67 [#allocation2]
    %v658 = vld [vmem:[%s657] ss:$2 sm:$0x7]
    %s659 = scalar_lea.vmem [#allocation2], 24
    %v660 = vld [vmem:[%s659] ss:$2 sm:$0x7]
    %s661 = scalar_lea.vmem %s659, 64 [#allocation2]
    %v662 = vld [vmem:[%s661] ss:$2 sm:$0x7]
    %s663 = scalar_lea.vmem %s659, 1 [#allocation2]
    %v664 = vld [vmem:[%s663] ss:$2 sm:$0x7]
    %s665 = scalar_lea.vmem %s659, 65 [#allocation2]
    %v666 = vld [vmem:[%s665] ss:$2 sm:$0x7]
    %s667 = scalar_lea.vmem %s659, 2 [#allocation2]
    %v668 = vld [vmem:[%s667] ss:$2 sm:$0x7]
    %s669 = scalar_lea.vmem %s659, 66 [#allocation2]
    %v670 = vld [vmem:[%s669] ss:$2 sm:$0x7]
    %s671 = scalar_lea.vmem %s659, 3 [#allocation2]
    %v672 = vld [vmem:[%s671] ss:$2 sm:$0x7]
    %s673 = scalar_lea.vmem %s659, 67 [#allocation2]
    %v674 = vld [vmem:[%s673] ss:$2 sm:$0x7]
    %677 = vrot.lane.b32.xlu0 %v616, 32
    %v678 = vpop.permute.xlu0 %677
    %679 = vrot.lane.b32.xlu0 %v618, 32
    %v680 = vpop.permute.xlu0 %679
    %685 = vrot.lane.b32.xlu0 %v620, 64
    %v686 = vpop.permute.xlu0 %685
    %687 = vrot.lane.b32.xlu0 %v622, 64
    %v688 = vpop.permute.xlu0 %687
    %693 = vrot.lane.b32.xlu0 %v624, 96
    %v694 = vpop.permute.xlu0 %693
    %695 = vrot.lane.b32.xlu0 %v626, 96
    %v696 = vpop.permute.xlu0 %695
    %701 = vrot.lane.b32.xlu0 %v632, 32
    %v702 = vpop.permute.xlu0 %701
    %703 = vrot.lane.b32.xlu0 %v634, 32
    %v704 = vpop.permute.xlu0 %703
    %709 = vrot.lane.b32.xlu0 %v636, 64
    %v710 = vpop.permute.xlu0 %709
    %711 = vrot.lane.b32.xlu0 %v638, 64
    %v712 = vpop.permute.xlu0 %711
    %717 = vrot.lane.b32.xlu0 %v640, 96
    %v718 = vpop.permute.xlu0 %717
    %719 = vrot.lane.b32.xlu0 %v642, 96
    %v720 = vpop.permute.xlu0 %719
    %725 = vrot.lane.b32.xlu0 %v648, 32
    %v726 = vpop.permute.xlu0 %725
    %727 = vrot.lane.b32.xlu0 %v650, 32
    %v728 = vpop.permute.xlu0 %727
    %733 = vrot.lane.b32.xlu0 %v652, 64
    %v734 = vpop.permute.xlu0 %733
    %735 = vrot.lane.b32.xlu0 %v654, 64
    %v736 = vpop.permute.xlu0 %735
    %741 = vrot.lane.b32.xlu0 %v656, 96
    %v742 = vpop.permute.xlu0 %741
    %743 = vrot.lane.b32.xlu0 %v658, 96
    %v744 = vpop.permute.xlu0 %743
    %749 = vrot.lane.b32.xlu0 %v664, 32
    %v750 = vpop.permute.xlu0 %749
    %751 = vrot.lane.b32.xlu0 %v666, 32
    %v752 = vpop.permute.xlu0 %751
    %757 = vrot.lane.b32.xlu0 %v668, 64
    %v758 = vpop.permute.xlu0 %757
    %759 = vrot.lane.b32.xlu0 %v670, 64
    %v760 = vpop.permute.xlu0 %759
    %765 = vrot.lane.b32.xlu0 %v672, 96
    %v766 = vpop.permute.xlu0 %765
    %767 = vrot.lane.b32.xlu0 %v674, 96
    %v768 = vpop.permute.xlu0 %767
    %v771 = vsel %vm530, %v612, %v678
    %v772 = vsel %vm530, %v614, %v680
    %v773 = vsel %vm233, %v771, %v686
    %v774 = vsel %vm233, %v772, %v688
    %vm775 = vcmask 785408
    %v776 = vsel %vm775, %v773, %v694
    %v777 = vsel %vm775, %v774, %v696
    %v778 = vsel %vm530, %v628, %v702
    %v779 = vsel %vm530, %v630, %v704
    %v780 = vsel %vm233, %v778, %v710
    %v781 = vsel %vm233, %v779, %v712
    %v782 = vsel %vm775, %v780, %v718
    %v783 = vsel %vm775, %v781, %v720
    %v784 = vsel %vm530, %v644, %v726
    %v785 = vsel %vm530, %v646, %v728
    %v786 = vsel %vm233, %v784, %v734
    %v787 = vsel %vm233, %v785, %v736
    %v788 = vsel %vm775, %v786, %v742
    %v789 = vsel %vm775, %v787, %v744
    %v790 = vsel %vm530, %v660, %v750
    %v791 = vsel %vm530, %v662, %v752
    %v792 = vsel %vm233, %v790, %v758
    %v793 = vsel %vm233, %v791, %v760
    %v794 = vsel %vm775, %v792, %v766
    %v795 = vsel %vm775, %v793, %v768
    %v796 = vpack.c.bf16 %v776, %v776
    %v797 = vpack.c.bf16 %v782, %v782
    %v798 = vpack.c.bf16 %v788, %v788
    %v799 = vpack.c.bf16 %v794, %v794
    %v801 = vlaneseq
    %v802 = vshrl.u32 %v801, 7
    %v803 = vsub.s32 0, %v802
    %v804 = vrot.slane %v611, %v803
    %v870 = vunpack.c.l.b16 %v547
    %v871 = vunpack.c.l.b16 %v548
    %v872 = vunpack.c.l.b16 %v549
    %v873 = vunpack.c.l.b16 %v550
    %v874 = vunpack.c.l.b16 %v551
    %v875 = vunpack.c.l.b16 %v552
    %v876 = vunpack.c.l.b16 %v553
    %v877 = vunpack.c.l.b16 %v554
    %v878 = vunpack.c.l.b16 %v555
    %v879 = vunpack.c.l.b16 %v556
    %v880 = vunpack.c.l.b16 %v557
    %v881 = vunpack.c.l.b16 %v558
    %v882 = vunpack.c.l.b16 %v559
    %v883 = vunpack.c.l.b16 %v560
    %v884 = vunpack.c.l.b16 %v561
    %v885 = vunpack.c.l.b16 %v562
    %v886 = vunpack.c.l.b16 %v563
    %v887 = vunpack.c.l.b16 %v564
    %v888 = vunpack.c.l.b16 %v565
    %v889 = vunpack.c.l.b16 %v566
    %v890 = vunpack.c.l.b16 %v567
    %v891 = vunpack.c.l.b16 %v568
    %v892 = vunpack.c.l.b16 %v569
    %v893 = vunpack.c.l.b16 %v570
    %v894 = vunpack.c.l.b16 %v571
    %v895 = vunpack.c.l.b16 %v572
    %v896 = vunpack.c.l.b16 %v573
    %v897 = vunpack.c.l.b16 %v574
    %v898 = vunpack.c.l.b16 %v575
    %v899 = vunpack.c.l.b16 %v576
    %v900 = vunpack.c.l.b16 %v577
    %v901 = vunpack.c.l.b16 %v578
    %v902 = vunpack.c.l.b16 %v579
    %v903 = vunpack.c.l.b16 %v580
    %v904 = vunpack.c.l.b16 %v581
    %v905 = vunpack.c.l.b16 %v582
    %v906 = vunpack.c.l.b16 %v583
    %v907 = vunpack.c.l.b16 %v584
    %v908 = vunpack.c.l.b16 %v585
    %v909 = vunpack.c.l.b16 %v586
    %v910 = vunpack.c.l.b16 %v587
    %v911 = vunpack.c.l.b16 %v588
    %v912 = vunpack.c.l.b16 %v589
    %v913 = vunpack.c.l.b16 %v590
    %v914 = vunpack.c.l.b16 %v591
    %v915 = vunpack.c.l.b16 %v592
    %v916 = vunpack.c.l.b16 %v593
    %v917 = vunpack.c.l.b16 %v594
    %v918 = vunpack.c.l.b16 %v595
    %v919 = vunpack.c.l.b16 %v596
    %v920 = vunpack.c.l.b16 %v597
    %v921 = vunpack.c.l.b16 %v598
    %v922 = vunpack.c.l.b16 %v599
    %v923 = vunpack.c.l.b16 %v600
    %v924 = vunpack.c.l.b16 %v601
    %v925 = vunpack.c.l.b16 %v602
    %v926 = vunpack.c.l.b16 %v603
    %v927 = vunpack.c.l.b16 %v604
    %v928 = vunpack.c.l.b16 %v605
    %v929 = vunpack.c.l.b16 %v606
    %v930 = vunpack.c.l.b16 %v607
    %v931 = vunpack.c.l.b16 %v608
    %v932 = vunpack.c.l.b16 %v609
    %v933 = vunpack.c.l.b16 %v610
    %v934 = vpack.c.b16 %v871, %v870
    %v935 = vpack.c.b16 %v873, %v872
    %v936 = vpack.c.b16 %v875, %v874
    %v937 = vpack.c.b16 %v877, %v876
    %v938 = vpack.c.b16 %v879, %v878
    %v939 = vpack.c.b16 %v881, %v880
    %v940 = vpack.c.b16 %v883, %v882
    %v941 = vpack.c.b16 %v885, %v884
    %v942 = vpack.c.b16 %v887, %v886
    %v943 = vpack.c.b16 %v889, %v888
    %v944 = vpack.c.b16 %v891, %v890
    %v945 = vpack.c.b16 %v893, %v892
    %v946 = vpack.c.b16 %v895, %v894
    %v947 = vpack.c.b16 %v897, %v896
    %v948 = vpack.c.b16 %v899, %v898
    %v949 = vpack.c.b16 %v901, %v900
    %v950 = vpack.c.b16 %v903, %v902
    %v951 = vpack.c.b16 %v905, %v904
    %v952 = vpack.c.b16 %v907, %v906
    %v953 = vpack.c.b16 %v909, %v908
    %v954 = vpack.c.b16 %v911, %v910
    %v955 = vpack.c.b16 %v913, %v912
    %v956 = vpack.c.b16 %v915, %v914
    %v957 = vpack.c.b16 %v917, %v916
    %v958 = vpack.c.b16 %v919, %v918
    %v959 = vpack.c.b16 %v921, %v920
    %v960 = vpack.c.b16 %v923, %v922
    %v961 = vpack.c.b16 %v925, %v924
    %v962 = vpack.c.b16 %v927, %v926
    %v963 = vpack.c.b16 %v929, %v928
    %v964 = vpack.c.b16 %v931, %v930
    %v965 = vpack.c.b16 %v933, %v932
    %998 = vmatprep.subr.bf16.mxu0 0
    %999 = vmatpush1.bf16.msra.mxu0 %v941
    %1000 = vmatprep.subr.bf16.mxu0 0
    %1001 = vmatpush1.bf16.msra.mxu0 %v940
    %1002 = vmatprep.subr.bf16.mxu0 0
    %1003 = vmatpush1.bf16.msra.mxu0 %v939
    %1004 = vmatprep.subr.bf16.mxu0 0
    %1005 = vmatpush1.bf16.msra.mxu0 %v938
    %1006 = vmatprep.subr.bf16.mxu0 0
    %1007 = vmatpush1.bf16.msra.mxu0 %v937
    %1008 = vmatprep.subr.bf16.mxu0 0
    %1009 = vmatpush1.bf16.msra.mxu0 %v936
    %1010 = vmatprep.subr.bf16.mxu0 0
    %1011 = vmatpush1.bf16.msra.mxu0 %v935
    %1012 = vmatprep.subr.bf16.mxu0 0
    %1013 = vmatpush1.bf16.msra.mxu0 %v934
    %1014 = vmatprep.subr.bf16.mxu0 0
    %1015 = vmatpush2.bf16.msra.mxu0 %v949
    %1016 = vmatprep.subr.bf16.mxu0 0
    %1017 = vmatpush2.bf16.msra.mxu0 %v948
    %1018 = vmatprep.subr.bf16.mxu0 0
    %1019 = vmatpush2.bf16.msra.mxu0 %v947
    %1020 = vmatprep.subr.bf16.mxu0 0
    %1021 = vmatpush2.bf16.msra.mxu0 %v946
    %1022 = vmatprep.subr.bf16.mxu0 0
    %1023 = vmatpush2.bf16.msra.mxu0 %v945
    %1024 = vmatprep.subr.bf16.mxu0 0
    %1025 = vmatpush2.bf16.msra.mxu0 %v944
    %1026 = vmatprep.subr.bf16.mxu0 0
    %1027 = vmatpush2.bf16.msra.mxu0 %v943
    %1028 = vmatprep.subr.bf16.mxu0 0
    %1029 = vmatpush2.bf16.msra.mxu0 %v942
    %1030 = vmatprep.mubr.bf16.mxu0 %v797
    %1031 = vmatmul.mubr.bf16.gmra.mxu0 %v796
    %v1032 = vpop.f32.mrf.mxu0
    %v1033 = vadd.f32 %v804, %v1032
    %v1034 = vpop.f32.mrf.mxu0
    %v1035 = vpop.f32.mrf.mxu0
    %v1036 = vpop.f32.mrf.mxu0
    %1037 = vdwg.mxu0
    %1038 = vmatprep.subr.bf16.mxu0 0
    %1039 = vmatpush1.bf16.msra.mxu0 %v957
    %1040 = vmatprep.subr.bf16.mxu0 0
    %1041 = vmatpush1.bf16.msra.mxu0 %v956
    %1042 = vmatprep.subr.bf16.mxu0 0
    %1043 = vmatpush1.bf16.msra.mxu0 %v955
    %1044 = vmatprep.subr.bf16.mxu0 0
    %1045 = vmatpush1.bf16.msra.mxu0 %v954
    %1046 = vmatprep.subr.bf16.mxu0 0
    %1047 = vmatpush1.bf16.msra.mxu0 %v953
    %1048 = vmatprep.subr.bf16.mxu0 0
    %1049 = vmatpush1.bf16.msra.mxu0 %v952
    %1050 = vmatprep.subr.bf16.mxu0 0
    %1051 = vmatpush1.bf16.msra.mxu0 %v951
    %1052 = vmatprep.subr.bf16.mxu0 0
    %1053 = vmatpush1.bf16.msra.mxu0 %v950
    %1054 = vmatprep.subr.bf16.mxu0 0
    %1055 = vmatpush2.bf16.msra.mxu0 %v965
    %1056 = vmatprep.subr.bf16.mxu0 0
    %1057 = vmatpush2.bf16.msra.mxu0 %v964
    %1058 = vmatprep.subr.bf16.mxu0 0
    %1059 = vmatpush2.bf16.msra.mxu0 %v963
    %1060 = vmatprep.subr.bf16.mxu0 0
    %1061 = vmatpush2.bf16.msra.mxu0 %v962
    %1062 = vmatprep.subr.bf16.mxu0 0
    %1063 = vmatpush2.bf16.msra.mxu0 %v961
    %1064 = vmatprep.subr.bf16.mxu0 0
    %1065 = vmatpush2.bf16.msra.mxu0 %v960
    %1066 = vmatprep.subr.bf16.mxu0 0
    %1067 = vmatpush2.bf16.msra.mxu0 %v959
    %1068 = vmatprep.subr.bf16.mxu0 0
    %1069 = vmatpush2.bf16.msra.mxu0 %v958
    %1070 = vmatprep.mubr.bf16.mxu0 %v799
    %1071 = vmatmul.mubr.bf16.gmra.mxu0 %v798
    %v1072 = vpop.f32.mrf.mxu0
    %v1073 = vadd.f32 %v1033, %v1072
    %v1074 = vpop.f32.mrf.mxu0
    %v1075 = vpop.f32.mrf.mxu0
    %v1076 = vpop.f32.mrf.mxu0
    %1077 = vdwg.mxu0
    %v1078 = vmax.f32 %v1073, 0.0
    %vm1079 = vcmask 518144
    %1080 = vst.msk [vmem:[#allocation3] sm:$0x7] %vm1079, %v1078
    %v1081 = vpack.c.bf16 %v777, %v777
    %v1082 = vpack.c.bf16 %v783, %v783
    %v1083 = vpack.c.bf16 %v789, %v789
    %v1084 = vpack.c.bf16 %v795, %v795
    %1085 = vmatprep.subr.bf16.mxu0 0
    %1086 = vmatpush1.bf16.msra.mxu0 %v941
    %1087 = vmatprep.subr.bf16.mxu0 0
    %1088 = vmatpush1.bf16.msra.mxu0 %v940
    %1089 = vmatprep.subr.bf16.mxu0 0
    %1090 = vmatpush1.bf16.msra.mxu0 %v939
    %1091 = vmatprep.subr.bf16.mxu0 0
    %1092 = vmatpush1.bf16.msra.mxu0 %v938
    %1093 = vmatprep.subr.bf16.mxu0 0
    %1094 = vmatpush1.bf16.msra.mxu0 %v937
    %1095 = vmatprep.subr.bf16.mxu0 0
    %1096 = vmatpush1.bf16.msra.mxu0 %v936
    %1097 = vmatprep.subr.bf16.mxu0 0
    %1098 = vmatpush1.bf16.msra.mxu0 %v935
    %1099 = vmatprep.subr.bf16.mxu0 0
    %1100 = vmatpush1.bf16.msra.mxu0 %v934
    %1101 = vmatprep.subr.bf16.mxu0 0
    %1102 = vmatpush2.bf16.msra.mxu0 %v949
    %1103 = vmatprep.subr.bf16.mxu0 0
    %1104 = vmatpush2.bf16.msra.mxu0 %v948
    %1105 = vmatprep.subr.bf16.mxu0 0
    %1106 = vmatpush2.bf16.msra.mxu0 %v947
    %1107 = vmatprep.subr.bf16.mxu0 0
    %1108 = vmatpush2.bf16.msra.mxu0 %v946
    %1109 = vmatprep.subr.bf16.mxu0 0
    %1110 = vmatpush2.bf16.msra.mxu0 %v945
    %1111 = vmatprep.subr.bf16.mxu0 0
    %1112 = vmatpush2.bf16.msra.mxu0 %v944
    %1113 = vmatprep.subr.bf16.mxu0 0
    %1114 = vmatpush2.bf16.msra.mxu0 %v943
    %1115 = vmatprep.subr.bf16.mxu0 0
    %1116 = vmatpush2.bf16.msra.mxu0 %v942
    %1117 = vmatprep.mubr.bf16.mxu0 %v1082
    %1118 = vmatmul.mubr.bf16.gmra.mxu0 %v1081
    %v1119 = vpop.f32.mrf.mxu0
    %v1120 = vadd.f32 %v804, %v1119
    %v1121 = vpop.f32.mrf.mxu0
    %v1122 = vpop.f32.mrf.mxu0
    %v1123 = vpop.f32.mrf.mxu0
    %1124 = vdwg.mxu0
    %1125 = vmatprep.subr.bf16.mxu0 0
    %1126 = vmatpush1.bf16.msra.mxu0 %v957
    %1127 = vmatprep.subr.bf16.mxu0 0
    %1128 = vmatpush1.bf16.msra.mxu0 %v956
    %1129 = vmatprep.subr.bf16.mxu0 0
    %1130 = vmatpush1.bf16.msra.mxu0 %v955
    %1131 = vmatprep.subr.bf16.mxu0 0
    %1132 = vmatpush1.bf16.msra.mxu0 %v954
    %1133 = vmatprep.subr.bf16.mxu0 0
    %1134 = vmatpush1.bf16.msra.mxu0 %v953
    %1135 = vmatprep.subr.bf16.mxu0 0
    %1136 = vmatpush1.bf16.msra.mxu0 %v952
    %1137 = vmatprep.subr.bf16.mxu0 0
    %1138 = vmatpush1.bf16.msra.mxu0 %v951
    %1139 = vmatprep.subr.bf16.mxu0 0
    %1140 = vmatpush1.bf16.msra.mxu0 %v950
    %1141 = vmatprep.subr.bf16.mxu0 0
    %1142 = vmatpush2.bf16.msra.mxu0 %v965
    %1143 = vmatprep.subr.bf16.mxu0 0
    %1144 = vmatpush2.bf16.msra.mxu0 %v964
    %1145 = vmatprep.subr.bf16.mxu0 0
    %1146 = vmatpush2.bf16.msra.mxu0 %v963
    %1147 = vmatprep.subr.bf16.mxu0 0
    %1148 = vmatpush2.bf16.msra.mxu0 %v962
    %1149 = vmatprep.subr.bf16.mxu0 0
    %1150 = vmatpush2.bf16.msra.mxu0 %v961
    %1151 = vmatprep.subr.bf16.mxu0 0
    %1152 = vmatpush2.bf16.msra.mxu0 %v960
    %1153 = vmatprep.subr.bf16.mxu0 0
    %1154 = vmatpush2.bf16.msra.mxu0 %v959
    %1155 = vmatprep.subr.bf16.mxu0 0
    %1156 = vmatpush2.bf16.msra.mxu0 %v958
    %1157 = vmatprep.mubr.bf16.mxu0 %v1084
    %1158 = vmatmul.mubr.bf16.gmra.mxu0 %v1083
    %v1159 = vpop.f32.mrf.mxu0
    %v1160 = vadd.f32 %v1120, %v1159
    %v1161 = vpop.f32.mrf.mxu0
    %v1162 = vpop.f32.mrf.mxu0
    %v1163 = vpop.f32.mrf.mxu0
    %1164 = vdwg.mxu0
    %v1165 = vmax.f32 %v1160, 0.0
    %s1166 = scalar_lea.vmem [#allocation3], 12
    %1167 = vst.msk [vmem:[%s1166] sm:$0x7] %vm1079, %v1165
    %v1168 = vld [vmem:[%s643] ss:$2 sm:$0x7]
    %v1169 = vld [vmem:[%s645] ss:$2 sm:$0x7]
    %v1170 = vld [vmem:[%s647] ss:$2 sm:$0x7]
    %v1171 = vld [vmem:[%s649] ss:$2 sm:$0x7]
    %v1172 = vld [vmem:[%s651] ss:$2 sm:$0x7]
    %v1173 = vld [vmem:[%s653] ss:$2 sm:$0x7]
    %v1174 = vld [vmem:[%s655] ss:$2 sm:$0x7]
    %v1175 = vld [vmem:[%s657] ss:$2 sm:$0x7]
    %v1176 = vld [vmem:[%s659] ss:$2 sm:$0x7]
    %v1177 = vld [vmem:[%s661] ss:$2 sm:$0x7]
    %v1178 = vld [vmem:[%s663] ss:$2 sm:$0x7]
    %v1179 = vld [vmem:[%s665] ss:$2 sm:$0x7]
    %v1180 = vld [vmem:[%s667] ss:$2 sm:$0x7]
    %v1181 = vld [vmem:[%s669] ss:$2 sm:$0x7]
    %v1182 = vld [vmem:[%s671] ss:$2 sm:$0x7]
    %v1183 = vld [vmem:[%s673] ss:$2 sm:$0x7]
    %s1184 = scalar_lea.vmem [#allocation2], 32
    %v1185 = vld [vmem:[%s1184] ss:$2 sm:$0x7]
    %s1186 = scalar_lea.vmem %s1184, 64 [#allocation2]
    %v1187 = vld [vmem:[%s1186] ss:$2 sm:$0x7]
    %s1188 = scalar_lea.vmem %s1184, 1 [#allocation2]
    %v1189 = vld [vmem:[%s1188] ss:$2 sm:$0x7]
    %s1190 = scalar_lea.vmem %s1184, 65 [#allocation2]
    %v1191 = vld [vmem:[%s1190] ss:$2 sm:$0x7]
    %s1192 = scalar_lea.vmem %s1184, 2 [#allocation2]
    %v1193 = vld [vmem:[%s1192] ss:$2 sm:$0x7]
    %s1194 = scalar_lea.vmem %s1184, 66 [#allocation2]
    %v1195 = vld [vmem:[%s1194] ss:$2 sm:$0x7]
    %s1196 = scalar_lea.vmem %s1184, 3 [#allocation2]
    %v1197 = vld [vmem:[%s1196] ss:$2 sm:$0x7]
    %s1198 = scalar_lea.vmem %s1184, 67 [#allocation2]
    %v1199 = vld [vmem:[%s1198] ss:$2 sm:$0x7]
    %s1200 = scalar_lea.vmem [#allocation2], 40
    %v1201 = vld [vmem:[%s1200] ss:$2 sm:$0x7]
    %s1202 = scalar_lea.vmem %s1200, 64 [#allocation2]
    %v1203 = vld [vmem:[%s1202] ss:$2 sm:$0x7]
    %s1204 = scalar_lea.vmem %s1200, 1 [#allocation2]
    %v1205 = vld [vmem:[%s1204] ss:$2 sm:$0x7]
    %s1206 = scalar_lea.vmem %s1200, 65 [#allocation2]
    %v1207 = vld [vmem:[%s1206] ss:$2 sm:$0x7]
    %s1208 = scalar_lea.vmem %s1200, 2 [#allocation2]
    %v1209 = vld [vmem:[%s1208] ss:$2 sm:$0x7]
    %s1210 = scalar_lea.vmem %s1200, 66 [#allocation2]
    %v1211 = vld [vmem:[%s1210] ss:$2 sm:$0x7]
    %s1212 = scalar_lea.vmem %s1200, 3 [#allocation2]
    %v1213 = vld [vmem:[%s1212] ss:$2 sm:$0x7]
    %s1214 = scalar_lea.vmem %s1200, 67 [#allocation2]
    %v1215 = vld [vmem:[%s1214] ss:$2 sm:$0x7]
    %1218 = vrot.lane.b32.xlu0 %v1170, 32
    %v1219 = vpop.permute.xlu0 %1218
    %1220 = vrot.lane.b32.xlu0 %v1171, 32
    %v1221 = vpop.permute.xlu0 %1220
    %1226 = vrot.lane.b32.xlu0 %v1172, 64
    %v1227 = vpop.permute.xlu0 %1226
    %1228 = vrot.lane.b32.xlu0 %v1173, 64
    %v1229 = vpop.permute.xlu0 %1228
    %1234 = vrot.lane.b32.xlu0 %v1174, 96
    %v1235 = vpop.permute.xlu0 %1234
    %1236 = vrot.lane.b32.xlu0 %v1175, 96
    %v1237 = vpop.permute.xlu0 %1236
    %1242 = vrot.lane.b32.xlu0 %v1178, 32
    %v1243 = vpop.permute.xlu0 %1242
    %1244 = vrot.lane.b32.xlu0 %v1179, 32
    %v1245 = vpop.permute.xlu0 %1244
    %1250 = vrot.lane.b32.xlu0 %v1180, 64
    %v1251 = vpop.permute.xlu0 %1250
    %1252 = vrot.lane.b32.xlu0 %v1181, 64
    %v1253 = vpop.permute.xlu0 %1252
    %1258 = vrot.lane.b32.xlu0 %v1182, 96
    %v1259 = vpop.permute.xlu0 %1258
    %1260 = vrot.lane.b32.xlu0 %v1183, 96
    %v1261 = vpop.permute.xlu0 %1260
    %1266 = vrot.lane.b32.xlu0 %v1189, 32
    %v1267 = vpop.permute.xlu0 %1266
    %1268 = vrot.lane.b32.xlu0 %v1191, 32
    %v1269 = vpop.permute.xlu0 %1268
    %1274 = vrot.lane.b32.xlu0 %v1193, 64
    %v1275 = vpop.permute.xlu0 %1274
    %1276 = vrot.lane.b32.xlu0 %v1195, 64
    %v1277 = vpop.permute.xlu0 %1276
    %1282 = vrot.lane.b32.xlu0 %v1197, 96
    %v1283 = vpop.permute.xlu0 %1282
    %1284 = vrot.lane.b32.xlu0 %v1199, 96
    %v1285 = vpop.permute.xlu0 %1284
    %1290 = vrot.lane.b32.xlu0 %v1205, 32
    %v1291 = vpop.permute.xlu0 %1290
    %1292 = vrot.lane.b32.xlu0 %v1207, 32
    %v1293 = vpop.permute.xlu0 %1292
    %1298 = vrot.lane.b32.xlu0 %v1209, 64
    %v1299 = vpop.permute.xlu0 %1298
    %1300 = vrot.lane.b32.xlu0 %v1211, 64
    %v1301 = vpop.permute.xlu0 %1300
    %1306 = vrot.lane.b32.xlu0 %v1213, 96
    %v1307 = vpop.permute.xlu0 %1306
    %1308 = vrot.lane.b32.xlu0 %v1215, 96
    %v1309 = vpop.permute.xlu0 %1308
    %v1312 = vsel %vm530, %v1168, %v1219
    %v1313 = vsel %vm530, %v1169, %v1221
    %v1314 = vsel %vm233, %v1312, %v1227
    %v1315 = vsel %vm233, %v1313, %v1229
    %v1316 = vsel %vm775, %v1314, %v1235
    %v1317 = vsel %vm775, %v1315, %v1237
    %v1318 = vsel %vm530, %v1176, %v1243
    %v1319 = vsel %vm530, %v1177, %v1245
    %v1320 = vsel %vm233, %v1318, %v1251
    %v1321 = vsel %vm233, %v1319, %v1253
    %v1322 = vsel %vm775, %v1320, %v1259
    %v1323 = vsel %vm775, %v1321, %v1261
    %v1324 = vsel %vm530, %v1185, %v1267
    %v1325 = vsel %vm530, %v1187, %v1269
    %v1326 = vsel %vm233, %v1324, %v1275
    %v1327 = vsel %vm233, %v1325, %v1277
    %v1328 = vsel %vm775, %v1326, %v1283
    %v1329 = vsel %vm775, %v1327, %v1285
    %v1330 = vsel %vm530, %v1201, %v1291
    %v1331 = vsel %vm530, %v1203, %v1293
    %v1332 = vsel %vm233, %v1330, %v1299
    %v1333 = vsel %vm233, %v1331, %v1301
    %v1334 = vsel %vm775, %v1332, %v1307
    %v1335 = vsel %vm775, %v1333, %v1309
    %v1336 = vpack.c.bf16 %v1316, %v1316
    %v1337 = vpack.c.bf16 %v1322, %v1322
    %v1338 = vpack.c.bf16 %v1328, %v1328
    %v1339 = vpack.c.bf16 %v1334, %v1334
    %1340 = vmatprep.subr.bf16.mxu0 0
    %1341 = vmatpush1.bf16.msra.mxu0 %v941
    %1342 = vmatprep.subr.bf16.mxu0 0
    %1343 = vmatpush1.bf16.msra.mxu0 %v940
    %1344 = vmatprep.subr.bf16.mxu0 0
    %1345 = vmatpush1.bf16.msra.mxu0 %v939
    %1346 = vmatprep.subr.bf16.mxu0 0
    %1347 = vmatpush1.bf16.msra.mxu0 %v938
    %1348 = vmatprep.subr.bf16.mxu0 0
    %1349 = vmatpush1.bf16.msra.mxu0 %v937
    %1350 = vmatprep.subr.bf16.mxu0 0
    %1351 = vmatpush1.bf16.msra.mxu0 %v936
    %1352 = vmatprep.subr.bf16.mxu0 0
    %1353 = vmatpush1.bf16.msra.mxu0 %v935
    %1354 = vmatprep.subr.bf16.mxu0 0
    %1355 = vmatpush1.bf16.msra.mxu0 %v934
    %1356 = vmatprep.subr.bf16.mxu0 0
    %1357 = vmatpush2.bf16.msra.mxu0 %v949
    %1358 = vmatprep.subr.bf16.mxu0 0
    %1359 = vmatpush2.bf16.msra.mxu0 %v948
    %1360 = vmatprep.subr.bf16.mxu0 0
    %1361 = vmatpush2.bf16.msra.mxu0 %v947
    %1362 = vmatprep.subr.bf16.mxu0 0
    %1363 = vmatpush2.bf16.msra.mxu0 %v946
    %1364 = vmatprep.subr.bf16.mxu0 0
    %1365 = vmatpush2.bf16.msra.mxu0 %v945
    %1366 = vmatprep.subr.bf16.mxu0 0
    %1367 = vmatpush2.bf16.msra.mxu0 %v944
    %1368 = vmatprep.subr.bf16.mxu0 0
    %1369 = vmatpush2.bf16.msra.mxu0 %v943
    %1370 = vmatprep.subr.bf16.mxu0 0
    %1371 = vmatpush2.bf16.msra.mxu0 %v942
    %1372 = vmatprep.mubr.bf16.mxu0 %v1337
    %1373 = vmatmul.mubr.bf16.gmra.mxu0 %v1336
    %v1374 = vpop.f32.mrf.mxu0
    %v1375 = vadd.f32 %v804, %v1374
    %v1376 = vpop.f32.mrf.mxu0
    %v1377 = vpop.f32.mrf.mxu0
    %v1378 = vpop.f32.mrf.mxu0
    %1379 = vdwg.mxu0
    %1380 = vmatprep.subr.bf16.mxu0 0
    %1381 = vmatpush1.bf16.msra.mxu0 %v957
    %1382 = vmatprep.subr.bf16.mxu0 0
    %1383 = vmatpush1.bf16.msra.mxu0 %v956
    %1384 = vmatprep.subr.bf16.mxu0 0
    %1385 = vmatpush1.bf16.msra.mxu0 %v955
    %1386 = vmatprep.subr.bf16.mxu0 0
    %1387 = vmatpush1.bf16.msra.mxu0 %v954
    %1388 = vmatprep.subr.bf16.mxu0 0
    %1389 = vmatpush1.bf16.msra.mxu0 %v953
    %1390 = vmatprep.subr.bf16.mxu0 0
    %1391 = vmatpush1.bf16.msra.mxu0 %v952
    %1392 = vmatprep.subr.bf16.mxu0 0
    %1393 = vmatpush1.bf16.msra.mxu0 %v951
    %1394 = vmatprep.subr.bf16.mxu0 0
    %1395 = vmatpush1.bf16.msra.mxu0 %v950
    %1396 = vmatprep.subr.bf16.mxu0 0
    %1397 = vmatpush2.bf16.msra.mxu0 %v965
    %1398 = vmatprep.subr.bf16.mxu0 0
    %1399 = vmatpush2.bf16.msra.mxu0 %v964
    %1400 = vmatprep.subr.bf16.mxu0 0
    %1401 = vmatpush2.bf16.msra.mxu0 %v963
    %1402 = vmatprep.subr.bf16.mxu0 0
    %1403 = vmatpush2.bf16.msra.mxu0 %v962
    %1404 = vmatprep.subr.bf16.mxu0 0
    %1405 = vmatpush2.bf16.msra.mxu0 %v961
    %1406 = vmatprep.subr.bf16.mxu0 0
    %1407 = vmatpush2.bf16.msra.mxu0 %v960
    %1408 = vmatprep.subr.bf16.mxu0 0
    %1409 = vmatpush2.bf16.msra.mxu0 %v959
    %1410 = vmatprep.subr.bf16.mxu0 0
    %1411 = vmatpush2.bf16.msra.mxu0 %v958
    %1412 = vmatprep.mubr.bf16.mxu0 %v1339
    %1413 = vmatmul.mubr.bf16.gmra.mxu0 %v1338
    %v1414 = vpop.f32.mrf.mxu0
    %v1415 = vadd.f32 %v1375, %v1414
    %v1416 = vpop.f32.mrf.mxu0
    %v1417 = vpop.f32.mrf.mxu0
    %v1418 = vpop.f32.mrf.mxu0
    %1419 = vdwg.mxu0
    %v1420 = vmax.f32 %v1415, 0.0
    %s1421 = scalar_lea.vmem [#allocation3], 4
    %1422 = vst.msk [vmem:[%s1421] sm:$0x7] %vm1079, %v1420
    %v1423 = vpack.c.bf16 %v1317, %v1317
    %v1424 = vpack.c.bf16 %v1323, %v1323
    %v1425 = vpack.c.bf16 %v1329, %v1329
    %v1426 = vpack.c.bf16 %v1335, %v1335
    %1427 = vmatprep.subr.bf16.mxu0 0
    %1428 = vmatpush1.bf16.msra.mxu0 %v941
    %1429 = vmatprep.subr.bf16.mxu0 0
    %1430 = vmatpush1.bf16.msra.mxu0 %v940
    %1431 = vmatprep.subr.bf16.mxu0 0
    %1432 = vmatpush1.bf16.msra.mxu0 %v939
    %1433 = vmatprep.subr.bf16.mxu0 0
    %1434 = vmatpush1.bf16.msra.mxu0 %v938
    %1435 = vmatprep.subr.bf16.mxu0 0
    %1436 = vmatpush1.bf16.msra.mxu0 %v937
    %1437 = vmatprep.subr.bf16.mxu0 0
    %1438 = vmatpush1.bf16.msra.mxu0 %v936
    %1439 = vmatprep.subr.bf16.mxu0 0
    %1440 = vmatpush1.bf16.msra.mxu0 %v935
    %1441 = vmatprep.subr.bf16.mxu0 0
    %1442 = vmatpush1.bf16.msra.mxu0 %v934
    %1443 = vmatprep.subr.bf16.mxu0 0
    %1444 = vmatpush2.bf16.msra.mxu0 %v949
    %1445 = vmatprep.subr.bf16.mxu0 0
    %1446 = vmatpush2.bf16.msra.mxu0 %v948
    %1447 = vmatprep.subr.bf16.mxu0 0
    %1448 = vmatpush2.bf16.msra.mxu0 %v947
    %1449 = vmatprep.subr.bf16.mxu0 0
    %1450 = vmatpush2.bf16.msra.mxu0 %v946
    %1451 = vmatprep.subr.bf16.mxu0 0
    %1452 = vmatpush2.bf16.msra.mxu0 %v945
    %1453 = vmatprep.subr.bf16.mxu0 0
    %1454 = vmatpush2.bf16.msra.mxu0 %v944
    %1455 = vmatprep.subr.bf16.mxu0 0
    %1456 = vmatpush2.bf16.msra.mxu0 %v943
    %1457 = vmatprep.subr.bf16.mxu0 0
    %1458 = vmatpush2.bf16.msra.mxu0 %v942
    %1459 = vmatprep.mubr.bf16.mxu0 %v1424
    %1460 = vmatmul.mubr.bf16.gmra.mxu0 %v1423
    %v1461 = vpop.f32.mrf.mxu0
    %v1462 = vadd.f32 %v804, %v1461
    %v1463 = vpop.f32.mrf.mxu0
    %v1464 = vpop.f32.mrf.mxu0
    %v1465 = vpop.f32.mrf.mxu0
    %1466 = vdwg.mxu0
    %1467 = vmatprep.subr.bf16.mxu0 0
    %1468 = vmatpush1.bf16.msra.mxu0 %v957
    %1469 = vmatprep.subr.bf16.mxu0 0
    %1470 = vmatpush1.bf16.msra.mxu0 %v956
    %1471 = vmatprep.subr.bf16.mxu0 0
    %1472 = vmatpush1.bf16.msra.mxu0 %v955
    %1473 = vmatprep.subr.bf16.mxu0 0
    %1474 = vmatpush1.bf16.msra.mxu0 %v954
    %1475 = vmatprep.subr.bf16.mxu0 0
    %1476 = vmatpush1.bf16.msra.mxu0 %v953
    %1477 = vmatprep.subr.bf16.mxu0 0
    %1478 = vmatpush1.bf16.msra.mxu0 %v952
    %1479 = vmatprep.subr.bf16.mxu0 0
    %1480 = vmatpush1.bf16.msra.mxu0 %v951
    %1481 = vmatprep.subr.bf16.mxu0 0
    %1482 = vmatpush1.bf16.msra.mxu0 %v950
    %1483 = vmatprep.subr.bf16.mxu0 0
    %1484 = vmatpush2.bf16.msra.mxu0 %v965
    %1485 = vmatprep.subr.bf16.mxu0 0
    %1486 = vmatpush2.bf16.msra.mxu0 %v964
    %1487 = vmatprep.subr.bf16.mxu0 0
    %1488 = vmatpush2.bf16.msra.mxu0 %v963
    %1489 = vmatprep.subr.bf16.mxu0 0
    %1490 = vmatpush2.bf16.msra.mxu0 %v962
    %1491 = vmatprep.subr.bf16.mxu0 0
    %1492 = vmatpush2.bf16.msra.mxu0 %v961
    %1493 = vmatprep.subr.bf16.mxu0 0
    %1494 = vmatpush2.bf16.msra.mxu0 %v960
    %1495 = vmatprep.subr.bf16.mxu0 0
    %1496 = vmatpush2.bf16.msra.mxu0 %v959
    %1497 = vmatprep.subr.bf16.mxu0 0
    %1498 = vmatpush2.bf16.msra.mxu0 %v958
    %1499 = vmatprep.mubr.bf16.mxu0 %v1426
    %1500 = vmatmul.mubr.bf16.gmra.mxu0 %v1425
    %v1501 = vpop.f32.mrf.mxu0
    %v1502 = vadd.f32 %v1462, %v1501
    %v1503 = vpop.f32.mrf.mxu0
    %v1504 = vpop.f32.mrf.mxu0
    %v1505 = vpop.f32.mrf.mxu0
    %1506 = vdwg.mxu0
    %v1507 = vmax.f32 %v1502, 0.0
    %s1508 = scalar_lea.vmem [#allocation3], 16
    %1509 = vst.msk [vmem:[%s1508] sm:$0x7] %vm1079, %v1507
    %v1510 = vld [vmem:[%s1184] ss:$2 sm:$0x7]
    %v1511 = vld [vmem:[%s1186] ss:$2 sm:$0x7]
    %v1512 = vld [vmem:[%s1188] ss:$2 sm:$0x7]
    %v1513 = vld [vmem:[%s1190] ss:$2 sm:$0x7]
    %v1514 = vld [vmem:[%s1192] ss:$2 sm:$0x7]
    %v1515 = vld [vmem:[%s1194] ss:$2 sm:$0x7]
    %v1516 = vld [vmem:[%s1196] ss:$2 sm:$0x7]
    %v1517 = vld [vmem:[%s1198] ss:$2 sm:$0x7]
    %v1518 = vld [vmem:[%s1200] ss:$2 sm:$0x7]
    %v1519 = vld [vmem:[%s1202] ss:$2 sm:$0x7]
    %v1520 = vld [vmem:[%s1204] ss:$2 sm:$0x7]
    %v1521 = vld [vmem:[%s1206] ss:$2 sm:$0x7]
    %v1522 = vld [vmem:[%s1208] ss:$2 sm:$0x7]
    %v1523 = vld [vmem:[%s1210] ss:$2 sm:$0x7]
    %v1524 = vld [vmem:[%s1212] ss:$2 sm:$0x7]
    %v1525 = vld [vmem:[%s1214] ss:$2 sm:$0x7]
    %s1526 = scalar_lea.vmem [#allocation2], 48
    %v1527 = vld [vmem:[%s1526] ss:$2 sm:$0x7]
    %s1528 = scalar_lea.vmem %s1526, 64 [#allocation2]
    %v1529 = vld [vmem:[%s1528] ss:$2 sm:$0x7]
    %s1530 = scalar_lea.vmem %s1526, 1 [#allocation2]
    %v1531 = vld [vmem:[%s1530] ss:$2 sm:$0x7]
    %s1532 = scalar_lea.vmem %s1526, 65 [#allocation2]
    %v1533 = vld [vmem:[%s1532] ss:$2 sm:$0x7]
    %s1534 = scalar_lea.vmem %s1526, 2 [#allocation2]
    %v1535 = vld [vmem:[%s1534] ss:$2 sm:$0x7]
    %s1536 = scalar_lea.vmem %s1526, 66 [#allocation2]
    %v1537 = vld [vmem:[%s1536] ss:$2 sm:$0x7]
    %s1538 = scalar_lea.vmem %s1526, 3 [#allocation2]
    %v1539 = vld [vmem:[%s1538] ss:$2 sm:$0x7]
    %s1540 = scalar_lea.vmem %s1526, 67 [#allocation2]
    %v1541 = vld [vmem:[%s1540] ss:$2 sm:$0x7]
    %s1542 = scalar_lea.vmem [#allocation2], 56
    %v1543 = vld [vmem:[%s1542] ss:$2 sm:$0x7]
    %s1544 = scalar_lea.vmem %s1542, 64 [#allocation2]
    %v1545 = vld [vmem:[%s1544] ss:$2 sm:$0x7]
    %s1546 = scalar_lea.vmem %s1542, 1 [#allocation2]
    %v1547 = vld [vmem:[%s1546] ss:$2 sm:$0x7]
    %s1548 = scalar_lea.vmem %s1542, 65 [#allocation2]
    %v1549 = vld [vmem:[%s1548] ss:$2 sm:$0x7]
    %s1550 = scalar_lea.vmem %s1542, 2 [#allocation2]
    %v1551 = vld [vmem:[%s1550] ss:$2 sm:$0x7]
    %s1552 = scalar_lea.vmem %s1542, 66 [#allocation2]
    %v1553 = vld [vmem:[%s1552] ss:$2 sm:$0x7]
    %s1554 = scalar_lea.vmem %s1542, 3 [#allocation2]
    %v1555 = vld [vmem:[%s1554] ss:$2 sm:$0x7]
    %s1556 = scalar_lea.vmem %s1542, 67 [#allocation2]
    %v1557 = vld [vmem:[%s1556] ss:$2 sm:$0x7]
    %1560 = vrot.lane.b32.xlu0 %v1512, 32
    %v1561 = vpop.permute.xlu0 %1560
    %1562 = vrot.lane.b32.xlu0 %v1513, 32
    %v1563 = vpop.permute.xlu0 %1562
    %1568 = vrot.lane.b32.xlu0 %v1514, 64
    %v1569 = vpop.permute.xlu0 %1568
    %1570 = vrot.lane.b32.xlu0 %v1515, 64
    %v1571 = vpop.permute.xlu0 %1570
    %1576 = vrot.lane.b32.xlu0 %v1516, 96
    %v1577 = vpop.permute.xlu0 %1576
    %1578 = vrot.lane.b32.xlu0 %v1517, 96
    %v1579 = vpop.permute.xlu0 %1578
    %1584 = vrot.lane.b32.xlu0 %v1520, 32
    %v1585 = vpop.permute.xlu0 %1584
    %1586 = vrot.lane.b32.xlu0 %v1521, 32
    %v1587 = vpop.permute.xlu0 %1586
    %1592 = vrot.lane.b32.xlu0 %v1522, 64
    %v1593 = vpop.permute.xlu0 %1592
    %1594 = vrot.lane.b32.xlu0 %v1523, 64
    %v1595 = vpop.permute.xlu0 %1594
    %1600 = vrot.lane.b32.xlu0 %v1524, 96
    %v1601 = vpop.permute.xlu0 %1600
    %1602 = vrot.lane.b32.xlu0 %v1525, 96
    %v1603 = vpop.permute.xlu0 %1602
    %1608 = vrot.lane.b32.xlu0 %v1531, 32
    %v1609 = vpop.permute.xlu0 %1608
    %1610 = vrot.lane.b32.xlu0 %v1533, 32
    %v1611 = vpop.permute.xlu0 %1610
    %1616 = vrot.lane.b32.xlu0 %v1535, 64
    %v1617 = vpop.permute.xlu0 %1616
    %1618 = vrot.lane.b32.xlu0 %v1537, 64
    %v1619 = vpop.permute.xlu0 %1618
    %1624 = vrot.lane.b32.xlu0 %v1539, 96
    %v1625 = vpop.permute.xlu0 %1624
    %1626 = vrot.lane.b32.xlu0 %v1541, 96
    %v1627 = vpop.permute.xlu0 %1626
    %1632 = vrot.lane.b32.xlu0 %v1547, 32
    %v1633 = vpop.permute.xlu0 %1632
    %1634 = vrot.lane.b32.xlu0 %v1549, 32
    %v1635 = vpop.permute.xlu0 %1634
    %1640 = vrot.lane.b32.xlu0 %v1551, 64
    %v1641 = vpop.permute.xlu0 %1640
    %1642 = vrot.lane.b32.xlu0 %v1553, 64
    %v1643 = vpop.permute.xlu0 %1642
    %1648 = vrot.lane.b32.xlu0 %v1555, 96
    %v1649 = vpop.permute.xlu0 %1648
    %1650 = vrot.lane.b32.xlu0 %v1557, 96
    %v1651 = vpop.permute.xlu0 %1650
    %v1654 = vsel %vm530, %v1510, %v1561
    %v1655 = vsel %vm530, %v1511, %v1563
    %v1656 = vsel %vm233, %v1654, %v1569
    %v1657 = vsel %vm233, %v1655, %v1571
    %v1658 = vsel %vm775, %v1656, %v1577
    %v1659 = vsel %vm775, %v1657, %v1579
    %v1660 = vsel %vm530, %v1518, %v1585
    %v1661 = vsel %vm530, %v1519, %v1587
    %v1662 = vsel %vm233, %v1660, %v1593
    %v1663 = vsel %vm233, %v1661, %v1595
    %v1664 = vsel %vm775, %v1662, %v1601
    %v1665 = vsel %vm775, %v1663, %v1603
    %v1666 = vsel %vm530, %v1527, %v1609
    %v1667 = vsel %vm530, %v1529, %v1611
    %v1668 = vsel %vm233, %v1666, %v1617
    %v1669 = vsel %vm233, %v1667, %v1619
    %v1670 = vsel %vm775, %v1668, %v1625
    %v1671 = vsel %vm775, %v1669, %v1627
    %v1672 = vsel %vm530, %v1543, %v1633
    %v1673 = vsel %vm530, %v1545, %v1635
    %v1674 = vsel %vm233, %v1672, %v1641
    %v1675 = vsel %vm233, %v1673, %v1643
    %v1676 = vsel %vm775, %v1674, %v1649
    %v1677 = vsel %vm775, %v1675, %v1651
    %v1678 = vpack.c.bf16 %v1658, %v1658
    %v1679 = vpack.c.bf16 %v1664, %v1664
    %v1680 = vpack.c.bf16 %v1670, %v1670
    %v1681 = vpack.c.bf16 %v1676, %v1676
    %1682 = vmatprep.subr.bf16.mxu0 0
    %1683 = vmatpush1.bf16.msra.mxu0 %v941
    %1684 = vmatprep.subr.bf16.mxu0 0
    %1685 = vmatpush1.bf16.msra.mxu0 %v940
    %1686 = vmatprep.subr.bf16.mxu0 0
    %1687 = vmatpush1.bf16.msra.mxu0 %v939
    %1688 = vmatprep.subr.bf16.mxu0 0
    %1689 = vmatpush1.bf16.msra.mxu0 %v938
    %1690 = vmatprep.subr.bf16.mxu0 0
    %1691 = vmatpush1.bf16.msra.mxu0 %v937
    %1692 = vmatprep.subr.bf16.mxu0 0
    %1693 = vmatpush1.bf16.msra.mxu0 %v936
    %1694 = vmatprep.subr.bf16.mxu0 0
    %1695 = vmatpush1.bf16.msra.mxu0 %v935
    %1696 = vmatprep.subr.bf16.mxu0 0
    %1697 = vmatpush1.bf16.msra.mxu0 %v934
    %1698 = vmatprep.subr.bf16.mxu0 0
    %1699 = vmatpush2.bf16.msra.mxu0 %v949
    %1700 = vmatprep.subr.bf16.mxu0 0
    %1701 = vmatpush2.bf16.msra.mxu0 %v948
    %1702 = vmatprep.subr.bf16.mxu0 0
    %1703 = vmatpush2.bf16.msra.mxu0 %v947
    %1704 = vmatprep.subr.bf16.mxu0 0
    %1705 = vmatpush2.bf16.msra.mxu0 %v946
    %1706 = vmatprep.subr.bf16.mxu0 0
    %1707 = vmatpush2.bf16.msra.mxu0 %v945
    %1708 = vmatprep.subr.bf16.mxu0 0
    %1709 = vmatpush2.bf16.msra.mxu0 %v944
    %1710 = vmatprep.subr.bf16.mxu0 0
    %1711 = vmatpush2.bf16.msra.mxu0 %v943
    %1712 = vmatprep.subr.bf16.mxu0 0
    %1713 = vmatpush2.bf16.msra.mxu0 %v942
    %1714 = vmatprep.mubr.bf16.mxu0 %v1679
    %1715 = vmatmul.mubr.bf16.gmra.mxu0 %v1678
    %v1716 = vpop.f32.mrf.mxu0
    %v1717 = vadd.f32 %v804, %v1716
    %v1718 = vpop.f32.mrf.mxu0
    %v1719 = vpop.f32.mrf.mxu0
    %v1720 = vpop.f32.mrf.mxu0
    %1721 = vdwg.mxu0
    %1722 = vmatprep.subr.bf16.mxu0 0
    %1723 = vmatpush1.bf16.msra.mxu0 %v957
    %1724 = vmatprep.subr.bf16.mxu0 0
    %1725 = vmatpush1.bf16.msra.mxu0 %v956
    %1726 = vmatprep.subr.bf16.mxu0 0
    %1727 = vmatpush1.bf16.msra.mxu0 %v955
    %1728 = vmatprep.subr.bf16.mxu0 0
    %1729 = vmatpush1.bf16.msra.mxu0 %v954
    %1730 = vmatprep.subr.bf16.mxu0 0
    %1731 = vmatpush1.bf16.msra.mxu0 %v953
    %1732 = vmatprep.subr.bf16.mxu0 0
    %1733 = vmatpush1.bf16.msra.mxu0 %v952
    %1734 = vmatprep.subr.bf16.mxu0 0
    %1735 = vmatpush1.bf16.msra.mxu0 %v951
    %1736 = vmatprep.subr.bf16.mxu0 0
    %1737 = vmatpush1.bf16.msra.mxu0 %v950
    %1738 = vmatprep.subr.bf16.mxu0 0
    %1739 = vmatpush2.bf16.msra.mxu0 %v965
    %1740 = vmatprep.subr.bf16.mxu0 0
    %1741 = vmatpush2.bf16.msra.mxu0 %v964
    %1742 = vmatprep.subr.bf16.mxu0 0
    %1743 = vmatpush2.bf16.msra.mxu0 %v963
    %1744 = vmatprep.subr.bf16.mxu0 0
    %1745 = vmatpush2.bf16.msra.mxu0 %v962
    %1746 = vmatprep.subr.bf16.mxu0 0
    %1747 = vmatpush2.bf16.msra.mxu0 %v961
    %1748 = vmatprep.subr.bf16.mxu0 0
    %1749 = vmatpush2.bf16.msra.mxu0 %v960
    %1750 = vmatprep.subr.bf16.mxu0 0
    %1751 = vmatpush2.bf16.msra.mxu0 %v959
    %1752 = vmatprep.subr.bf16.mxu0 0
    %1753 = vmatpush2.bf16.msra.mxu0 %v958
    %1754 = vmatprep.mubr.bf16.mxu0 %v1681
    %1755 = vmatmul.mubr.bf16.gmra.mxu0 %v1680
    %v1756 = vpop.f32.mrf.mxu0
    %v1757 = vadd.f32 %v1717, %v1756
    %v1758 = vpop.f32.mrf.mxu0
    %v1759 = vpop.f32.mrf.mxu0
    %v1760 = vpop.f32.mrf.mxu0
    %1761 = vdwg.mxu0
    %v1762 = vmax.f32 %v1757, 0.0
    %s1763 = scalar_lea.vmem [#allocation3], 8
    %1764 = vst.msk [vmem:[%s1763] sm:$0x7] %vm1079, %v1762
    %v1765 = vpack.c.bf16 %v1659, %v1659
    %v1766 = vpack.c.bf16 %v1665, %v1665
    %v1767 = vpack.c.bf16 %v1671, %v1671
    %v1768 = vpack.c.bf16 %v1677, %v1677
    %1769 = vmatprep.subr.bf16.mxu0 0
    %1770 = vmatpush1.bf16.msra.mxu0 %v941
    %1771 = vmatprep.subr.bf16.mxu0 0
    %1772 = vmatpush1.bf16.msra.mxu0 %v940
    %1773 = vmatprep.subr.bf16.mxu0 0
    %1774 = vmatpush1.bf16.msra.mxu0 %v939
    %1775 = vmatprep.subr.bf16.mxu0 0
    %1776 = vmatpush1.bf16.msra.mxu0 %v938
    %1777 = vmatprep.subr.bf16.mxu0 0
    %1778 = vmatpush1.bf16.msra.mxu0 %v937
    %1779 = vmatprep.subr.bf16.mxu0 0
    %1780 = vmatpush1.bf16.msra.mxu0 %v936
    %1781 = vmatprep.subr.bf16.mxu0 0
    %1782 = vmatpush1.bf16.msra.mxu0 %v935
    %1783 = vmatprep.subr.bf16.mxu0 0
    %1784 = vmatpush1.bf16.msra.mxu0 %v934
    %1785 = vmatprep.subr.bf16.mxu0 0
    %1786 = vmatpush2.bf16.msra.mxu0 %v949
    %1787 = vmatprep.subr.bf16.mxu0 0
    %1788 = vmatpush2.bf16.msra.mxu0 %v948
    %1789 = vmatprep.subr.bf16.mxu0 0
    %1790 = vmatpush2.bf16.msra.mxu0 %v947
    %1791 = vmatprep.subr.bf16.mxu0 0
    %1792 = vmatpush2.bf16.msra.mxu0 %v946
    %1793 = vmatprep.subr.bf16.mxu0 0
    %1794 = vmatpush2.bf16.msra.mxu0 %v945
    %1795 = vmatprep.subr.bf16.mxu0 0
    %1796 = vmatpush2.bf16.msra.mxu0 %v944
    %1797 = vmatprep.subr.bf16.mxu0 0
    %1798 = vmatpush2.bf16.msra.mxu0 %v943
    %1799 = vmatprep.subr.bf16.mxu0 0
    %1800 = vmatpush2.bf16.msra.mxu0 %v942
    %1801 = vmatprep.mubr.bf16.mxu0 %v1766
    %1802 = vmatmul.mubr.bf16.gmra.mxu0 %v1765
    %v1803 = vpop.f32.mrf.mxu0
    %v1804 = vadd.f32 %v804, %v1803
    %v1805 = vpop.f32.mrf.mxu0
    %v1806 = vpop.f32.mrf.mxu0
    %v1807 = vpop.f32.mrf.mxu0
    %1808 = vdwg.mxu0
    %1809 = vmatprep.subr.bf16.mxu0 0
    %1810 = vmatpush1.bf16.msra.mxu0 %v957
    %1811 = vmatprep.subr.bf16.mxu0 0
    %1812 = vmatpush1.bf16.msra.mxu0 %v956
    %1813 = vmatprep.subr.bf16.mxu0 0
    %1814 = vmatpush1.bf16.msra.mxu0 %v955
    %1815 = vmatprep.subr.bf16.mxu0 0
    %1816 = vmatpush1.bf16.msra.mxu0 %v954
    %1817 = vmatprep.subr.bf16.mxu0 0
    %1818 = vmatpush1.bf16.msra.mxu0 %v953
    %1819 = vmatprep.subr.bf16.mxu0 0
    %1820 = vmatpush1.bf16.msra.mxu0 %v952
    %1821 = vmatprep.subr.bf16.mxu0 0
    %1822 = vmatpush1.bf16.msra.mxu0 %v951
    %1823 = vmatprep.subr.bf16.mxu0 0
    %1824 = vmatpush1.bf16.msra.mxu0 %v950
    %1825 = vmatprep.subr.bf16.mxu0 0
    %1826 = vmatpush2.bf16.msra.mxu0 %v965
    %1827 = vmatprep.subr.bf16.mxu0 0
    %1828 = vmatpush2.bf16.msra.mxu0 %v964
    %1829 = vmatprep.subr.bf16.mxu0 0
    %1830 = vmatpush2.bf16.msra.mxu0 %v963
    %1831 = vmatprep.subr.bf16.mxu0 0
    %1832 = vmatpush2.bf16.msra.mxu0 %v962
    %1833 = vmatprep.subr.bf16.mxu0 0
    %1834 = vmatpush2.bf16.msra.mxu0 %v961
    %1835 = vmatprep.subr.bf16.mxu0 0
    %1836 = vmatpush2.bf16.msra.mxu0 %v960
    %1837 = vmatprep.subr.bf16.mxu0 0
    %1838 = vmatpush2.bf16.msra.mxu0 %v959
    %1839 = vmatprep.subr.bf16.mxu0 0
    %1840 = vmatpush2.bf16.msra.mxu0 %v958
    %1841 = vmatprep.mubr.bf16.mxu0 %v1768
    %1842 = vmatmul.mubr.bf16.gmra.mxu0 %v1767
    %v1843 = vpop.f32.mrf.mxu0
    %v1844 = vadd.f32 %v1804, %v1843
    %v1845 = vpop.f32.mrf.mxu0
    %v1846 = vpop.f32.mrf.mxu0
    %v1847 = vpop.f32.mrf.mxu0
    %1848 = vdwg.mxu0
    %v1849 = vmax.f32 %v1844, 0.0
    %s1850 = scalar_lea.vmem [#allocation3], 20
    %1851 = vst.msk [vmem:[%s1850] sm:$0x7] %vm1079, %v1849
    %v1852 = vld [vmem:[#allocation3] sm:$0x1]
    %v1853 = vld [vmem:[#allocation3 + $0xc] sm:$0x1]
    %v1854 = vld [vmem:[#allocation3 + $0x1] sm:$0x1]
    %v1855 = vld [vmem:[#allocation3 + $0xd] sm:$0x1]
    %v1856 = vld [vmem:[#allocation3 + $0x2] sm:$0x1]
    %v1857 = vld [vmem:[#allocation3 + $0xe] sm:$0x1]
    %v1858 = vld [vmem:[%s1421] sm:$0x1]
    %v1859 = vld [vmem:[%s1421 + $0xc] sm:$0x1]
    %v1860 = vld [vmem:[%s1421 + $0x1] sm:$0x1]
    %v1861 = vld [vmem:[%s1421 + $0xd] sm:$0x1]
    %v1862 = vld [vmem:[%s1421 + $0x2] sm:$0x1]
    %v1863 = vld [vmem:[%s1421 + $0xe] sm:$0x1]
    %v1864 = vld [vmem:[%s1763] sm:$0x1]
    %v1865 = vld [vmem:[%s1763 + $0xc] sm:$0x1]
    %v1866 = vld [vmem:[%s1763 + $0x1] sm:$0x1]
    %v1867 = vld [vmem:[%s1763 + $0xd] sm:$0x1]
    %v1868 = vld [vmem:[%s1763 + $0x2] sm:$0x1]
    %v1869 = vld [vmem:[%s1763 + $0xe] sm:$0x1]
    %1872 = vrot.lane.b32.xlu0 %v1854, 64
    %v1873 = vpop.permute.xlu0 %1872
    %1874 = vrot.lane.b32.xlu0 %v1855, 64
    %v1875 = vpop.permute.xlu0 %1874
    %1880 = vrot.lane.b32.xlu0 %v1858, 64
    %v1881 = vpop.permute.xlu0 %1880
    %1882 = vrot.lane.b32.xlu0 %v1859, 64
    %v1883 = vpop.permute.xlu0 %1882
    %1888 = vrot.lane.b32.xlu0 %v1862, 64
    %v1889 = vpop.permute.xlu0 %1888
    %1890 = vrot.lane.b32.xlu0 %v1863, 64
    %v1891 = vpop.permute.xlu0 %1890
    %1896 = vrot.lane.b32.xlu0 %v1866, 64
    %v1897 = vpop.permute.xlu0 %1896
    %1898 = vrot.lane.b32.xlu0 %v1867, 64
    %v1899 = vpop.permute.xlu0 %1898
    %v1902 = vsel %vm233, %v1852, %v1873
    %v1903 = vsel %vm233, %v1853, %v1875
    %v1904 = vsel %vm233, %v1856, %v1881
    %v1905 = vsel %vm233, %v1857, %v1883
    %v1906 = vsel %vm233, %v1860, %v1889
    %v1907 = vsel %vm233, %v1861, %v1891
    %v1908 = vsel %vm233, %v1864, %v1897
    %v1909 = vsel %vm233, %v1865, %v1899
    %v1910 = vld [vmem:[%s5] sm:$0xf]
    %v1911 = vld [vmem:[%s5 + $0x4] sm:$0xf]
    %v1912 = vld [vmem:[%s5 + $0x8] sm:$0xf]
    %v1913 = vld [vmem:[%s5 + $0xc] sm:$0xf]
    %v1914 = vld [vmem:[%s5 + $0x10] sm:$0xf]
    %v1915 = vld [vmem:[%s5 + $0x14] sm:$0xf]
    %v1916 = vld [vmem:[%s5 + $0x18] sm:$0xf]
    %v1917 = vld [vmem:[%s5 + $0x1c] sm:$0xf]
    %v1918 = vld [vmem:[%s5 + $0x20] sm:$0xf]
    %v1919 = vld [vmem:[%s5 + $0x24] sm:$0xf]
    %v1920 = vld [vmem:[%s5 + $0x28] sm:$0xf]
    %v1921 = vld [vmem:[%s5 + $0x2c] sm:$0xf]
    %v1922 = vld [vmem:[%s5 + $0x30] sm:$0xf]
    %v1923 = vld [vmem:[%s5 + $0x34] sm:$0xf]
    %v1924 = vld [vmem:[%s5 + $0x38] sm:$0xf]
    %v1925 = vld [vmem:[%s5 + $0x3c] sm:$0xf]
    %v1926 = vld [vmem:[%s5 + $0x40] sm:$0xf]
    %v1927 = vld [vmem:[%s5 + $0x44] sm:$0xf]
    %v1928 = vld [vmem:[%s5 + $0x48] sm:$0xf]
    %v1929 = vld [vmem:[%s5 + $0x4c] sm:$0xf]
    %v1930 = vld [vmem:[%s5 + $0x50] sm:$0xf]
    %v1931 = vld [vmem:[%s5 + $0x54] sm:$0xf]
    %v1932 = vld [vmem:[%s5 + $0x58] sm:$0xf]
    %v1933 = vld [vmem:[%s5 + $0x5c] sm:$0xf]
    %v1934 = vld [vmem:[%s5 + $0x60] sm:$0xf]
    %v1935 = vld [vmem:[%s5 + $0x64] sm:$0xf]
    %v1936 = vld [vmem:[%s5 + $0x68] sm:$0xf]
    %v1937 = vld [vmem:[%s5 + $0x6c] sm:$0xf]
    %v1938 = vld [vmem:[%s5 + $0x70] sm:$0xf]
    %v1939 = vld [vmem:[%s5 + $0x74] sm:$0xf]
    %v1940 = vld [vmem:[%s5 + $0x78] sm:$0xf]
    %v1941 = vld [vmem:[%s5 + $0x7c] sm:$0xf]
    %v1942 = vld [vmem:[%s5 + $0x80] sm:$0xf]
    %v1943 = vld [vmem:[%s5 + $0x84] sm:$0xf]
    %v1944 = vld [vmem:[%s5 + $0x88] sm:$0xf]
    %v1945 = vld [vmem:[%s5 + $0x8c] sm:$0xf]
    %v1946 = vld [vmem:[%s5 + $0x90] sm:$0xf]
    %v1947 = vld [vmem:[%s5 + $0x94] sm:$0xf]
    %v1948 = vld [vmem:[%s5 + $0x98] sm:$0xf]
    %v1949 = vld [vmem:[%s5 + $0x9c] sm:$0xf]
    %v1950 = vld [vmem:[%s5 + $0xa0] sm:$0xf]
    %v1951 = vld [vmem:[%s5 + $0xa4] sm:$0xf]
    %v1952 = vld [vmem:[%s5 + $0xa8] sm:$0xf]
    %v1953 = vld [vmem:[%s5 + $0xac] sm:$0xf]
    %v1954 = vld [vmem:[%s5 + $0xb0] sm:$0xf]
    %v1955 = vld [vmem:[%s5 + $0xb4] sm:$0xf]
    %v1956 = vld [vmem:[%s5 + $0xb8] sm:$0xf]
    %v1957 = vld [vmem:[%s5 + $0xbc] sm:$0xf]
    %v1958 = vld [vmem:[%s5 + $0xc0] sm:$0xf]
    %v1959 = vld [vmem:[%s5 + $0xc4] sm:$0xf]
    %v1960 = vld [vmem:[%s5 + $0xc8] sm:$0xf]
    %v1961 = vld [vmem:[%s5 + $0xcc] sm:$0xf]
    %v1962 = vld [vmem:[%s5 + $0xd0] sm:$0xf]
    %v1963 = vld [vmem:[%s5 + $0xd4] sm:$0xf]
    %v1964 = vld [vmem:[%s5 + $0xd8] sm:$0xf]
    %v1965 = vld [vmem:[%s5 + $0xdc] sm:$0xf]
    %v1966 = vld [vmem:[%s5 + $0xe0] sm:$0xf]
    %v1967 = vld [vmem:[%s5 + $0xe4] sm:$0xf]
    %v1968 = vld [vmem:[%s5 + $0xe8] sm:$0xf]
    %v1969 = vld [vmem:[%s5 + $0xec] sm:$0xf]
    %v1970 = vld [vmem:[%s5 + $0xf0] sm:$0xf]
    %v1971 = vld [vmem:[%s5 + $0xf4] sm:$0xf]
    %v1972 = vld [vmem:[%s5 + $0xf8] sm:$0xf]
    %v1973 = vld [vmem:[%s5 + $0xfc] sm:$0xf]
    %v1974 = vld [vmem:[%s5 + $0x100] sm:$0xf]
    %v1975 = vld [vmem:[%s5 + $0x104] sm:$0xf]
    %v1976 = vld [vmem:[%s5 + $0x108] sm:$0xf]
    %v1977 = vld [vmem:[%s5 + $0x10c] sm:$0xf]
    %v1978 = vld [vmem:[%s5 + $0x110] sm:$0xf]
    %v1979 = vld [vmem:[%s5 + $0x114] sm:$0xf]
    %v1980 = vld [vmem:[%s5 + $0x118] sm:$0xf]
    %v1981 = vld [vmem:[%s5 + $0x11c] sm:$0xf]
    %v1982 = vld [vmem:[%s6] sm:$0x1]
    %v1983 = vld [vmem:[%s8] sm:$0xf]
    %v1984 = vld [vmem:[%s9] sm:$0xf]
    %v1985 = vld [vmem:[%s9 + $0x4] sm:$0xf]
    %v1986 = vld [vmem:[%s9 + $0x8] sm:$0xf]
    %v1987 = vld [vmem:[%s9 + $0xc] sm:$0xf]
    %v1988 = vld [vmem:[%s9 + $0x10] sm:$0xf]
    %v1989 = vld [vmem:[%s9 + $0x14] sm:$0xf]
    %v1990 = vld [vmem:[%s9 + $0x18] sm:$0xf]
    %v1991 = vld [vmem:[%s9 + $0x1c] sm:$0xf]
    %v1992 = vld [vmem:[%s9 + $0x20] sm:$0xf]
    %v1993 = vld [vmem:[%s9 + $0x24] sm:$0xf]
    %v1994 = vld [vmem:[%s9 + $0x28] sm:$0xf]
    %v1995 = vld [vmem:[%s9 + $0x2c] sm:$0xf]
    %v1996 = vld [vmem:[%s9 + $0x30] sm:$0xf]
    %v1997 = vld [vmem:[%s9 + $0x34] sm:$0xf]
    %v1998 = vld [vmem:[%s9 + $0x38] sm:$0xf]
    %v1999 = vld [vmem:[%s9 + $0x3c] sm:$0xf]
    %v2000 = vld [vmem:[%s9 + $0x40] sm:$0xf]
    %v2001 = vld [vmem:[%s9 + $0x44] sm:$0xf]
    %v2002 = vld [vmem:[%s9 + $0x48] sm:$0xf]
    %v2003 = vld [vmem:[%s9 + $0x4c] sm:$0xf]
    %v2004 = vld [vmem:[%s9 + $0x50] sm:$0xf]
    %v2005 = vld [vmem:[%s9 + $0x54] sm:$0xf]
    %v2006 = vld [vmem:[%s9 + $0x58] sm:$0xf]
    %v2007 = vld [vmem:[%s9 + $0x5c] sm:$0xf]
    %v2008 = vld [vmem:[%s9 + $0x60] sm:$0xf]
    %v2009 = vld [vmem:[%s9 + $0x64] sm:$0xf]
    %v2010 = vld [vmem:[%s9 + $0x68] sm:$0xf]
    %v2011 = vld [vmem:[%s9 + $0x6c] sm:$0xf]
    %v2012 = vld [vmem:[%s9 + $0x70] sm:$0xf]
    %v2013 = vld [vmem:[%s9 + $0x74] sm:$0xf]
    %v2014 = vld [vmem:[%s9 + $0x78] sm:$0xf]
    %v2015 = vld [vmem:[%s9 + $0x7c] sm:$0xf]
    %v2016 = vld [vmem:[%s9 + $0x80] sm:$0xf]
    %v2017 = vld [vmem:[%s9 + $0x84] sm:$0xf]
    %v2018 = vld [vmem:[%s9 + $0x88] sm:$0xf]
    %v2019 = vld [vmem:[%s9 + $0x8c] sm:$0xf]
    %v2020 = vld [vmem:[%s9 + $0x90] sm:$0xf]
    %v2021 = vld [vmem:[%s9 + $0x94] sm:$0xf]
    %v2022 = vld [vmem:[%s9 + $0x98] sm:$0xf]
    %v2023 = vld [vmem:[%s9 + $0x9c] sm:$0xf]
    %v2024 = vld [vmem:[%s9 + $0xa0] sm:$0xf]
    %v2025 = vld [vmem:[%s9 + $0xa4] sm:$0xf]
    %v2026 = vld [vmem:[%s9 + $0xa8] sm:$0xf]
    %v2027 = vld [vmem:[%s9 + $0xac] sm:$0xf]
    %v2028 = vld [vmem:[%s9 + $0xb0] sm:$0xf]
    %v2029 = vld [vmem:[%s9 + $0xb4] sm:$0xf]
    %v2030 = vld [vmem:[%s9 + $0xb8] sm:$0xf]
    %v2031 = vld [vmem:[%s9 + $0xbc] sm:$0xf]
    %v2032 = vld [vmem:[%s9 + $0xc0] sm:$0xf]
    %v2033 = vld [vmem:[%s9 + $0xc4] sm:$0xf]
    %v2034 = vld [vmem:[%s9 + $0xc8] sm:$0xf]
    %v2035 = vld [vmem:[%s9 + $0xcc] sm:$0xf]
    %v2036 = vld [vmem:[%s9 + $0xd0] sm:$0xf]
    %v2037 = vld [vmem:[%s9 + $0xd4] sm:$0xf]
    %v2038 = vld [vmem:[%s9 + $0xd8] sm:$0xf]
    %v2039 = vld [vmem:[%s9 + $0xdc] sm:$0xf]
    %v2040 = vld [vmem:[%s9 + $0xe0] sm:$0xf]
    %v2041 = vld [vmem:[%s9 + $0xe4] sm:$0xf]
    %v2042 = vld [vmem:[%s9 + $0xe8] sm:$0xf]
    %v2043 = vld [vmem:[%s9 + $0xec] sm:$0xf]
    %v2044 = vld [vmem:[%s9 + $0xf0] sm:$0xf]
    %v2045 = vld [vmem:[%s9 + $0xf4] sm:$0xf]
    %v2046 = vld [vmem:[%s9 + $0xf8] sm:$0xf]
    %v2047 = vld [vmem:[%s9 + $0xfc] sm:$0xf]
    %v2048 = vld [vmem:[%s10] sm:$0x1]
    %v2049 = vpack.c.bf16 %v1902, %v1902
    %v2050 = vpack.c.bf16 %v1904, %v1904
    %v2051 = vpack.c.bf16 %v1906, %v1906
    %v2052 = vpack.c.bf16 %v1908, %v1908
    %v2053 = vpack.c.bf16 %v1868, %v1868
    %v2126 = vunpack.c.l.b16 %v1910
    %v2127 = vunpack.c.l.b16 %v1911
    %v2128 = vunpack.c.l.b16 %v1912
    %v2129 = vunpack.c.l.b16 %v1913
    %v2130 = vunpack.c.l.b16 %v1914
    %v2131 = vunpack.c.l.b16 %v1915
    %v2132 = vunpack.c.l.b16 %v1916
    %v2133 = vunpack.c.l.b16 %v1917
    %v2134 = vunpack.c.l.b16 %v1918
    %v2135 = vunpack.c.l.b16 %v1919
    %v2136 = vunpack.c.l.b16 %v1920
    %v2137 = vunpack.c.l.b16 %v1921
    %v2138 = vunpack.c.l.b16 %v1922
    %v2139 = vunpack.c.l.b16 %v1923
    %v2140 = vunpack.c.l.b16 %v1924
    %v2141 = vunpack.c.l.b16 %v1925
    %v2142 = vunpack.c.l.b16 %v1926
    %v2143 = vunpack.c.l.b16 %v1927
    %v2144 = vunpack.c.l.b16 %v1928
    %v2145 = vunpack.c.l.b16 %v1929
    %v2146 = vunpack.c.l.b16 %v1930
    %v2147 = vunpack.c.l.b16 %v1931
    %v2148 = vunpack.c.l.b16 %v1932
    %v2149 = vunpack.c.l.b16 %v1933
    %v2150 = vunpack.c.l.b16 %v1934
    %v2151 = vunpack.c.l.b16 %v1935
    %v2152 = vunpack.c.l.b16 %v1936
    %v2153 = vunpack.c.l.b16 %v1937
    %v2154 = vunpack.c.l.b16 %v1938
    %v2155 = vunpack.c.l.b16 %v1939
    %v2156 = vunpack.c.l.b16 %v1940
    %v2157 = vunpack.c.l.b16 %v1941
    %v2158 = vunpack.c.l.b16 %v1942
    %v2159 = vunpack.c.l.b16 %v1943
    %v2160 = vunpack.c.l.b16 %v1944
    %v2161 = vunpack.c.l.b16 %v1945
    %v2162 = vunpack.c.l.b16 %v1946
    %v2163 = vunpack.c.l.b16 %v1947
    %v2164 = vunpack.c.l.b16 %v1948
    %v2165 = vunpack.c.l.b16 %v1949
    %v2166 = vunpack.c.l.b16 %v1950
    %v2167 = vunpack.c.l.b16 %v1951
    %v2168 = vunpack.c.l.b16 %v1952
    %v2169 = vunpack.c.l.b16 %v1953
    %v2170 = vunpack.c.l.b16 %v1954
    %v2171 = vunpack.c.l.b16 %v1955
    %v2172 = vunpack.c.l.b16 %v1956
    %v2173 = vunpack.c.l.b16 %v1957
    %v2174 = vunpack.c.l.b16 %v1958
    %v2175 = vunpack.c.l.b16 %v1959
    %v2176 = vunpack.c.l.b16 %v1960
    %v2177 = vunpack.c.l.b16 %v1961
    %v2178 = vunpack.c.l.b16 %v1962
    %v2179 = vunpack.c.l.b16 %v1963
    %v2180 = vunpack.c.l.b16 %v1964
    %v2181 = vunpack.c.l.b16 %v1965
    %v2182 = vunpack.c.l.b16 %v1966
    %v2183 = vunpack.c.l.b16 %v1967
    %v2184 = vunpack.c.l.b16 %v1968
    %v2185 = vunpack.c.l.b16 %v1969
    %v2186 = vunpack.c.l.b16 %v1970
    %v2187 = vunpack.c.l.b16 %v1971
    %v2188 = vunpack.c.l.b16 %v1972
    %v2189 = vunpack.c.l.b16 %v1973
    %v2190 = vunpack.c.l.b16 %v1974
    %v2191 = vunpack.c.l.b16 %v1975
    %v2192 = vunpack.c.l.b16 %v1976
    %v2193 = vunpack.c.l.b16 %v1977
    %v2194 = vunpack.c.l.b16 %v1978
    %v2195 = vunpack.c.l.b16 %v1979
    %v2196 = vunpack.c.l.b16 %v1980
    %v2197 = vunpack.c.l.b16 %v1981
    %v2198 = vpack.c.b16 %v2127, %v2126
    %v2199 = vpack.c.b16 %v2129, %v2128
    %v2200 = vpack.c.b16 %v2131, %v2130
    %v2201 = vpack.c.b16 %v2133, %v2132
    %v2202 = vpack.c.b16 %v2135, %v2134
    %v2203 = vpack.c.b16 %v2137, %v2136
    %v2204 = vpack.c.b16 %v2139, %v2138
    %v2205 = vpack.c.b16 %v2141, %v2140
    %v2206 = vpack.c.b16 %v2143, %v2142
    %v2207 = vpack.c.b16 %v2145, %v2144
    %v2208 = vpack.c.b16 %v2147, %v2146
    %v2209 = vpack.c.b16 %v2149, %v2148
    %v2210 = vpack.c.b16 %v2151, %v2150
    %v2211 = vpack.c.b16 %v2153, %v2152
    %v2212 = vpack.c.b16 %v2155, %v2154
    %v2213 = vpack.c.b16 %v2157, %v2156
    %v2214 = vpack.c.b16 %v2159, %v2158
    %v2215 = vpack.c.b16 %v2161, %v2160
    %v2216 = vpack.c.b16 %v2163, %v2162
    %v2217 = vpack.c.b16 %v2165, %v2164
    %v2218 = vpack.c.b16 %v2167, %v2166
    %v2219 = vpack.c.b16 %v2169, %v2168
    %v2220 = vpack.c.b16 %v2171, %v2170
    %v2221 = vpack.c.b16 %v2173, %v2172
    %v2222 = vpack.c.b16 %v2175, %v2174
    %v2223 = vpack.c.b16 %v2177, %v2176
    %v2224 = vpack.c.b16 %v2179, %v2178
    %v2225 = vpack.c.b16 %v2181, %v2180
    %v2226 = vpack.c.b16 %v2183, %v2182
    %v2227 = vpack.c.b16 %v2185, %v2184
    %v2228 = vpack.c.b16 %v2187, %v2186
    %v2229 = vpack.c.b16 %v2189, %v2188
    %v2230 = vpack.c.b16 %v2191, %v2190
    %v2231 = vpack.c.b16 %v2193, %v2192
    %v2232 = vpack.c.b16 %v2195, %v2194
    %v2233 = vpack.c.b16 %v2197, %v2196
    %v2271 = vsel %vm233, %v2053, 0
    %2273 = vmatprep.subr.bf16.mxu0 0
    %2274 = vmatpush1.bf16.msra.mxu0 %v2205
    %2275 = vmatprep.subr.bf16.mxu0 0
    %2276 = vmatpush1.bf16.msra.mxu0 %v2204
    %2277 = vmatprep.subr.bf16.mxu0 0
    %2278 = vmatpush1.bf16.msra.mxu0 %v2203
    %2279 = vmatprep.subr.bf16.mxu0 0
    %2280 = vmatpush1.bf16.msra.mxu0 %v2202
    %2281 = vmatprep.subr.bf16.mxu0 0
    %2282 = vmatpush1.bf16.msra.mxu0 %v2201
    %2283 = vmatprep.subr.bf16.mxu0 0
    %2284 = vmatpush1.bf16.msra.mxu0 %v2200
    %2285 = vmatprep.subr.bf16.mxu0 0
    %2286 = vmatpush1.bf16.msra.mxu0 %v2199
    %2287 = vmatprep.subr.bf16.mxu0 0
    %2288 = vmatpush1.bf16.msra.mxu0 %v2198
    %2289 = vmatprep.subr.bf16.mxu0 0
    %2290 = vmatpush2.bf16.msra.mxu0 %v2213
    %2291 = vmatprep.subr.bf16.mxu0 0
    %2292 = vmatpush2.bf16.msra.mxu0 %v2212
    %2293 = vmatprep.subr.bf16.mxu0 0
    %2294 = vmatpush2.bf16.msra.mxu0 %v2211
    %2295 = vmatprep.subr.bf16.mxu0 0
    %2296 = vmatpush2.bf16.msra.mxu0 %v2210
    %2297 = vmatprep.subr.bf16.mxu0 0
    %2298 = vmatpush2.bf16.msra.mxu0 %v2209
    %2299 = vmatprep.subr.bf16.mxu0 0
    %2300 = vmatpush2.bf16.msra.mxu0 %v2208
    %2301 = vmatprep.subr.bf16.mxu0 0
    %2302 = vmatpush2.bf16.msra.mxu0 %v2207
    %2303 = vmatprep.subr.bf16.mxu0 0
    %2304 = vmatpush2.bf16.msra.mxu0 %v2206
    %2305 = vmatprep.mubr.bf16.mxu0 %v2050
    %2306 = vmatmul.mubr.bf16.gmra.mxu0 %v2049
    %v2307 = vpop.f32.mrf.mxu0
    %v2308 = vadd.f32 %v1982, %v2307
    %v2309 = vpop.f32.mrf.mxu0
    %v2310 = vpop.f32.mrf.mxu0
    %v2311 = vpop.f32.mrf.mxu0
    %2312 = vdwg.mxu0
    %2313 = vmatprep.subr.bf16.mxu0 0
    %2314 = vmatpush1.bf16.msra.mxu0 %v2221
    %2315 = vmatprep.subr.bf16.mxu0 0
    %2316 = vmatpush1.bf16.msra.mxu0 %v2220
    %2317 = vmatprep.subr.bf16.mxu0 0
    %2318 = vmatpush1.bf16.msra.mxu0 %v2219
    %2319 = vmatprep.subr.bf16.mxu0 0
    %2320 = vmatpush1.bf16.msra.mxu0 %v2218
    %2321 = vmatprep.subr.bf16.mxu0 0
    %2322 = vmatpush1.bf16.msra.mxu0 %v2217
    %2323 = vmatprep.subr.bf16.mxu0 0
    %2324 = vmatpush1.bf16.msra.mxu0 %v2216
    %2325 = vmatprep.subr.bf16.mxu0 0
    %2326 = vmatpush1.bf16.msra.mxu0 %v2215
    %2327 = vmatprep.subr.bf16.mxu0 0
    %2328 = vmatpush1.bf16.msra.mxu0 %v2214
    %2329 = vmatprep.subr.bf16.mxu0 0
    %2330 = vmatpush2.bf16.msra.mxu0 %v2229
    %2331 = vmatprep.subr.bf16.mxu0 0
    %2332 = vmatpush2.bf16.msra.mxu0 %v2228
    %2333 = vmatprep.subr.bf16.mxu0 0
    %2334 = vmatpush2.bf16.msra.mxu0 %v2227
    %2335 = vmatprep.subr.bf16.mxu0 0
    %2336 = vmatpush2.bf16.msra.mxu0 %v2226
    %2337 = vmatprep.subr.bf16.mxu0 0
    %2338 = vmatpush2.bf16.msra.mxu0 %v2225
    %2339 = vmatprep.subr.bf16.mxu0 0
    %2340 = vmatpush2.bf16.msra.mxu0 %v2224
    %2341 = vmatprep.subr.bf16.mxu0 0
    %2342 = vmatpush2.bf16.msra.mxu0 %v2223
    %2343 = vmatprep.subr.bf16.mxu0 0
    %2344 = vmatpush2.bf16.msra.mxu0 %v2222
    %2345 = vmatprep.mubr.bf16.mxu0 %v2052
    %2346 = vmatmul.mubr.bf16.gmra.mxu0 %v2051
    %v2347 = vpop.f32.mrf.mxu0
    %v2348 = vadd.f32 %v2308, %v2347
    %v2349 = vpop.f32.mrf.mxu0
    %v2350 = vpop.f32.mrf.mxu0
    %v2351 = vpop.f32.mrf.mxu0
    %2352 = vdwg.mxu0
    %2353 = vmatprep.subr.bf16.mxu0 0
    %2354 = vmatpush1.bf16.msra.mxu0 0
    %2355 = vmatprep.subr.bf16.mxu0 0
    %2356 = vmatpush1.bf16.msra.mxu0 0
    %2357 = vmatprep.subr.bf16.mxu0 0
    %2358 = vmatpush1.bf16.msra.mxu0 0
    %2359 = vmatprep.subr.bf16.mxu0 0
    %2360 = vmatpush1.bf16.msra.mxu0 0
    %2361 = vmatprep.subr.bf16.mxu0 0
    %2362 = vmatpush1.bf16.msra.mxu0 %v2233
    %2363 = vmatprep.subr.bf16.mxu0 0
    %2364 = vmatpush1.bf16.msra.mxu0 %v2232
    %2365 = vmatprep.subr.bf16.mxu0 0
    %2366 = vmatpush1.bf16.msra.mxu0 %v2231
    %2367 = vmatprep.subr.bf16.mxu0 0
    %2368 = vmatpush1.bf16.msra.mxu0 %v2230
    %2369 = vmatprep.subr.bf16.mxu0 0
    %2370 = vmatpush2.bf16.msra.mxu0 0
    %2371 = vmatprep.subr.bf16.mxu0 0
    %2372 = vmatpush2.bf16.msra.mxu0 0
    %2373 = vmatprep.subr.bf16.mxu0 0
    %2374 = vmatpush2.bf16.msra.mxu0 0
    %2375 = vmatprep.subr.bf16.mxu0 0
    %2376 = vmatpush2.bf16.msra.mxu0 0
    %2377 = vmatprep.subr.bf16.mxu0 0
    %2378 = vmatpush2.bf16.msra.mxu0 0
    %2379 = vmatprep.subr.bf16.mxu0 0
    %2380 = vmatpush2.bf16.msra.mxu0 0
    %2381 = vmatprep.subr.bf16.mxu0 0
    %2382 = vmatpush2.bf16.msra.mxu0 0
    %2383 = vmatprep.subr.bf16.mxu0 0
    %2384 = vmatpush2.bf16.msra.mxu0 0
    %2385 = vmatprep.mubr.bf16.mxu0 0
    %2386 = vmatmul.mubr.bf16.gmra.mxu0 %v2271
    %v2387 = vpop.f32.mrf.mxu0
    %v2388 = vadd.f32 %v2348, %v2387
    %v2389 = vpop.f32.mrf.mxu0
    %v2390 = vpop.f32.mrf.mxu0
    %v2391 = vpop.f32.mrf.mxu0
    %2392 = vdwg.mxu0
    %v2393 = vmax.f32 %v2388, 0.0
    %v2394 = vpack.c.bf16 %v2393, %v2393
    %v2395 = vld [vmem:[%s7] sm:$0xff]
    %v2396 = vld [vmem:[%s7 + $0x8] sm:$0xff]
    %v2397 = vld [vmem:[%s7 + $0x10] sm:$0xff]
    %v2398 = vld [vmem:[%s7 + $0x18] sm:$0xff]
    %v2399 = vld [vmem:[%s7 + $0x20] sm:$0xff]
    %v2400 = vld [vmem:[%s7 + $0x28] sm:$0xff]
    %v2401 = vld [vmem:[%s7 + $0x30] sm:$0xff]
    %v2402 = vld [vmem:[%s7 + $0x38] sm:$0xff]
    %v2403 = vld [vmem:[%s7 + $0x40] sm:$0xff]
    %v2404 = vld [vmem:[%s7 + $0x48] sm:$0xff]
    %v2405 = vld [vmem:[%s7 + $0x50] sm:$0xff]
    %v2406 = vld [vmem:[%s7 + $0x58] sm:$0xff]
    %v2407 = vld [vmem:[%s7 + $0x60] sm:$0xff]
    %v2408 = vld [vmem:[%s7 + $0x68] sm:$0xff]
    %v2409 = vld [vmem:[%s7 + $0x70] sm:$0xff]
    %v2410 = vld [vmem:[%s7 + $0x78] sm:$0xff]
    %v2427 = vunpack.c.l.b16 %v2395
    %v2428 = vunpack.c.h.b16 %v2395
    %v2429 = vunpack.c.l.b16 %v2396
    %v2430 = vunpack.c.h.b16 %v2396
    %v2431 = vunpack.c.l.b16 %v2397
    %v2432 = vunpack.c.h.b16 %v2397
    %v2433 = vunpack.c.l.b16 %v2398
    %v2434 = vunpack.c.h.b16 %v2398
    %v2435 = vunpack.c.l.b16 %v2399
    %v2436 = vunpack.c.h.b16 %v2399
    %v2437 = vunpack.c.l.b16 %v2400
    %v2438 = vunpack.c.h.b16 %v2400
    %v2439 = vunpack.c.l.b16 %v2401
    %v2440 = vunpack.c.h.b16 %v2401
    %v2441 = vunpack.c.l.b16 %v2402
    %v2442 = vunpack.c.h.b16 %v2402
    %v2443 = vunpack.c.l.b16 %v2403
    %v2444 = vunpack.c.h.b16 %v2403
    %v2445 = vunpack.c.l.b16 %v2404
    %v2446 = vunpack.c.h.b16 %v2404
    %v2447 = vunpack.c.l.b16 %v2405
    %v2448 = vunpack.c.h.b16 %v2405
    %v2449 = vunpack.c.l.b16 %v2406
    %v2450 = vunpack.c.h.b16 %v2406
    %v2451 = vunpack.c.l.b16 %v2407
    %v2452 = vunpack.c.h.b16 %v2407
    %v2453 = vunpack.c.l.b16 %v2408
    %v2454 = vunpack.c.h.b16 %v2408
    %v2455 = vunpack.c.l.b16 %v2409
    %v2456 = vunpack.c.h.b16 %v2409
    %v2457 = vunpack.c.l.b16 %v2410
    %v2458 = vunpack.c.h.b16 %v2410
    %v2459 = vpack.c.b16 %v2431, %v2427
    %v2460 = vpack.c.b16 %v2432, %v2428
    %v2461 = vpack.c.b16 %v2433, %v2429
    %v2462 = vpack.c.b16 %v2434, %v2430
    %v2463 = vpack.c.b16 %v2439, %v2435
    %v2464 = vpack.c.b16 %v2440, %v2436
    %v2465 = vpack.c.b16 %v2441, %v2437
    %v2466 = vpack.c.b16 %v2442, %v2438
    %v2467 = vpack.c.b16 %v2447, %v2443
    %v2468 = vpack.c.b16 %v2448, %v2444
    %v2469 = vpack.c.b16 %v2449, %v2445
    %v2470 = vpack.c.b16 %v2450, %v2446
    %v2471 = vpack.c.b16 %v2455, %v2451
    %v2472 = vpack.c.b16 %v2456, %v2452
    %v2473 = vpack.c.b16 %v2457, %v2453
    %v2474 = vpack.c.b16 %v2458, %v2454
    %v2492 = vlaneseq
    %v2493 = vshrl.u32 %v2492, 7
    %v2494 = vsub.s32 0, %v2493
    %v2495 = vrot.slane %v1983, %v2494
    %v2496 = vlaneseq
    %v2497 = vshrl.u32 %v2496, 7
    %v2498 = vsub.s32 1, %v2497
    %v2499 = vrot.slane %v1983, %v2498
    %v2500 = vlaneseq
    %v2501 = vshrl.u32 %v2500, 7
    %v2502 = vsub.s32 2, %v2501
    %v2503 = vrot.slane %v1983, %v2502
    %v2504 = vlaneseq
    %v2505 = vshrl.u32 %v2504, 7
    %v2506 = vsub.s32 3, %v2505
    %v2507 = vrot.slane %v1983, %v2506
    %v2513 = vsel %vm233, %v2394, 0
    %2515 = vmatprep.subr.bf16.mxu0 0
    %2516 = vmatpush1.bf16.msra.mxu0 0
    %2517 = vmatprep.subr.bf16.mxu0 0
    %2518 = vmatpush1.bf16.msra.mxu0 0
    %2519 = vmatprep.subr.bf16.mxu0 0
    %2520 = vmatpush1.bf16.msra.mxu0 0
    %2521 = vmatprep.subr.bf16.mxu0 0
    %2522 = vmatpush1.bf16.msra.mxu0 0
    %2523 = vmatprep.subr.bf16.mxu0 %v2472
    %2524 = vmatpush1.bf16.msra.mxu0 %v2471
    %2525 = vmatprep.subr.bf16.mxu0 %v2468
    %2526 = vmatpush1.bf16.msra.mxu0 %v2467
    %2527 = vmatprep.subr.bf16.mxu0 %v2464
    %2528 = vmatpush1.bf16.msra.mxu0 %v2463
    %2529 = vmatprep.subr.bf16.mxu0 %v2460
    %2530 = vmatpush1.bf16.msra.mxu0 %v2459
    %2531 = vmatprep.subr.bf16.mxu0 0
    %2532 = vmatpush2.bf16.msra.mxu0 0
    %2533 = vmatprep.subr.bf16.mxu0 0
    %2534 = vmatpush2.bf16.msra.mxu0 0
    %2535 = vmatprep.subr.bf16.mxu0 0
    %2536 = vmatpush2.bf16.msra.mxu0 0
    %2537 = vmatprep.subr.bf16.mxu0 0
    %2538 = vmatpush2.bf16.msra.mxu0 0
    %2539 = vmatprep.subr.bf16.mxu0 0
    %2540 = vmatpush2.bf16.msra.mxu0 0
    %2541 = vmatprep.subr.bf16.mxu0 0
    %2542 = vmatpush2.bf16.msra.mxu0 0
    %2543 = vmatprep.subr.bf16.mxu0 0
    %2544 = vmatpush2.bf16.msra.mxu0 0
    %2545 = vmatprep.subr.bf16.mxu0 0
    %2546 = vmatpush2.bf16.msra.mxu0 0
    %2547 = vmatprep.mubr.bf16.mxu0 0
    %2548 = vmatmul.mubr.bf16.gmra.mxu0 %v2513
    %v2549 = vpop.f32.mrf.mxu0
    %v2550 = vadd.f32 %v2495, %v2549
    %v2551 = vpop.f32.mrf.mxu0
    %v2552 = vadd.f32 %v2499, %v2551
    %v2553 = vpop.f32.mrf.mxu0
    %v2554 = vpop.f32.mrf.mxu0
    %2555 = vdwg.mxu0
    %2556 = vmatprep.subr.bf16.mxu0 0
    %2557 = vmatpush1.bf16.msra.mxu0 0
    %2558 = vmatprep.subr.bf16.mxu0 0
    %2559 = vmatpush1.bf16.msra.mxu0 0
    %2560 = vmatprep.subr.bf16.mxu0 0
    %2561 = vmatpush1.bf16.msra.mxu0 0
    %2562 = vmatprep.subr.bf16.mxu0 0
    %2563 = vmatpush1.bf16.msra.mxu0 0
    %2564 = vmatprep.subr.bf16.mxu0 %v2474
    %2565 = vmatpush1.bf16.msra.mxu0 %v2473
    %2566 = vmatprep.subr.bf16.mxu0 %v2470
    %2567 = vmatpush1.bf16.msra.mxu0 %v2469
    %2568 = vmatprep.subr.bf16.mxu0 %v2466
    %2569 = vmatpush1.bf16.msra.mxu0 %v2465
    %2570 = vmatprep.subr.bf16.mxu0 %v2462
    %2571 = vmatpush1.bf16.msra.mxu0 %v2461
    %2572 = vmatprep.subr.bf16.mxu0 0
    %2573 = vmatpush2.bf16.msra.mxu0 0
    %2574 = vmatprep.subr.bf16.mxu0 0
    %2575 = vmatpush2.bf16.msra.mxu0 0
    %2576 = vmatprep.subr.bf16.mxu0 0
    %2577 = vmatpush2.bf16.msra.mxu0 0
    %2578 = vmatprep.subr.bf16.mxu0 0
    %2579 = vmatpush2.bf16.msra.mxu0 0
    %2580 = vmatprep.subr.bf16.mxu0 0
    %2581 = vmatpush2.bf16.msra.mxu0 0
    %2582 = vmatprep.subr.bf16.mxu0 0
    %2583 = vmatpush2.bf16.msra.mxu0 0
    %2584 = vmatprep.subr.bf16.mxu0 0
    %2585 = vmatpush2.bf16.msra.mxu0 0
    %2586 = vmatprep.subr.bf16.mxu0 0
    %2587 = vmatpush2.bf16.msra.mxu0 0
    %2588 = vmatprep.mubr.bf16.mxu0 0
    %2589 = vmatmul.mubr.bf16.gmra.mxu0 %v2513
    %v2590 = vpop.f32.mrf.mxu0
    %v2591 = vadd.f32 %v2503, %v2590
    %v2592 = vpop.f32.mrf.mxu0
    %v2593 = vadd.f32 %v2507, %v2592
    %v2594 = vpop.f32.mrf.mxu0
    %v2595 = vpop.f32.mrf.mxu0
    %2596 = vdwg.mxu0
    %v2597 = vmax.f32 %v2550, 0.0
    %v2598 = vmax.f32 %v2552, 0.0
    %v2599 = vmax.f32 %v2591, 0.0
    %v2600 = vmax.f32 %v2593, 0.0
    %v2601 = vpack.c.bf16 %v2597, %v2597
    %v2602 = vpack.c.bf16 %v2598, %v2598
    %v2603 = vpack.c.bf16 %v2599, %v2599
    %v2604 = vpack.c.bf16 %v2600, %v2600
    %v2669 = vunpack.c.l.b16 %v1984
    %v2670 = vunpack.c.l.b16 %v1985
    %v2671 = vunpack.c.l.b16 %v1986
    %v2672 = vunpack.c.l.b16 %v1987
    %v2673 = vunpack.c.l.b16 %v1988
    %v2674 = vunpack.c.l.b16 %v1989
    %v2675 = vunpack.c.l.b16 %v1990
    %v2676 = vunpack.c.l.b16 %v1991
    %v2677 = vunpack.c.l.b16 %v1992
    %v2678 = vunpack.c.l.b16 %v1993
    %v2679 = vunpack.c.l.b16 %v1994
    %v2680 = vunpack.c.l.b16 %v1995
    %v2681 = vunpack.c.l.b16 %v1996
    %v2682 = vunpack.c.l.b16 %v1997
    %v2683 = vunpack.c.l.b16 %v1998
    %v2684 = vunpack.c.l.b16 %v1999
    %v2685 = vunpack.c.l.b16 %v2000
    %v2686 = vunpack.c.l.b16 %v2001
    %v2687 = vunpack.c.l.b16 %v2002
    %v2688 = vunpack.c.l.b16 %v2003
    %v2689 = vunpack.c.l.b16 %v2004
    %v2690 = vunpack.c.l.b16 %v2005
    %v2691 = vunpack.c.l.b16 %v2006
    %v2692 = vunpack.c.l.b16 %v2007
    %v2693 = vunpack.c.l.b16 %v2008
    %v2694 = vunpack.c.l.b16 %v2009
    %v2695 = vunpack.c.l.b16 %v2010
    %v2696 = vunpack.c.l.b16 %v2011
    %v2697 = vunpack.c.l.b16 %v2012
    %v2698 = vunpack.c.l.b16 %v2013
    %v2699 = vunpack.c.l.b16 %v2014
    %v2700 = vunpack.c.l.b16 %v2015
    %v2701 = vunpack.c.l.b16 %v2016
    %v2702 = vunpack.c.l.b16 %v2017
    %v2703 = vunpack.c.l.b16 %v2018
    %v2704 = vunpack.c.l.b16 %v2019
    %v2705 = vunpack.c.l.b16 %v2020
    %v2706 = vunpack.c.l.b16 %v2021
    %v2707 = vunpack.c.l.b16 %v2022
    %v2708 = vunpack.c.l.b16 %v2023
    %v2709 = vunpack.c.l.b16 %v2024
    %v2710 = vunpack.c.l.b16 %v2025
    %v2711 = vunpack.c.l.b16 %v2026
    %v2712 = vunpack.c.l.b16 %v2027
    %v2713 = vunpack.c.l.b16 %v2028
    %v2714 = vunpack.c.l.b16 %v2029
    %v2715 = vunpack.c.l.b16 %v2030
    %v2716 = vunpack.c.l.b16 %v2031
    %v2717 = vunpack.c.l.b16 %v2032
    %v2718 = vunpack.c.l.b16 %v2033
    %v2719 = vunpack.c.l.b16 %v2034
    %v2720 = vunpack.c.l.b16 %v2035
    %v2721 = vunpack.c.l.b16 %v2036
    %v2722 = vunpack.c.l.b16 %v2037
    %v2723 = vunpack.c.l.b16 %v2038
    %v2724 = vunpack.c.l.b16 %v2039
    %v2725 = vunpack.c.l.b16 %v2040
    %v2726 = vunpack.c.l.b16 %v2041
    %v2727 = vunpack.c.l.b16 %v2042
    %v2728 = vunpack.c.l.b16 %v2043
    %v2729 = vunpack.c.l.b16 %v2044
    %v2730 = vunpack.c.l.b16 %v2045
    %v2731 = vunpack.c.l.b16 %v2046
    %v2732 = vunpack.c.l.b16 %v2047
    %v2733 = vpack.c.b16 %v2670, %v2669
    %v2734 = vpack.c.b16 %v2672, %v2671
    %v2735 = vpack.c.b16 %v2674, %v2673
    %v2736 = vpack.c.b16 %v2676, %v2675
    %v2737 = vpack.c.b16 %v2678, %v2677
    %v2738 = vpack.c.b16 %v2680, %v2679
    %v2739 = vpack.c.b16 %v2682, %v2681
    %v2740 = vpack.c.b16 %v2684, %v2683
    %v2741 = vpack.c.b16 %v2686, %v2685
    %v2742 = vpack.c.b16 %v2688, %v2687
    %v2743 = vpack.c.b16 %v2690, %v2689
    %v2744 = vpack.c.b16 %v2692, %v2691
    %v2745 = vpack.c.b16 %v2694, %v2693
    %v2746 = vpack.c.b16 %v2696, %v2695
    %v2747 = vpack.c.b16 %v2698, %v2697
    %v2748 = vpack.c.b16 %v2700, %v2699
    %v2749 = vpack.c.b16 %v2702, %v2701
    %v2750 = vpack.c.b16 %v2704, %v2703
    %v2751 = vpack.c.b16 %v2706, %v2705
    %v2752 = vpack.c.b16 %v2708, %v2707
    %v2753 = vpack.c.b16 %v2710, %v2709
    %v2754 = vpack.c.b16 %v2712, %v2711
    %v2755 = vpack.c.b16 %v2714, %v2713
    %v2756 = vpack.c.b16 %v2716, %v2715
    %v2757 = vpack.c.b16 %v2718, %v2717
    %v2758 = vpack.c.b16 %v2720, %v2719
    %v2759 = vpack.c.b16 %v2722, %v2721
    %v2760 = vpack.c.b16 %v2724, %v2723
    %v2761 = vpack.c.b16 %v2726, %v2725
    %v2762 = vpack.c.b16 %v2728, %v2727
    %v2763 = vpack.c.b16 %v2730, %v2729
    %v2764 = vpack.c.b16 %v2732, %v2731
    %2797 = vmatprep.subr.bf16.mxu0 0
    %2798 = vmatpush1.bf16.msra.mxu0 %v2740
    %2799 = vmatprep.subr.bf16.mxu0 0
    %2800 = vmatpush1.bf16.msra.mxu0 %v2739
    %2801 = vmatprep.subr.bf16.mxu0 0
    %2802 = vmatpush1.bf16.msra.mxu0 %v2738
    %2803 = vmatprep.subr.bf16.mxu0 0
    %2804 = vmatpush1.bf16.msra.mxu0 %v2737
    %2805 = vmatprep.subr.bf16.mxu0 0
    %2806 = vmatpush1.bf16.msra.mxu0 %v2736
    %2807 = vmatprep.subr.bf16.mxu0 0
    %2808 = vmatpush1.bf16.msra.mxu0 %v2735
    %2809 = vmatprep.subr.bf16.mxu0 0
    %2810 = vmatpush1.bf16.msra.mxu0 %v2734
    %2811 = vmatprep.subr.bf16.mxu0 0
    %2812 = vmatpush1.bf16.msra.mxu0 %v2733
    %2813 = vmatprep.subr.bf16.mxu0 0
    %2814 = vmatpush2.bf16.msra.mxu0 %v2748
    %2815 = vmatprep.subr.bf16.mxu0 0
    %2816 = vmatpush2.bf16.msra.mxu0 %v2747
    %2817 = vmatprep.subr.bf16.mxu0 0
    %2818 = vmatpush2.bf16.msra.mxu0 %v2746
    %2819 = vmatprep.subr.bf16.mxu0 0
    %2820 = vmatpush2.bf16.msra.mxu0 %v2745
    %2821 = vmatprep.subr.bf16.mxu0 0
    %2822 = vmatpush2.bf16.msra.mxu0 %v2744
    %2823 = vmatprep.subr.bf16.mxu0 0
    %2824 = vmatpush2.bf16.msra.mxu0 %v2743
    %2825 = vmatprep.subr.bf16.mxu0 0
    %2826 = vmatpush2.bf16.msra.mxu0 %v2742
    %2827 = vmatprep.subr.bf16.mxu0 0
    %2828 = vmatpush2.bf16.msra.mxu0 %v2741
    %2829 = vmatprep.mubr.bf16.mxu0 %v2602
    %2830 = vmatmul.mubr.bf16.gmra.mxu0 %v2601
    %v2831 = vpop.f32.mrf.mxu0
    %v2832 = vadd.f32 %v2048, %v2831
    %v2833 = vpop.f32.mrf.mxu0
    %v2834 = vpop.f32.mrf.mxu0
    %v2835 = vpop.f32.mrf.mxu0
    %2836 = vdwg.mxu0
    %2837 = vmatprep.subr.bf16.mxu0 0
    %2838 = vmatpush1.bf16.msra.mxu0 %v2756
    %2839 = vmatprep.subr.bf16.mxu0 0
    %2840 = vmatpush1.bf16.msra.mxu0 %v2755
    %2841 = vmatprep.subr.bf16.mxu0 0
    %2842 = vmatpush1.bf16.msra.mxu0 %v2754
    %2843 = vmatprep.subr.bf16.mxu0 0
    %2844 = vmatpush1.bf16.msra.mxu0 %v2753
    %2845 = vmatprep.subr.bf16.mxu0 0
    %2846 = vmatpush1.bf16.msra.mxu0 %v2752
    %2847 = vmatprep.subr.bf16.mxu0 0
    %2848 = vmatpush1.bf16.msra.mxu0 %v2751
    %2849 = vmatprep.subr.bf16.mxu0 0
    %2850 = vmatpush1.bf16.msra.mxu0 %v2750
    %2851 = vmatprep.subr.bf16.mxu0 0
    %2852 = vmatpush1.bf16.msra.mxu0 %v2749
    %2853 = vmatprep.subr.bf16.mxu0 0
    %2854 = vmatpush2.bf16.msra.mxu0 %v2764
    %2855 = vmatprep.subr.bf16.mxu0 0
    %2856 = vmatpush2.bf16.msra.mxu0 %v2763
    %2857 = vmatprep.subr.bf16.mxu0 0
    %2858 = vmatpush2.bf16.msra.mxu0 %v2762
    %2859 = vmatprep.subr.bf16.mxu0 0
    %2860 = vmatpush2.bf16.msra.mxu0 %v2761
    %2861 = vmatprep.subr.bf16.mxu0 0
    %2862 = vmatpush2.bf16.msra.mxu0 %v2760
    %2863 = vmatprep.subr.bf16.mxu0 0
    %2864 = vmatpush2.bf16.msra.mxu0 %v2759
    %2865 = vmatprep.subr.bf16.mxu0 0
    %2866 = vmatpush2.bf16.msra.mxu0 %v2758
    %2867 = vmatprep.subr.bf16.mxu0 0
    %2868 = vmatpush2.bf16.msra.mxu0 %v2757
    %2869 = vmatprep.mubr.bf16.mxu0 %v2604
    %2870 = vmatmul.mubr.bf16.gmra.mxu0 %v2603
    %v2871 = vpop.f32.mrf.mxu0
    %v2872 = vadd.f32 %v2832, %v2871
    %v2873 = vpop.f32.mrf.mxu0
    %v2874 = vpop.f32.mrf.mxu0
    %v2875 = vpop.f32.mrf.mxu0
    %2876 = vdwg.mxu0
    %vm2877 = vcmask 8192
    %2878 = vst.msk [vmem:[#allocation4] sm:$0x1] %vm2877, %v2872
    %v2879 = vpack.c.bf16 %v1903, %v1903
    %v2880 = vpack.c.bf16 %v1905, %v1905
    %v2881 = vpack.c.bf16 %v1907, %v1907
    %v2882 = vpack.c.bf16 %v1909, %v1909
    %v2883 = vpack.c.bf16 %v1869, %v1869
    %v2885 = vsel %vm233, %v2883, 0
    %2887 = vmatprep.subr.bf16.mxu0 0
    %2888 = vmatpush1.bf16.msra.mxu0 %v2205
    %2889 = vmatprep.subr.bf16.mxu0 0
    %2890 = vmatpush1.bf16.msra.mxu0 %v2204
    %2891 = vmatprep.subr.bf16.mxu0 0
    %2892 = vmatpush1.bf16.msra.mxu0 %v2203
    %2893 = vmatprep.subr.bf16.mxu0 0
    %2894 = vmatpush1.bf16.msra.mxu0 %v2202
    %2895 = vmatprep.subr.bf16.mxu0 0
    %2896 = vmatpush1.bf16.msra.mxu0 %v2201
    %2897 = vmatprep.subr.bf16.mxu0 0
    %2898 = vmatpush1.bf16.msra.mxu0 %v2200
    %2899 = vmatprep.subr.bf16.mxu0 0
    %2900 = vmatpush1.bf16.msra.mxu0 %v2199
    %2901 = vmatprep.subr.bf16.mxu0 0
    %2902 = vmatpush1.bf16.msra.mxu0 %v2198
    %2903 = vmatprep.subr.bf16.mxu0 0
    %2904 = vmatpush2.bf16.msra.mxu0 %v2213
    %2905 = vmatprep.subr.bf16.mxu0 0
    %2906 = vmatpush2.bf16.msra.mxu0 %v2212
    %2907 = vmatprep.subr.bf16.mxu0 0
    %2908 = vmatpush2.bf16.msra.mxu0 %v2211
    %2909 = vmatprep.subr.bf16.mxu0 0
    %2910 = vmatpush2.bf16.msra.mxu0 %v2210
    %2911 = vmatprep.subr.bf16.mxu0 0
    %2912 = vmatpush2.bf16.msra.mxu0 %v2209
    %2913 = vmatprep.subr.bf16.mxu0 0
    %2914 = vmatpush2.bf16.msra.mxu0 %v2208
    %2915 = vmatprep.subr.bf16.mxu0 0
    %2916 = vmatpush2.bf16.msra.mxu0 %v2207
    %2917 = vmatprep.subr.bf16.mxu0 0
    %2918 = vmatpush2.bf16.msra.mxu0 %v2206
    %2919 = vmatprep.mubr.bf16.mxu0 %v2880
    %2920 = vmatmul.mubr.bf16.gmra.mxu0 %v2879
    %v2921 = vpop.f32.mrf.mxu0
    %v2922 = vadd.f32 %v1982, %v2921
    %v2923 = vpop.f32.mrf.mxu0
    %v2924 = vpop.f32.mrf.mxu0
    %v2925 = vpop.f32.mrf.mxu0
    %2926 = vdwg.mxu0
    %2927 = vmatprep.subr.bf16.mxu0 0
    %2928 = vmatpush1.bf16.msra.mxu0 %v2221
    %2929 = vmatprep.subr.bf16.mxu0 0
    %2930 = vmatpush1.bf16.msra.mxu0 %v2220
    %2931 = vmatprep.subr.bf16.mxu0 0
    %2932 = vmatpush1.bf16.msra.mxu0 %v2219
    %2933 = vmatprep.subr.bf16.mxu0 0
    %2934 = vmatpush1.bf16.msra.mxu0 %v2218
    %2935 = vmatprep.subr.bf16.mxu0 0
    %2936 = vmatpush1.bf16.msra.mxu0 %v2217
    %2937 = vmatprep.subr.bf16.mxu0 0
    %2938 = vmatpush1.bf16.msra.mxu0 %v2216
    %2939 = vmatprep.subr.bf16.mxu0 0
    %2940 = vmatpush1.bf16.msra.mxu0 %v2215
    %2941 = vmatprep.subr.bf16.mxu0 0
    %2942 = vmatpush1.bf16.msra.mxu0 %v2214
    %2943 = vmatprep.subr.bf16.mxu0 0
    %2944 = vmatpush2.bf16.msra.mxu0 %v2229
    %2945 = vmatprep.subr.bf16.mxu0 0
    %2946 = vmatpush2.bf16.msra.mxu0 %v2228
    %2947 = vmatprep.subr.bf16.mxu0 0
    %2948 = vmatpush2.bf16.msra.mxu0 %v2227
    %2949 = vmatprep.subr.bf16.mxu0 0
    %2950 = vmatpush2.bf16.msra.mxu0 %v2226
    %2951 = vmatprep.subr.bf16.mxu0 0
    %2952 = vmatpush2.bf16.msra.mxu0 %v2225
    %2953 = vmatprep.subr.bf16.mxu0 0
    %2954 = vmatpush2.bf16.msra.mxu0 %v2224
    %2955 = vmatprep.subr.bf16.mxu0 0
    %2956 = vmatpush2.bf16.msra.mxu0 %v2223
    %2957 = vmatprep.subr.bf16.mxu0 0
    %2958 = vmatpush2.bf16.msra.mxu0 %v2222
    %2959 = vmatprep.mubr.bf16.mxu0 %v2882
    %2960 = vmatmul.mubr.bf16.gmra.mxu0 %v2881
    %v2961 = vpop.f32.mrf.mxu0
    %v2962 = vadd.f32 %v2922, %v2961
    %v2963 = vpop.f32.mrf.mxu0
    %v2964 = vpop.f32.mrf.mxu0
    %v2965 = vpop.f32.mrf.mxu0
    %2966 = vdwg.mxu0
    %2967 = vmatprep.subr.bf16.mxu0 0
    %2968 = vmatpush1.bf16.msra.mxu0 0
    %2969 = vmatprep.subr.bf16.mxu0 0
    %2970 = vmatpush1.bf16.msra.mxu0 0
    %2971 = vmatprep.subr.bf16.mxu0 0
    %2972 = vmatpush1.bf16.msra.mxu0 0
    %2973 = vmatprep.subr.bf16.mxu0 0
    %2974 = vmatpush1.bf16.msra.mxu0 0
    %2975 = vmatprep.subr.bf16.mxu0 0
    %2976 = vmatpush1.bf16.msra.mxu0 %v2233
    %2977 = vmatprep.subr.bf16.mxu0 0
    %2978 = vmatpush1.bf16.msra.mxu0 %v2232
    %2979 = vmatprep.subr.bf16.mxu0 0
    %2980 = vmatpush1.bf16.msra.mxu0 %v2231
    %2981 = vmatprep.subr.bf16.mxu0 0
    %2982 = vmatpush1.bf16.msra.mxu0 %v2230
    %2983 = vmatprep.subr.bf16.mxu0 0
    %2984 = vmatpush2.bf16.msra.mxu0 0
    %2985 = vmatprep.subr.bf16.mxu0 0
    %2986 = vmatpush2.bf16.msra.mxu0 0
    %2987 = vmatprep.subr.bf16.mxu0 0
    %2988 = vmatpush2.bf16.msra.mxu0 0
    %2989 = vmatprep.subr.bf16.mxu0 0
    %2990 = vmatpush2.bf16.msra.mxu0 0
    %2991 = vmatprep.subr.bf16.mxu0 0
    %2992 = vmatpush2.bf16.msra.mxu0 0
    %2993 = vmatprep.subr.bf16.mxu0 0
    %2994 = vmatpush2.bf16.msra.mxu0 0
    %2995 = vmatprep.subr.bf16.mxu0 0
    %2996 = vmatpush2.bf16.msra.mxu0 0
    %2997 = vmatprep.subr.bf16.mxu0 0
    %2998 = vmatpush2.bf16.msra.mxu0 0
    %2999 = vmatprep.mubr.bf16.mxu0 0
    %3000 = vmatmul.mubr.bf16.gmra.mxu0 %v2885
    %v3001 = vpop.f32.mrf.mxu0
    %v3002 = vadd.f32 %v2962, %v3001
    %v3003 = vpop.f32.mrf.mxu0
    %v3004 = vpop.f32.mrf.mxu0
    %v3005 = vpop.f32.mrf.mxu0
    %3006 = vdwg.mxu0
    %v3007 = vmax.f32 %v3002, 0.0
    %v3008 = vpack.c.bf16 %v3007, %v3007
    %v3009 = vld [vmem:[%s7] sm:$0xff]
    %v3010 = vld [vmem:[%s7 + $0x8] sm:$0xff]
    %v3011 = vld [vmem:[%s7 + $0x10] sm:$0xff]
    %v3012 = vld [vmem:[%s7 + $0x18] sm:$0xff]
    %v3013 = vld [vmem:[%s7 + $0x20] sm:$0xff]
    %v3014 = vld [vmem:[%s7 + $0x28] sm:$0xff]
    %v3015 = vld [vmem:[%s7 + $0x30] sm:$0xff]
    %v3016 = vld [vmem:[%s7 + $0x38] sm:$0xff]
    %v3017 = vld [vmem:[%s7 + $0x40] sm:$0xff]
    %v3018 = vld [vmem:[%s7 + $0x48] sm:$0xff]
    %v3019 = vld [vmem:[%s7 + $0x50] sm:$0xff]
    %v3020 = vld [vmem:[%s7 + $0x58] sm:$0xff]
    %v3021 = vld [vmem:[%s7 + $0x60] sm:$0xff]
    %v3022 = vld [vmem:[%s7 + $0x68] sm:$0xff]
    %v3023 = vld [vmem:[%s7 + $0x70] sm:$0xff]
    %v3024 = vld [vmem:[%s7 + $0x78] sm:$0xff]
    %v3041 = vunpack.c.l.b16 %v3009
    %v3042 = vunpack.c.h.b16 %v3009
    %v3043 = vunpack.c.l.b16 %v3010
    %v3044 = vunpack.c.h.b16 %v3010
    %v3045 = vunpack.c.l.b16 %v3011
    %v3046 = vunpack.c.h.b16 %v3011
    %v3047 = vunpack.c.l.b16 %v3012
    %v3048 = vunpack.c.h.b16 %v3012
    %v3049 = vunpack.c.l.b16 %v3013
    %v3050 = vunpack.c.h.b16 %v3013
    %v3051 = vunpack.c.l.b16 %v3014
    %v3052 = vunpack.c.h.b16 %v3014
    %v3053 = vunpack.c.l.b16 %v3015
    %v3054 = vunpack.c.h.b16 %v3015
    %v3055 = vunpack.c.l.b16 %v3016
    %v3056 = vunpack.c.h.b16 %v3016
    %v3057 = vunpack.c.l.b16 %v3017
    %v3058 = vunpack.c.h.b16 %v3017
    %v3059 = vunpack.c.l.b16 %v3018
    %v3060 = vunpack.c.h.b16 %v3018
    %v3061 = vunpack.c.l.b16 %v3019
    %v3062 = vunpack.c.h.b16 %v3019
    %v3063 = vunpack.c.l.b16 %v3020
    %v3064 = vunpack.c.h.b16 %v3020
    %v3065 = vunpack.c.l.b16 %v3021
    %v3066 = vunpack.c.h.b16 %v3021
    %v3067 = vunpack.c.l.b16 %v3022
    %v3068 = vunpack.c.h.b16 %v3022
    %v3069 = vunpack.c.l.b16 %v3023
    %v3070 = vunpack.c.h.b16 %v3023
    %v3071 = vunpack.c.l.b16 %v3024
    %v3072 = vunpack.c.h.b16 %v3024
    %v3073 = vpack.c.b16 %v3045, %v3041
    %v3074 = vpack.c.b16 %v3046, %v3042
    %v3075 = vpack.c.b16 %v3047, %v3043
    %v3076 = vpack.c.b16 %v3048, %v3044
    %v3077 = vpack.c.b16 %v3053, %v3049
    %v3078 = vpack.c.b16 %v3054, %v3050
    %v3079 = vpack.c.b16 %v3055, %v3051
    %v3080 = vpack.c.b16 %v3056, %v3052
    %v3081 = vpack.c.b16 %v3061, %v3057
    %v3082 = vpack.c.b16 %v3062, %v3058
    %v3083 = vpack.c.b16 %v3063, %v3059
    %v3084 = vpack.c.b16 %v3064, %v3060
    %v3085 = vpack.c.b16 %v3069, %v3065
    %v3086 = vpack.c.b16 %v3070, %v3066
    %v3087 = vpack.c.b16 %v3071, %v3067
    %v3088 = vpack.c.b16 %v3072, %v3068
    %v3106 = vsel %vm233, %v3008, 0
    %3108 = vmatprep.subr.bf16.mxu0 0
    %3109 = vmatpush1.bf16.msra.mxu0 0
    %3110 = vmatprep.subr.bf16.mxu0 0
    %3111 = vmatpush1.bf16.msra.mxu0 0
    %3112 = vmatprep.subr.bf16.mxu0 0
    %3113 = vmatpush1.bf16.msra.mxu0 0
    %3114 = vmatprep.subr.bf16.mxu0 0
    %3115 = vmatpush1.bf16.msra.mxu0 0
    %3116 = vmatprep.subr.bf16.mxu0 %v3086
    %3117 = vmatpush1.bf16.msra.mxu0 %v3085
    %3118 = vmatprep.subr.bf16.mxu0 %v3082
    %3119 = vmatpush1.bf16.msra.mxu0 %v3081
    %3120 = vmatprep.subr.bf16.mxu0 %v3078
    %3121 = vmatpush1.bf16.msra.mxu0 %v3077
    %3122 = vmatprep.subr.bf16.mxu0 %v3074
    %3123 = vmatpush1.bf16.msra.mxu0 %v3073
    %3124 = vmatprep.subr.bf16.mxu0 0
    %3125 = vmatpush2.bf16.msra.mxu0 0
    %3126 = vmatprep.subr.bf16.mxu0 0
    %3127 = vmatpush2.bf16.msra.mxu0 0
    %3128 = vmatprep.subr.bf16.mxu0 0
    %3129 = vmatpush2.bf16.msra.mxu0 0
    %3130 = vmatprep.subr.bf16.mxu0 0
    %3131 = vmatpush2.bf16.msra.mxu0 0
    %3132 = vmatprep.subr.bf16.mxu0 0
    %3133 = vmatpush2.bf16.msra.mxu0 0
    %3134 = vmatprep.subr.bf16.mxu0 0
    %3135 = vmatpush2.bf16.msra.mxu0 0
    %3136 = vmatprep.subr.bf16.mxu0 0
    %3137 = vmatpush2.bf16.msra.mxu0 0
    %3138 = vmatprep.subr.bf16.mxu0 0
    %3139 = vmatpush2.bf16.msra.mxu0 0
    %3140 = vmatprep.mubr.bf16.mxu0 0
    %3141 = vmatmul.mubr.bf16.gmra.mxu0 %v3106
    %v3142 = vpop.f32.mrf.mxu0
    %v3143 = vadd.f32 %v2495, %v3142
    %v3144 = vpop.f32.mrf.mxu0
    %v3145 = vadd.f32 %v2499, %v3144
    %v3146 = vpop.f32.mrf.mxu0
    %v3147 = vpop.f32.mrf.mxu0
    %3148 = vdwg.mxu0
    %3149 = vmatprep.subr.bf16.mxu0 0
    %3150 = vmatpush1.bf16.msra.mxu0 0
    %3151 = vmatprep.subr.bf16.mxu0 0
    %3152 = vmatpush1.bf16.msra.mxu0 0
    %3153 = vmatprep.subr.bf16.mxu0 0
    %3154 = vmatpush1.bf16.msra.mxu0 0
    %3155 = vmatprep.subr.bf16.mxu0 0
    %3156 = vmatpush1.bf16.msra.mxu0 0
    %3157 = vmatprep.subr.bf16.mxu0 %v3088
    %3158 = vmatpush1.bf16.msra.mxu0 %v3087
    %3159 = vmatprep.subr.bf16.mxu0 %v3084
    %3160 = vmatpush1.bf16.msra.mxu0 %v3083
    %3161 = vmatprep.subr.bf16.mxu0 %v3080
    %3162 = vmatpush1.bf16.msra.mxu0 %v3079
    %3163 = vmatprep.subr.bf16.mxu0 %v3076
    %3164 = vmatpush1.bf16.msra.mxu0 %v3075
    %3165 = vmatprep.subr.bf16.mxu0 0
    %3166 = vmatpush2.bf16.msra.mxu0 0
    %3167 = vmatprep.subr.bf16.mxu0 0
    %3168 = vmatpush2.bf16.msra.mxu0 0
    %3169 = vmatprep.subr.bf16.mxu0 0
    %3170 = vmatpush2.bf16.msra.mxu0 0
    %3171 = vmatprep.subr.bf16.mxu0 0
    %3172 = vmatpush2.bf16.msra.mxu0 0
    %3173 = vmatprep.subr.bf16.mxu0 0
    %3174 = vmatpush2.bf16.msra.mxu0 0
    %3175 = vmatprep.subr.bf16.mxu0 0
    %3176 = vmatpush2.bf16.msra.mxu0 0
    %3177 = vmatprep.subr.bf16.mxu0 0
    %3178 = vmatpush2.bf16.msra.mxu0 0
    %3179 = vmatprep.subr.bf16.mxu0 0
    %3180 = vmatpush2.bf16.msra.mxu0 0
    %3181 = vmatprep.mubr.bf16.mxu0 0
    %3182 = vmatmul.mubr.bf16.gmra.mxu0 %v3106
    %v3183 = vpop.f32.mrf.mxu0
    %v3184 = vadd.f32 %v2503, %v3183
    %v3185 = vpop.f32.mrf.mxu0
    %v3186 = vadd.f32 %v2507, %v3185
    %v3187 = vpop.f32.mrf.mxu0
    %v3188 = vpop.f32.mrf.mxu0
    %3189 = vdwg.mxu0
    %v3190 = vmax.f32 %v3143, 0.0
    %v3191 = vmax.f32 %v3145, 0.0
    %v3192 = vmax.f32 %v3184, 0.0
    %v3193 = vmax.f32 %v3186, 0.0
    %v3194 = vpack.c.bf16 %v3190, %v3190
    %v3195 = vpack.c.bf16 %v3191, %v3191
    %v3196 = vpack.c.bf16 %v3192, %v3192
    %v3197 = vpack.c.bf16 %v3193, %v3193
    %3198 = vmatprep.subr.bf16.mxu0 0
    %3199 = vmatpush1.bf16.msra.mxu0 %v2740
    %3200 = vmatprep.subr.bf16.mxu0 0
    %3201 = vmatpush1.bf16.msra.mxu0 %v2739
    %3202 = vmatprep.subr.bf16.mxu0 0
    %3203 = vmatpush1.bf16.msra.mxu0 %v2738
    %3204 = vmatprep.subr.bf16.mxu0 0
    %3205 = vmatpush1.bf16.msra.mxu0 %v2737
    %3206 = vmatprep.subr.bf16.mxu0 0
    %3207 = vmatpush1.bf16.msra.mxu0 %v2736
    %3208 = vmatprep.subr.bf16.mxu0 0
    %3209 = vmatpush1.bf16.msra.mxu0 %v2735
    %3210 = vmatprep.subr.bf16.mxu0 0
    %3211 = vmatpush1.bf16.msra.mxu0 %v2734
    %3212 = vmatprep.subr.bf16.mxu0 0
    %3213 = vmatpush1.bf16.msra.mxu0 %v2733
    %3214 = vmatprep.subr.bf16.mxu0 0
    %3215 = vmatpush2.bf16.msra.mxu0 %v2748
    %3216 = vmatprep.subr.bf16.mxu0 0
    %3217 = vmatpush2.bf16.msra.mxu0 %v2747
    %3218 = vmatprep.subr.bf16.mxu0 0
    %3219 = vmatpush2.bf16.msra.mxu0 %v2746
    %3220 = vmatprep.subr.bf16.mxu0 0
    %3221 = vmatpush2.bf16.msra.mxu0 %v2745
    %3222 = vmatprep.subr.bf16.mxu0 0
    %3223 = vmatpush2.bf16.msra.mxu0 %v2744
    %3224 = vmatprep.subr.bf16.mxu0 0
    %3225 = vmatpush2.bf16.msra.mxu0 %v2743
    %3226 = vmatprep.subr.bf16.mxu0 0
    %3227 = vmatpush2.bf16.msra.mxu0 %v2742
    %3228 = vmatprep.subr.bf16.mxu0 0
    %3229 = vmatpush2.bf16.msra.mxu0 %v2741
    %3230 = vmatprep.mubr.bf16.mxu0 %v3195
    %3231 = vmatmul.mubr.bf16.gmra.mxu0 %v3194
    %v3232 = vpop.f32.mrf.mxu0
    %v3233 = vadd.f32 %v2048, %v3232
    %v3234 = vpop.f32.mrf.mxu0
    %v3235 = vpop.f32.mrf.mxu0
    %v3236 = vpop.f32.mrf.mxu0
    %3237 = vdwg.mxu0
    %3238 = vmatprep.subr.bf16.mxu0 0
    %3239 = vmatpush1.bf16.msra.mxu0 %v2756
    %3240 = vmatprep.subr.bf16.mxu0 0
    %3241 = vmatpush1.bf16.msra.mxu0 %v2755
    %3242 = vmatprep.subr.bf16.mxu0 0
    %3243 = vmatpush1.bf16.msra.mxu0 %v2754
    %3244 = vmatprep.subr.bf16.mxu0 0
    %3245 = vmatpush1.bf16.msra.mxu0 %v2753
    %3246 = vmatprep.subr.bf16.mxu0 0
    %3247 = vmatpush1.bf16.msra.mxu0 %v2752
    %3248 = vmatprep.subr.bf16.mxu0 0
    %3249 = vmatpush1.bf16.msra.mxu0 %v2751
    %3250 = vmatprep.subr.bf16.mxu0 0
    %3251 = vmatpush1.bf16.msra.mxu0 %v2750
    %3252 = vmatprep.subr.bf16.mxu0 0
    %3253 = vmatpush1.bf16.msra.mxu0 %v2749
    %3254 = vmatprep.subr.bf16.mxu0 0
    %3255 = vmatpush2.bf16.msra.mxu0 %v2764
    %3256 = vmatprep.subr.bf16.mxu0 0
    %3257 = vmatpush2.bf16.msra.mxu0 %v2763
    %3258 = vmatprep.subr.bf16.mxu0 0
    %3259 = vmatpush2.bf16.msra.mxu0 %v2762
    %3260 = vmatprep.subr.bf16.mxu0 0
    %3261 = vmatpush2.bf16.msra.mxu0 %v2761
    %3262 = vmatprep.subr.bf16.mxu0 0
    %3263 = vmatpush2.bf16.msra.mxu0 %v2760
    %3264 = vmatprep.subr.bf16.mxu0 0
    %3265 = vmatpush2.bf16.msra.mxu0 %v2759
    %3266 = vmatprep.subr.bf16.mxu0 0
    %3267 = vmatpush2.bf16.msra.mxu0 %v2758
    %3268 = vmatprep.subr.bf16.mxu0 0
    %3269 = vmatpush2.bf16.msra.mxu0 %v2757
    %3270 = vmatprep.mubr.bf16.mxu0 %v3197
    %3271 = vmatmul.mubr.bf16.gmra.mxu0 %v3196
    %v3272 = vpop.f32.mrf.mxu0
    %v3273 = vadd.f32 %v3233, %v3272
    %v3274 = vpop.f32.mrf.mxu0
    %v3275 = vpop.f32.mrf.mxu0
    %v3276 = vpop.f32.mrf.mxu0
    %3277 = vdwg.mxu0
    %3278 = vst.msk [vmem:[#allocation4 + $0x1] sm:$0x1] %vm2877, %v3273
    // Predicated region
    $region46: #{dqn_forward.1} parent=1 // pred_check
      _
    $region47: #{dqn_forward.1} parent=1 // pred_check_branch
      %3280 = sbr.rel (0) target = $region49
    $region48: #{dqn_forward.1} parent=1 // pred_region
      %s3282 = ssub.s32 32, 32
      %3283 = vsyncadd [#allocation5], %s3282
      %s3285 = sshll.u32 [#allocation4], 4
      %s3286 = int_to_ptr.vmem [resolvable:$true] %s3285
      %3288 = dma.vmem_to_hbm [thread:$0]  %s3286, 32, %s11, [#allocation5]
    $region49: #{dqn_forward.1} parent=1 // pred_fallthru
      _
    // Predicated region
    $region50: #{dqn_forward.1} parent=1 // pred_check
      _
    $region51: #{dqn_forward.1} parent=1 // pred_check_branch
      %3290 = sbr.rel (0) target = $region53
    $region52: #{dqn_forward.1} parent=1 // pred_region
      %3291 = dma.done [#allocation5], 32
    $region53: #{dqn_forward.1} parent=1 // pred_fallthru
      _
    %3292 = vsyncpa [#allocation5], 1

</llo_original>
